<compile_context>
chip_gen: v7x
topology: tpu7x:2x2x1
jax: 0.10.0
libtpu: 0.0.40
codegen_flags: <defaults>
</compile_context>

<pallas_src>
import functools

import jax
import jax.numpy as jnp
from jax.experimental import pallas as pl
from jax.experimental.pallas import tpu as pltpu

EPS = 1e-5


def _round_up(v, m):
    return (v + m - 1) // m * m


def _sl(start, size, stride=1):
    """Slice helper: plain pl.ds when stride==1, strided pl.ds otherwise."""
    if stride == 1:
        return pl.ds(start, size)
    return pl.ds(start, size, stride=stride)


def _out_size(h, stride):
    # 3x3 pad-1 conv and 1x1 pad-0 conv (both stride s) share this output size.
    return (h - 1) // stride + 1


# ----------------------------------------------------------------------------
# Kernel helpers
# ----------------------------------------------------------------------------
def _zero_border(pad_ref, h, w):
    """Zero only the 1-px border of a (h+2, w+2, c) padded scratch buffer.

    The interior is fully overwritten right after, so re-zeroing the whole
    buffer per step would be pure wasted vst bandwidth.
    """
    c = pad_ref.shape[-1]
    dt = pad_ref.dtype
    zrow = jnp.zeros((1, w + 2, c), dt)
    pad_ref[pl.ds(0, 1), pl.ds(0, w + 2), :] = zrow
    pad_ref[pl.ds(h + 1, 1), pl.ds(0, w + 2), :] = zrow
    zcol = jnp.zeros((h + 2, 1, c), dt)
    pad_ref[pl.ds(0, h + 2), pl.ds(0, 1), :] = zcol
    pad_ref[pl.ds(0, h + 2), pl.ds(w + 1, 1), :] = zcol


def _conv3x3_taps_matmul(src_ref, w_ref, Ho, Wo, stride, cin_p):
    """3x3 conv as 9 accumulating MXU matmuls over the padded VMEM buffer.

    src_ref: (H+2, W+2, cin_p) padded activation, bf16 (or f32 on the strided
             path).  w_ref: (9*cin_p, cout_p) bf16, rows ordered (kh, kw, cin).
    Returns an f32 (Ho*Wo, cout_p) accumulator.  No im2col col buffer is ever
    materialized.
    """
    acc = None
    for kh in range(3):
        for kw in range(3):
            tap = src_ref[_sl(kh, Ho, stride), _sl(kw, Wo, stride), :]
            tap = tap.reshape(Ho * Wo, cin_p)
            if tap.dtype != jnp.bfloat16:
                tap = tap.astype(jnp.bfloat16)
            w_tap = w_ref[pl.ds((kh * 3 + kw) * cin_p, cin_p), :]
            part = jnp.dot(tap, w_tap, preferred_element_type=jnp.float32)
            acc = part if acc is None else acc + part
    return acc


# ----------------------------------------------------------------------------
# Fused BasicBlock kernel (one batch element per grid step)
# ----------------------------------------------------------------------------
def _basic_block_kernel(*refs, H, W, stride, has_downsample):
    if has_downsample:
        (x_ref, w1_ref, b1_ref, w2_ref, b2_ref, wd_ref, bd_ref,
         o_ref, xpad_ref, ypad_ref) = refs
    else:
        (x_ref, w1_ref, b1_ref, w2_ref, b2_ref,
         o_ref, xpad_ref, ypad_ref) = refs

    Ho, Wo = _out_size(H, stride), _out_size(W, stride)
    Cip = x_ref.shape[-1]
    C1p = b1_ref.shape[-1]
    C2p = o_ref.shape[-1]

    # Border-only zeroing, every step (megacore-safe; interior written below).
    _zero_border(xpad_ref, H, W)
    _zero_border(ypad_ref, Ho, Wo)

    # Stage the input in the padded VMEM scratch (no XLA pad / HBM roundtrip).
    xpad_ref[_sl(1, H), _sl(1, W), :] = x_ref[0].astype(xpad_ref.dtype)

    # ---- conv1 (3x3, stride s) + bn1 + relu: 9 accumulating matmuls.
    h1 = _conv3x3_taps_matmul(xpad_ref, w1_ref, Ho, Wo, stride, Cip)
    h1 = jnp.maximum(h1 + b1_ref[...], 0.0)               # f32 (Ho*Wo, C1p)
    # Cast to bf16 *before* the unflatten so any relayout copy moves half the
    # bytes; the intermediate stays resident in VMEM with a zero border.
    ypad_ref[_sl(1, Ho), _sl(1, Wo), :] = (
        h1.astype(ypad_ref.dtype).reshape(Ho, Wo, C1p))

    # ---- conv2 (3x3, stride 1) + bn2: 9 accumulating matmuls.
    h2 = _conv3x3_taps_matmul(ypad_ref, w2_ref, Ho, Wo, 1, C1p)
    h2 = h2 + b2_ref[...]

    # ---- residual path (reuses the VMEM-resident input; no extra HBM read).
    if has_downsample:
        xs = xpad_ref[_sl(1, Ho, stride), _sl(1, Wo, stride), :]
        xs = xs.reshape(Ho * Wo, Cip)
        if xs.dtype != jnp.bfloat16:
            xs = xs.astype(jnp.bfloat16)
        res = jnp.dot(xs, wd_ref[...], preferred_element_type=jnp.float32)
        res = res + bd_ref[...]
    else:
        res = x_ref[0].reshape(Ho * Wo, C2p).astype(jnp.float32)

    out = jnp.maximum(h2 + res, 0.0)
    o_ref[0] = out.astype(o_ref.dtype).reshape(Ho, Wo, C2p)


# ----------------------------------------------------------------------------
# VMEM budgeting
# ----------------------------------------------------------------------------
def _nbytes(shape, itemsize):
    n = 1
    for s in shape:
        n *= s
    return n * itemsize


def _dt_bytes(dt):
    return 2 if dt == jnp.bfloat16 else 4


def _estimate_vmem_bytes(H, W, Ho, Wo, Cip, C1p, C2p, has_ds, xpad_dt, ypad_dt):
    scratch = (_nbytes((H + 2, W + 2, Cip), _dt_bytes(xpad_dt))
               + _nbytes((Ho + 2, Wo + 2, C1p), _dt_bytes(ypad_dt)))
    # Pallas double-buffers pipelined blocks by default.
    io = 2 * (_nbytes((1, H, W, Cip), 2) + _nbytes((1, Ho, Wo, C2p), 2))
    weights = (_nbytes((9 * Cip, C1p), 2) + _nbytes((9 * C1p, C2p), 2)
               + _nbytes((1, C1p), 4) + _nbytes((1, C2p), 4))
    if has_ds:
        weights += _nbytes((Cip, C2p), 2) + _nbytes((1, C2p), 4)
    weights *= 2  # TODO(synk): drop to 1x with pl.Buffered(1) on weight specs.
    temps = 3 * Ho * Wo * max(C1p, C2p) * 4   # f32 matmul accumulators / temps
    return scratch + io + weights + temps


def _pick_vmem_limit(needed_bytes):
    try:
        phys = pltpu.get_tpu_info().vmem_capacity_bytes
    except Exception:  # conservative fallback (v7x per-core VMEM)
        phys = 64 * 1024 * 1024
    cap = (phys * 3) // 4
    # 1.5x margin + 4 MiB for compiler-internal scratch / spills.
    want = int(needed_bytes * 1.5) + (4 << 20)
    return int(max(min(_round_up(want, 1 << 20), cap), 16 << 20))


# ----------------------------------------------------------------------------
# Wrapper: NCHW in / NCHW out, BN folding, channel padding, bf16 cast
# ----------------------------------------------------------------------------
def fold_bn(gamma, beta, mean, var):
    scale = gamma / jnp.sqrt(var + EPS)
    bias = beta - mean * scale
    return scale, bias


def basic_block_forward(x_nchw, params, stride):
    N, Cin, H, W = x_nchw.shape
    w1, w2 = params["w1"], params["w2"]
    wd = params.get("wd")
    C1, C2 = w1.shape[-1], w2.shape[-1]
    has_ds = wd is not None
    if not has_ds:
        assert stride == 1 and Cin == C2, (
            "BasicBlock without a downsample requires stride == 1 and "
            "matching in/out channels (PyTorch module guarantees this).")

    Ho, Wo = _out_size(H, stride), _out_size(W, stride)
    Cip = _round_up(Cin, 128)
    C1p = _round_up(C1, 128)
    C2p = _round_up(C2, 128)

    s1, b1 = fold_bn(*params["bn1"])
    s2, b2 = fold_bn(*params["bn2"])

    # NCHW -> NHWC, bf16, lane-pad channels (single fused XLA rearrangement).
    x = jnp.transpose(x_nchw, (0, 2, 3, 1)).astype(jnp.bfloat16)
    x = jnp.pad(x, ((0, 0), (0, 0), (0, 0), (0, Cip - Cin)))

    def fold_weight_3x3(w_hwio, scale, cin, cinp, cout, coutp):
        wf = (w_hwio * scale[None, None, None, :]).astype(jnp.bfloat16)
        wf = jnp.pad(wf, ((0, 0), (0, 0), (0, cinp - cin), (0, coutp - cout)))
        return wf.reshape(9 * cinp, coutp)       # rows ordered (kh, kw, cin)

    w1f = fold_weight_3x3(w1, s1, Cin, Cip, C1, C1p)
    w2f = fold_weight_3x3(w2, s2, C1, C1p, C2, C2p)
    b1p = jnp.pad(b1, (0, C1p - C1)).astype(jnp.float32).reshape(1, C1p)
    b2p = jnp.pad(b2, (0, C2p - C2)).astype(jnp.float32).reshape(1, C2p)

    inputs = [x, w1f, b1p, w2f, b2p]
    # TODO(synk): add pipeline_mode=pl.Buffered(1) to the constant-index
    # weight/bias specs below to avoid double-buffering them on v7x.
    in_specs = [
        pl.BlockSpec((1, H, W, Cip), lambda n: (n, 0, 0, 0)),
        pl.BlockSpec((9 * Cip, C1p), lambda n: (0, 0)),
        pl.BlockSpec((1, C1p), lambda n: (0, 0)),
        pl.BlockSpec((9 * C1p, C2p), lambda n: (0, 0)),
        pl.BlockSpec((1, C2p), lambda n: (0, 0)),
    ]
    if has_ds:
        sd, bd = fold_bn(*params["bnd"])
        wdf = (wd * sd[None, :]).astype(jnp.bfloat16)
        wdf = jnp.pad(wdf, ((0, Cip - Cin), (0, C2p - C2)))
        bdp = jnp.pad(bd, (0, C2p - C2)).astype(jnp.float32).reshape(1, C2p)
        inputs += [wdf, bdp]
        in_specs += [pl.BlockSpec((Cip, C2p), lambda n: (0, 0)),
                     pl.BlockSpec((1, C2p), lambda n: (0, 0))]

    # bf16 scratch halves footprint + VMEM traffic.  The stride>1 input
    # scratch stays f32 so the strided sublane tap reads stay on 32-bit
    # elements (see header TODO).
    xpad_dt = jnp.bfloat16 if stride == 1 else jnp.float32
    ypad_dt = jnp.bfloat16

    vmem_limit = _pick_vmem_limit(
        _estimate_vmem_bytes(H, W, Ho, Wo, Cip, C1p, C2p, has_ds,
                             xpad_dt, ypad_dt))

    kernel = functools.partial(_basic_block_kernel, H=H, W=W, stride=stride,
                               has_downsample=has_ds)

    out = pl.pallas_call(
        kernel,
        out_shape=jax.ShapeDtypeStruct((N, Ho, Wo, C2p), jnp.bfloat16),
        grid_spec=pltpu.PrefetchScalarGridSpec(
            num_scalar_prefetch=0,
            grid=(N,),
            in_specs=in_specs,
            out_specs=pl.BlockSpec((1, Ho, Wo, C2p), lambda n: (n, 0, 0, 0)),
            scratch_shapes=[
                pltpu.VMEM((H + 2, W + 2, Cip), xpad_dt),     # padded input
                pltpu.VMEM((Ho + 2, Wo + 2, C1p), ypad_dt),   # padded conv1 out
            ]),
        compiler_params=pltpu.CompilerParams(
            dimension_semantics=("parallel",),
            vmem_limit_bytes=vmem_limit),
    )(*inputs)

    # Strip channel padding, back to NCHW / input dtype (boundary glue only).
    out = out[..., :C2].astype(x_nchw.dtype)
    return jnp.transpose(out, (0, 3, 1, 2))


# ----------------------------------------------------------------------------
# Pure-JAX reference (lax conv, NCHW, f32) for correctness check
# ----------------------------------------------------------------------------
def reference_forward(x, params, stride):
    def conv(x, w_oihw, s, pad):
        return jax.lax.conv_general_dilated(
            x, w_oihw, (s, s), ((pad, pad), (pad, pad)),
            dimension_numbers=("NCHW", "OIHW", "NCHW"))

    def bn(x, g, b, m, v):
        return (g[None, :, None, None] * (x - m[None, :, None, None])
                / jnp.sqrt(v[None, :, None, None] + EPS)
                + b[None, :, None, None])

    w1_oihw = jnp.transpose(params["w1"], (3, 2, 0, 1))
    w2_oihw = jnp.transpose(params["w2"], (3, 2, 0, 1))
    out = jax.nn.relu(bn(conv(x, w1_oihw, stride, 1), *params["bn1"]))
    out = bn(conv(out, w2_oihw, 1, 1), *params["bn2"])
    if params.get("wd") is not None:
        wd_oihw = jnp.transpose(params["wd"], (1, 0))[:, :, None, None]
        residual = bn(conv(x, wd_oihw, stride, 0), *params["bnd"])
    else:
        residual = x
    return jax.nn.relu(out + residual)


# ----------------------------------------------------------------------------
if __name__ == "__main__":
    key = jax.random.PRNGKey(0)

    def bn_params(k, c):
        kg, kb, km, kv = jax.random.split(k, 4)
        gamma = jax.random.uniform(kg, (c,), jnp.float32, 0.5, 1.5)
        beta = 0.1 * jax.random.normal(kb, (c,), jnp.float32)
        mean = 0.1 * jax.random.normal(km, (c,), jnp.float32)
        var = jax.random.uniform(kv, (c,), jnp.float32, 0.5, 1.5)
        return (gamma, beta, mean, var)

    def run_case(k, N, Cin, H, W, C1, C2, stride, with_downsample):
        ks = jax.random.split(k, 7)
        params = {
            "w1": 0.1 * jax.random.normal(ks[0], (3, 3, Cin, C1), jnp.float32),
            "w2": 0.1 * jax.random.normal(ks[1], (3, 3, C1, C2), jnp.float32),
            "bn1": bn_params(ks[2], C1),
            "bn2": bn_params(ks[3], C2),
        }
        if with_downsample:
            params["wd"] = 0.1 * jax.random.normal(ks[4], (Cin, C2),
                                                   jnp.float32)
            params["bnd"] = bn_params(ks[5], C2)
        x = jax.random.normal(ks[6], (N, Cin, H, W), jnp.float32)

        out = jax.block_until_ready(basic_block_forward(x, params, stride))
        ref = reference_forward(x, params, stride)
        Ho, Wo = _out_size(H, stride), _out_size(W, stride)
        assert out.shape == ref.shape == (N, C2, Ho, Wo)
        # bf16 MXU inputs / bf16 output -> compare against the f32 reference
        # with a bf16-appropriate tolerance (documented precision downgrade
        # vs an f32 PyTorch run).
        assert jnp.allclose(out, ref, atol=3e-2, rtol=3e-2), (
            "Pallas BasicBlock mismatch vs reference: max abs err = "
            f"{jnp.max(jnp.abs(out - ref))}")

    k1, k2 = jax.random.split(key)

    # bottleneck_settings = {'conv1': (4, 8), 'conv2': (8, 8)}, stride = 2
    # -> downsample (1x1 conv stride 2 + BN) is present.
    run_case(k1, N=2, Cin=4, H=16, W=16, C1=8, C2=8, stride=2,
             with_downsample=True)

    # bottleneck_settings = {'conv1': (8, 8), 'conv2': (8, 8)}, stride = 1
    # -> identity residual path (no downsample), exercises bf16 input scratch.
    run_case(k2, N=2, Cin=8, H=16, W=16, C1=8, C2=8, stride=1,
             with_downsample=False)

    print("KERNEL_OK")
</pallas_src>

<mosaic_0001>
module attributes {stable_mosaic.version = 11 : i64} {
  func.func @_basic_block_kernel(%arg0: i32, %arg1: memref<1x16x16x128xbf16, #tpu.memory_space<vmem>>, %arg2: memref<1152x128xbf16, #tpu.memory_space<vmem>>, %arg3: memref<1x128xf32, #tpu.memory_space<vmem>>, %arg4: memref<1152x128xbf16, #tpu.memory_space<vmem>>, %arg5: memref<1x128xf32, #tpu.memory_space<vmem>>, %arg6: memref<128x128xbf16, #tpu.memory_space<vmem>>, %arg7: memref<1x128xf32, #tpu.memory_space<vmem>>, %arg8: memref<1x8x8x128xbf16, #tpu.memory_space<vmem>>, %arg9: memref<18x18x128xf32, #tpu.memory_space<vmem>>, %arg10: memref<10x10x128xbf16, #tpu.memory_space<vmem>>) attributes {dimension_semantics = [#tpu.dimension_semantics<parallel>], iteration_bounds = array<i64: 2>, scalar_prefetch = 0 : i64, scratch_operands = 2 : i64, tpu.core_type = #tpu.core_type<tc>, window_params = [{transform_indices = @transform_0, window_bounds = array<i64: 1, 16, 16, 128>}, {pipeline_mode = #tpu.pipeline_mode<synchronous>, transform_indices = @transform_1, window_bounds = array<i64: 1152, 128>}, {pipeline_mode = #tpu.pipeline_mode<synchronous>, transform_indices = @transform_2, window_bounds = array<i64: 1, 128>}, {pipeline_mode = #tpu.pipeline_mode<synchronous>, transform_indices = @transform_3, window_bounds = array<i64: 1152, 128>}, {pipeline_mode = #tpu.pipeline_mode<synchronous>, transform_indices = @transform_4, window_bounds = array<i64: 1, 128>}, {pipeline_mode = #tpu.pipeline_mode<synchronous>, transform_indices = @transform_5, window_bounds = array<i64: 128, 128>}, {pipeline_mode = #tpu.pipeline_mode<synchronous>, transform_indices = @transform_6, window_bounds = array<i64: 1, 128>}, {transform_indices = @transform_7, window_bounds = array<i64: 1, 8, 8, 128>}]} {
    %cst = arith.constant 0.000000e+00 : f32
    %0 = vector.broadcast %cst : f32 to vector<1x18x128xf32>
    %c0 = arith.constant 0 : index
    %c0_0 = arith.constant 0 : index
    %c0_1 = arith.constant 0 : index
    %1 = vector.load %arg9[%c0, %c0_0, %c0_1] : memref<18x18x128xf32, #tpu.memory_space<vmem>>, vector<1x18x128xf32>
    tpu.vector_store %arg9[%c0, %c0_0, %c0_1], %0 {strides = array<i32>} : memref<18x18x128xf32, #tpu.memory_space<vmem>>, vector<1x18x128xf32>,
    %c17 = arith.constant 17 : index
    %c0_2 = arith.constant 0 : index
    %c0_3 = arith.constant 0 : index
    %2 = vector.load %arg9[%c17, %c0_2, %c0_3] : memref<18x18x128xf32, #tpu.memory_space<vmem>>, vector<1x18x128xf32>
    tpu.vector_store %arg9[%c17, %c0_2, %c0_3], %0 {strides = array<i32>} : memref<18x18x128xf32, #tpu.memory_space<vmem>>, vector<1x18x128xf32>,
    %cst_4 = arith.constant 0.000000e+00 : f32
    %3 = vector.broadcast %cst_4 : f32 to vector<18x1x128xf32>
    %c0_5 = arith.constant 0 : index
    %c0_6 = arith.constant 0 : index
    %c0_7 = arith.constant 0 : index
    %4 = vector.load %arg9[%c0_5, %c0_6, %c0_7] : memref<18x18x128xf32, #tpu.memory_space<vmem>>, vector<18x1x128xf32>
    tpu.vector_store %arg9[%c0_5, %c0_6, %c0_7], %3 {strides = array<i32>} : memref<18x18x128xf32, #tpu.memory_space<vmem>>, vector<18x1x128xf32>,
    %c0_8 = arith.constant 0 : index
    %c17_9 = arith.constant 17 : index
    %c0_10 = arith.constant 0 : index
    %5 = vector.load %arg9[%c0_8, %c17_9, %c0_10] : memref<18x18x128xf32, #tpu.memory_space<vmem>>, vector<18x1x128xf32>
    tpu.vector_store %arg9[%c0_8, %c17_9, %c0_10], %3 {strides = array<i32>} : memref<18x18x128xf32, #tpu.memory_space<vmem>>, vector<18x1x128xf32>,
    %cst_11 = arith.constant 0.000000e+00 : bf16
    %6 = vector.broadcast %cst_11 : bf16 to vector<1x10x128xbf16>
    %c0_12 = arith.constant 0 : index
    %c0_13 = arith.constant 0 : index
    %c0_14 = arith.constant 0 : index
    %7 = vector.load %arg10[%c0_12, %c0_13, %c0_14] : memref<10x10x128xbf16, #tpu.memory_space<vmem>>, vector<1x10x128xbf16>
    tpu.vector_store %arg10[%c0_12, %c0_13, %c0_14], %6 {strides = array<i32>} : memref<10x10x128xbf16, #tpu.memory_space<vmem>>, vector<1x10x128xbf16>,
    %c9 = arith.constant 9 : index
    %c0_15 = arith.constant 0 : index
    %c0_16 = arith.constant 0 : index
    %8 = vector.load %arg10[%c9, %c0_15, %c0_16] : memref<10x10x128xbf16, #tpu.memory_space<vmem>>, vector<1x10x128xbf16>
    tpu.vector_store %arg10[%c9, %c0_15, %c0_16], %6 {strides = array<i32>} : memref<10x10x128xbf16, #tpu.memory_space<vmem>>, vector<1x10x128xbf16>,
    %cst_17 = arith.constant 0.000000e+00 : bf16
    %9 = vector.broadcast %cst_17 : bf16 to vector<10x1x128xbf16>
    %c0_18 = arith.constant 0 : index
    %c0_19 = arith.constant 0 : index
    %c0_20 = arith.constant 0 : index
    %10 = vector.load %arg10[%c0_18, %c0_19, %c0_20] : memref<10x10x128xbf16, #tpu.memory_space<vmem>>, vector<10x1x128xbf16>
    tpu.vector_store %arg10[%c0_18, %c0_19, %c0_20], %9 {strides = array<i32>} : memref<10x10x128xbf16, #tpu.memory_space<vmem>>, vector<10x1x128xbf16>,
    %c0_21 = arith.constant 0 : index
    %c9_22 = arith.constant 9 : index
    %c0_23 = arith.constant 0 : index
    %11 = vector.load %arg10[%c0_21, %c9_22, %c0_23] : memref<10x10x128xbf16, #tpu.memory_space<vmem>>, vector<10x1x128xbf16>
    tpu.vector_store %arg10[%c0_21, %c9_22, %c0_23], %9 {strides = array<i32>} : memref<10x10x128xbf16, #tpu.memory_space<vmem>>, vector<10x1x128xbf16>,
    %c0_24 = arith.constant 0 : index
    %c0_25 = arith.constant 0 : index
    %c0_26 = arith.constant 0 : index
    %c0_27 = arith.constant 0 : index
    %12 = vector.load %arg1[%c0_24, %c0_25, %c0_26, %c0_27] : memref<1x16x16x128xbf16, #tpu.memory_space<vmem>>, vector<1x16x16x128xbf16>
    %13 = vector.shape_cast %12 : vector<1x16x16x128xbf16> to vector<16x16x128xbf16>
    %14 = arith.extf %13 : vector<16x16x128xbf16> to vector<16x16x128xf32>
    %c1 = arith.constant 1 : index
    %c1_28 = arith.constant 1 : index
    %c0_29 = arith.constant 0 : index
    %15 = vector.load %arg9[%c1, %c1_28, %c0_29] : memref<18x18x128xf32, #tpu.memory_space<vmem>>, vector<16x16x128xf32>
    tpu.vector_store %arg9[%c1, %c1_28, %c0_29], %14 {strides = array<i32>} : memref<18x18x128xf32, #tpu.memory_space<vmem>>, vector<16x16x128xf32>,
    %c0_30 = arith.constant 0 : index
    %c0_31 = arith.constant 0 : index
    %c0_32 = arith.constant 0 : index
    %16 = tpu.strided_load %arg9[%c0_30, %c0_31, %c0_32] {strides = array<i32: 2, 2, 1>} : memref<18x18x128xf32, #tpu.memory_space<vmem>>, vector<8x8x128xf32>
    %17 = vector.shape_cast %16 : vector<8x8x128xf32> to vector<64x128xf32>
    %18 = arith.truncf %17 : vector<64x128xf32> to vector<64x128xbf16>
    %c0_33 = arith.constant 0 : index
    %c0_34 = arith.constant 0 : index
    %19 = vector.load %arg2[%c0_33, %c0_34] : memref<1152x128xbf16, #tpu.memory_space<vmem>>, vector<128x128xbf16>
    %cst_35 = arith.constant dense<0.000000e+00> : vector<64x128xf32>
    %20 = tpu.matmul %18, %19, %cst_35 {dimension_numbers = #tpu.dot_dimension_numbers<[1], [0], [0], [1], [0, 0, 1, 1], [], []>} : vector<64x128xbf16>, vector<128x128xbf16>, vector<64x128xf32> -> vector<64x128xf32>
    %c0_36 = arith.constant 0 : index
    %c1_37 = arith.constant 1 : index
    %c0_38 = arith.constant 0 : index
    %21 = tpu.strided_load %arg9[%c0_36, %c1_37, %c0_38] {strides = array<i32: 2, 2, 1>} : memref<18x18x128xf32, #tpu.memory_space<vmem>>, vector<8x8x128xf32>
    %22 = vector.shape_cast %21 : vector<8x8x128xf32> to vector<64x128xf32>
    %23 = arith.truncf %22 : vector<64x128xf32> to vector<64x128xbf16>
    %c128 = arith.constant 128 : index
    %c0_39 = arith.constant 0 : index
    %24 = vector.load %arg2[%c128, %c0_39] : memref<1152x128xbf16, #tpu.memory_space<vmem>>, vector<128x128xbf16>
    %cst_40 = arith.constant dense<0.000000e+00> : vector<64x128xf32>
    %25 = tpu.matmul %23, %24, %cst_40 {dimension_numbers = #tpu.dot_dimension_numbers<[1], [0], [0], [1], [0, 0, 1, 1], [], []>} : vector<64x128xbf16>, vector<128x128xbf16>, vector<64x128xf32> -> vector<64x128xf32>
    %26 = arith.addf %20, %25 : vector<64x128xf32>
    %c0_41 = arith.constant 0 : index
    %c2 = arith.constant 2 : index
    %c0_42 = arith.constant 0 : index
    %27 = tpu.strided_load %arg9[%c0_41, %c2, %c0_42] {strides = array<i32: 2, 2, 1>} : memref<18x18x128xf32, #tpu.memory_space<vmem>>, vector<8x8x128xf32>
    %28 = vector.shape_cast %27 : vector<8x8x128xf32> to vector<64x128xf32>
    %29 = arith.truncf %28 : vector<64x128xf32> to vector<64x128xbf16>
    %c256 = arith.constant 256 : index
    %c0_43 = arith.constant 0 : index
    %30 = vector.load %arg2[%c256, %c0_43] : memref<1152x128xbf16, #tpu.memory_space<vmem>>, vector<128x128xbf16>
    %cst_44 = arith.constant dense<0.000000e+00> : vector<64x128xf32>
    %31 = tpu.matmul %29, %30, %cst_44 {dimension_numbers = #tpu.dot_dimension_numbers<[1], [0], [0], [1], [0, 0, 1, 1], [], []>} : vector<64x128xbf16>, vector<128x128xbf16>, vector<64x128xf32> -> vector<64x128xf32>
    %32 = arith.addf %26, %31 : vector<64x128xf32>
    %c1_45 = arith.constant 1 : index
    %c0_46 = arith.constant 0 : index
    %c0_47 = arith.constant 0 : index
    %33 = tpu.strided_load %arg9[%c1_45, %c0_46, %c0_47] {strides = array<i32: 2, 2, 1>} : memref<18x18x128xf32, #tpu.memory_space<vmem>>, vector<8x8x128xf32>
    %34 = vector.shape_cast %33 : vector<8x8x128xf32> to vector<64x128xf32>
    %35 = arith.truncf %34 : vector<64x128xf32> to vector<64x128xbf16>
    %c384 = arith.constant 384 : index
    %c0_48 = arith.constant 0 : index
    %36 = vector.load %arg2[%c384, %c0_48] : memref<1152x128xbf16, #tpu.memory_space<vmem>>, vector<128x128xbf16>
    %cst_49 = arith.constant dense<0.000000e+00> : vector<64x128xf32>
    %37 = tpu.matmul %35, %36, %cst_49 {dimension_numbers = #tpu.dot_dimension_numbers<[1], [0], [0], [1], [0, 0, 1, 1], [], []>} : vector<64x128xbf16>, vector<128x128xbf16>, vector<64x128xf32> -> vector<64x128xf32>
    %38 = arith.addf %32, %37 : vector<64x128xf32>
    %c1_50 = arith.constant 1 : index
    %c1_51 = arith.constant 1 : index
    %c0_52 = arith.constant 0 : index
    %39 = tpu.strided_load %arg9[%c1_50, %c1_51, %c0_52] {strides = array<i32: 2, 2, 1>} : memref<18x18x128xf32, #tpu.memory_space<vmem>>, vector<8x8x128xf32>
    %40 = vector.shape_cast %39 : vector<8x8x128xf32> to vector<64x128xf32>
    %41 = arith.truncf %40 : vector<64x128xf32> to vector<64x128xbf16>
    %c512 = arith.constant 512 : index
    %c0_53 = arith.constant 0 : index
    %42 = vector.load %arg2[%c512, %c0_53] : memref<1152x128xbf16, #tpu.memory_space<vmem>>, vector<128x128xbf16>
    %cst_54 = arith.constant dense<0.000000e+00> : vector<64x128xf32>
    %43 = tpu.matmul %41, %42, %cst_54 {dimension_numbers = #tpu.dot_dimension_numbers<[1], [0], [0], [1], [0, 0, 1, 1], [], []>} : vector<64x128xbf16>, vector<128x128xbf16>, vector<64x128xf32> -> vector<64x128xf32>
    %44 = arith.addf %38, %43 : vector<64x128xf32>
    %c1_55 = arith.constant 1 : index
    %c2_56 = arith.constant 2 : index
    %c0_57 = arith.constant 0 : index
    %45 = tpu.strided_load %arg9[%c1_55, %c2_56, %c0_57] {strides = array<i32: 2, 2, 1>} : memref<18x18x128xf32, #tpu.memory_space<vmem>>, vector<8x8x128xf32>
    %46 = vector.shape_cast %45 : vector<8x8x128xf32> to vector<64x128xf32>
    %47 = arith.truncf %46 : vector<64x128xf32> to vector<64x128xbf16>
    %c640 = arith.constant 640 : index
    %c0_58 = arith.constant 0 : index
    %48 = vector.load %arg2[%c640, %c0_58] : memref<1152x128xbf16, #tpu.memory_space<vmem>>, vector<128x128xbf16>
    %cst_59 = arith.constant dense<0.000000e+00> : vector<64x128xf32>
    %49 = tpu.matmul %47, %48, %cst_59 {dimension_numbers = #tpu.dot_dimension_numbers<[1], [0], [0], [1], [0, 0, 1, 1], [], []>} : vector<64x128xbf16>, vector<128x128xbf16>, vector<64x128xf32> -> vector<64x128xf32>
    %50 = arith.addf %44, %49 : vector<64x128xf32>
    %c2_60 = arith.constant 2 : index
    %c0_61 = arith.constant 0 : index
    %c0_62 = arith.constant 0 : index
    %51 = tpu.strided_load %arg9[%c2_60, %c0_61, %c0_62] {strides = array<i32: 2, 2, 1>} : memref<18x18x128xf32, #tpu.memory_space<vmem>>, vector<8x8x128xf32>
    %52 = vector.shape_cast %51 : vector<8x8x128xf32> to vector<64x128xf32>
    %53 = arith.truncf %52 : vector<64x128xf32> to vector<64x128xbf16>
    %c768 = arith.constant 768 : index
    %c0_63 = arith.constant 0 : index
    %54 = vector.load %arg2[%c768, %c0_63] : memref<1152x128xbf16, #tpu.memory_space<vmem>>, vector<128x128xbf16>
    %cst_64 = arith.constant dense<0.000000e+00> : vector<64x128xf32>
    %55 = tpu.matmul %53, %54, %cst_64 {dimension_numbers = #tpu.dot_dimension_numbers<[1], [0], [0], [1], [0, 0, 1, 1], [], []>} : vector<64x128xbf16>, vector<128x128xbf16>, vector<64x128xf32> -> vector<64x128xf32>
    %56 = arith.addf %50, %55 : vector<64x128xf32>
    %c2_65 = arith.constant 2 : index
    %c1_66 = arith.constant 1 : index
    %c0_67 = arith.constant 0 : index
    %57 = tpu.strided_load %arg9[%c2_65, %c1_66, %c0_67] {strides = array<i32: 2, 2, 1>} : memref<18x18x128xf32, #tpu.memory_space<vmem>>, vector<8x8x128xf32>
    %58 = vector.shape_cast %57 : vector<8x8x128xf32> to vector<64x128xf32>
    %59 = arith.truncf %58 : vector<64x128xf32> to vector<64x128xbf16>
    %c896 = arith.constant 896 : index
    %c0_68 = arith.constant 0 : index
    %60 = vector.load %arg2[%c896, %c0_68] : memref<1152x128xbf16, #tpu.memory_space<vmem>>, vector<128x128xbf16>
    %cst_69 = arith.constant dense<0.000000e+00> : vector<64x128xf32>
    %61 = tpu.matmul %59, %60, %cst_69 {dimension_numbers = #tpu.dot_dimension_numbers<[1], [0], [0], [1], [0, 0, 1, 1], [], []>} : vector<64x128xbf16>, vector<128x128xbf16>, vector<64x128xf32> -> vector<64x128xf32>
    %62 = arith.addf %56, %61 : vector<64x128xf32>
    %c2_70 = arith.constant 2 : index
    %c2_71 = arith.constant 2 : index
    %c0_72 = arith.constant 0 : index
    %63 = tpu.strided_load %arg9[%c2_70, %c2_71, %c0_72] {strides = array<i32: 2, 2, 1>} : memref<18x18x128xf32, #tpu.memory_space<vmem>>, vector<8x8x128xf32>
    %64 = vector.shape_cast %63 : vector<8x8x128xf32> to vector<64x128xf32>
    %65 = arith.truncf %64 : vector<64x128xf32> to vector<64x128xbf16>
    %c1024 = arith.constant 1024 : index
    %c0_73 = arith.constant 0 : index
    %66 = vector.load %arg2[%c1024, %c0_73] : memref<1152x128xbf16, #tpu.memory_space<vmem>>, vector<128x128xbf16>
    %cst_74 = arith.constant dense<0.000000e+00> : vector<64x128xf32>
    %67 = tpu.matmul %65, %66, %cst_74 {dimension_numbers = #tpu.dot_dimension_numbers<[1], [0], [0], [1], [0, 0, 1, 1], [], []>} : vector<64x128xbf16>, vector<128x128xbf16>, vector<64x128xf32> -> vector<64x128xf32>
    %68 = arith.addf %62, %67 : vector<64x128xf32>
    %c0_75 = arith.constant 0 : index
    %c0_76 = arith.constant 0 : index
    %69 = vector.load %arg3[%c0_75, %c0_76] : memref<1x128xf32, #tpu.memory_space<vmem>>, vector<1x128xf32>
    %70 = vector.broadcast %69 : vector<1x128xf32> to vector<64x128xf32>
    %71 = arith.addf %68, %70 : vector<64x128xf32>
    %cst_77 = arith.constant 0.000000e+00 : f32
    %72 = vector.broadcast %cst_77 : f32 to vector<64x128xf32>
    %73 = arith.maximumf %71, %72 : vector<64x128xf32>
    %74 = arith.truncf %73 : vector<64x128xf32> to vector<64x128xbf16>
    %75 = vector.shape_cast %74 : vector<64x128xbf16> to vector<8x8x128xbf16>
    %c1_78 = arith.constant 1 : index
    %c1_79 = arith.constant 1 : index
    %c0_80 = arith.constant 0 : index
    %76 = vector.load %arg10[%c1_78, %c1_79, %c0_80] : memref<10x10x128xbf16, #tpu.memory_space<vmem>>, vector<8x8x128xbf16>
    tpu.vector_store %arg10[%c1_78, %c1_79, %c0_80], %75 {strides = array<i32>} : memref<10x10x128xbf16, #tpu.memory_space<vmem>>, vector<8x8x128xbf16>,
    %c0_81 = arith.constant 0 : index
    %c0_82 = arith.constant 0 : index
    %c0_83 = arith.constant 0 : index
    %77 = vector.load %arg10[%c0_81, %c0_82, %c0_83] : memref<10x10x128xbf16, #tpu.memory_space<vmem>>, vector<8x8x128xbf16>
    %78 = vector.shape_cast %77 : vector<8x8x128xbf16> to vector<64x128xbf16>
    %c0_84 = arith.constant 0 : index
    %c0_85 = arith.constant 0 : index
    %79 = vector.load %arg4[%c0_84, %c0_85] : memref<1152x128xbf16, #tpu.memory_space<vmem>>, vector<128x128xbf16>
    %cst_86 = arith.constant dense<0.000000e+00> : vector<64x128xf32>
    %80 = tpu.matmul %78, %79, %cst_86 {dimension_numbers = #tpu.dot_dimension_numbers<[1], [0], [0], [1], [0, 0, 1, 1], [], []>} : vector<64x128xbf16>, vector<128x128xbf16>, vector<64x128xf32> -> vector<64x128xf32>
    %c0_87 = arith.constant 0 : index
    %c1_88 = arith.constant 1 : index
    %c0_89 = arith.constant 0 : index
    %81 = vector.load %arg10[%c0_87, %c1_88, %c0_89] : memref<10x10x128xbf16, #tpu.memory_space<vmem>>, vector<8x8x128xbf16>
    %82 = vector.shape_cast %81 : vector<8x8x128xbf16> to vector<64x128xbf16>
    %c128_90 = arith.constant 128 : index
    %c0_91 = arith.constant 0 : index
    %83 = vector.load %arg4[%c128_90, %c0_91] : memref<1152x128xbf16, #tpu.memory_space<vmem>>, vector<128x128xbf16>
    %cst_92 = arith.constant dense<0.000000e+00> : vector<64x128xf32>
    %84 = tpu.matmul %82, %83, %cst_92 {dimension_numbers = #tpu.dot_dimension_numbers<[1], [0], [0], [1], [0, 0, 1, 1], [], []>} : vector<64x128xbf16>, vector<128x128xbf16>, vector<64x128xf32> -> vector<64x128xf32>
    %85 = arith.addf %80, %84 : vector<64x128xf32>
    %c0_93 = arith.constant 0 : index
    %c2_94 = arith.constant 2 : index
    %c0_95 = arith.constant 0 : index
    %86 = vector.load %arg10[%c0_93, %c2_94, %c0_95] : memref<10x10x128xbf16, #tpu.memory_space<vmem>>, vector<8x8x128xbf16>
    %87 = vector.shape_cast %86 : vector<8x8x128xbf16> to vector<64x128xbf16>
    %c256_96 = arith.constant 256 : index
    %c0_97 = arith.constant 0 : index
    %88 = vector.load %arg4[%c256_96, %c0_97] : memref<1152x128xbf16, #tpu.memory_space<vmem>>, vector<128x128xbf16>
    %cst_98 = arith.constant dense<0.000000e+00> : vector<64x128xf32>
    %89 = tpu.matmul %87, %88, %cst_98 {dimension_numbers = #tpu.dot_dimension_numbers<[1], [0], [0], [1], [0, 0, 1, 1], [], []>} : vector<64x128xbf16>, vector<128x128xbf16>, vector<64x128xf32> -> vector<64x128xf32>
    %90 = arith.addf %85, %89 : vector<64x128xf32>
    %c1_99 = arith.constant 1 : index
    %c0_100 = arith.constant 0 : index
    %c0_101 = arith.constant 0 : index
    %91 = vector.load %arg10[%c1_99, %c0_100, %c0_101] : memref<10x10x128xbf16, #tpu.memory_space<vmem>>, vector<8x8x128xbf16>
    %92 = vector.shape_cast %91 : vector<8x8x128xbf16> to vector<64x128xbf16>
    %c384_102 = arith.constant 384 : index
    %c0_103 = arith.constant 0 : index
    %93 = vector.load %arg4[%c384_102, %c0_103] : memref<1152x128xbf16, #tpu.memory_space<vmem>>, vector<128x128xbf16>
    %cst_104 = arith.constant dense<0.000000e+00> : vector<64x128xf32>
    %94 = tpu.matmul %92, %93, %cst_104 {dimension_numbers = #tpu.dot_dimension_numbers<[1], [0], [0], [1], [0, 0, 1, 1], [], []>} : vector<64x128xbf16>, vector<128x128xbf16>, vector<64x128xf32> -> vector<64x128xf32>
    %95 = arith.addf %90, %94 : vector<64x128xf32>
    %c1_105 = arith.constant 1 : index
    %c1_106 = arith.constant 1 : index
    %c0_107 = arith.constant 0 : index
    %96 = vector.load %arg10[%c1_105, %c1_106, %c0_107] : memref<10x10x128xbf16, #tpu.memory_space<vmem>>, vector<8x8x128xbf16>
    %97 = vector.shape_cast %96 : vector<8x8x128xbf16> to vector<64x128xbf16>
    %c512_108 = arith.constant 512 : index
    %c0_109 = arith.constant 0 : index
    %98 = vector.load %arg4[%c512_108, %c0_109] : memref<1152x128xbf16, #tpu.memory_space<vmem>>, vector<128x128xbf16>
    %cst_110 = arith.constant dense<0.000000e+00> : vector<64x128xf32>
    %99 = tpu.matmul %97, %98, %cst_110 {dimension_numbers = #tpu.dot_dimension_numbers<[1], [0], [0], [1], [0, 0, 1, 1], [], []>} : vector<64x128xbf16>, vector<128x128xbf16>, vector<64x128xf32> -> vector<64x128xf32>
    %100 = arith.addf %95, %99 : vector<64x128xf32>
    %c1_111 = arith.constant 1 : index
    %c2_112 = arith.constant 2 : index
    %c0_113 = arith.constant 0 : index
    %101 = vector.load %arg10[%c1_111, %c2_112, %c0_113] : memref<10x10x128xbf16, #tpu.memory_space<vmem>>, vector<8x8x128xbf16>
    %102 = vector.shape_cast %101 : vector<8x8x128xbf16> to vector<64x128xbf16>
    %c640_114 = arith.constant 640 : index
    %c0_115 = arith.constant 0 : index
    %103 = vector.load %arg4[%c640_114, %c0_115] : memref<1152x128xbf16, #tpu.memory_space<vmem>>, vector<128x128xbf16>
    %cst_116 = arith.constant dense<0.000000e+00> : vector<64x128xf32>
    %104 = tpu.matmul %102, %103, %cst_116 {dimension_numbers = #tpu.dot_dimension_numbers<[1], [0], [0], [1], [0, 0, 1, 1], [], []>} : vector<64x128xbf16>, vector<128x128xbf16>, vector<64x128xf32> -> vector<64x128xf32>
    %105 = arith.addf %100, %104 : vector<64x128xf32>
    %c2_117 = arith.constant 2 : index
    %c0_118 = arith.constant 0 : index
    %c0_119 = arith.constant 0 : index
    %106 = vector.load %arg10[%c2_117, %c0_118, %c0_119] : memref<10x10x128xbf16, #tpu.memory_space<vmem>>, vector<8x8x128xbf16>
    %107 = vector.shape_cast %106 : vector<8x8x128xbf16> to vector<64x128xbf16>
    %c768_120 = arith.constant 768 : index
    %c0_121 = arith.constant 0 : index
    %108 = vector.load %arg4[%c768_120, %c0_121] : memref<1152x128xbf16, #tpu.memory_space<vmem>>, vector<128x128xbf16>
    %cst_122 = arith.constant dense<0.000000e+00> : vector<64x128xf32>
    %109 = tpu.matmul %107, %108, %cst_122 {dimension_numbers = #tpu.dot_dimension_numbers<[1], [0], [0], [1], [0, 0, 1, 1], [], []>} : vector<64x128xbf16>, vector<128x128xbf16>, vector<64x128xf32> -> vector<64x128xf32>
    %110 = arith.addf %105, %109 : vector<64x128xf32>
    %c2_123 = arith.constant 2 : index
    %c1_124 = arith.constant 1 : index
    %c0_125 = arith.constant 0 : index
    %111 = vector.load %arg10[%c2_123, %c1_124, %c0_125] : memref<10x10x128xbf16, #tpu.memory_space<vmem>>, vector<8x8x128xbf16>
    %112 = vector.shape_cast %111 : vector<8x8x128xbf16> to vector<64x128xbf16>
    %c896_126 = arith.constant 896 : index
    %c0_127 = arith.constant 0 : index
    %113 = vector.load %arg4[%c896_126, %c0_127] : memref<1152x128xbf16, #tpu.memory_space<vmem>>, vector<128x128xbf16>
    %cst_128 = arith.constant dense<0.000000e+00> : vector<64x128xf32>
    %114 = tpu.matmul %112, %113, %cst_128 {dimension_numbers = #tpu.dot_dimension_numbers<[1], [0], [0], [1], [0, 0, 1, 1], [], []>} : vector<64x128xbf16>, vector<128x128xbf16>, vector<64x128xf32> -> vector<64x128xf32>
    %115 = arith.addf %110, %114 : vector<64x128xf32>
    %c2_129 = arith.constant 2 : index
    %c2_130 = arith.constant 2 : index
    %c0_131 = arith.constant 0 : index
    %116 = vector.load %arg10[%c2_129, %c2_130, %c0_131] : memref<10x10x128xbf16, #tpu.memory_space<vmem>>, vector<8x8x128xbf16>
    %117 = vector.shape_cast %116 : vector<8x8x128xbf16> to vector<64x128xbf16>
    %c1024_132 = arith.constant 1024 : index
    %c0_133 = arith.constant 0 : index
    %118 = vector.load %arg4[%c1024_132, %c0_133] : memref<1152x128xbf16, #tpu.memory_space<vmem>>, vector<128x128xbf16>
    %cst_134 = arith.constant dense<0.000000e+00> : vector<64x128xf32>
    %119 = tpu.matmul %117, %118, %cst_134 {dimension_numbers = #tpu.dot_dimension_numbers<[1], [0], [0], [1], [0, 0, 1, 1], [], []>} : vector<64x128xbf16>, vector<128x128xbf16>, vector<64x128xf32> -> vector<64x128xf32>
    %120 = arith.addf %115, %119 : vector<64x128xf32>
    %c0_135 = arith.constant 0 : index
    %c0_136 = arith.constant 0 : index
    %121 = vector.load %arg5[%c0_135, %c0_136] : memref<1x128xf32, #tpu.memory_space<vmem>>, vector<1x128xf32>
    %122 = vector.broadcast %121 : vector<1x128xf32> to vector<64x128xf32>
    %123 = arith.addf %120, %122 : vector<64x128xf32>
    %c1_137 = arith.constant 1 : index
    %c1_138 = arith.constant 1 : index
    %c0_139 = arith.constant 0 : index
    %124 = tpu.strided_load %arg9[%c1_137, %c1_138, %c0_139] {strides = array<i32: 2, 2, 1>} : memref<18x18x128xf32, #tpu.memory_space<vmem>>, vector<8x8x128xf32>
    %125 = vector.shape_cast %124 : vector<8x8x128xf32> to vector<64x128xf32>
    %126 = arith.truncf %125 : vector<64x128xf32> to vector<64x128xbf16>
    %c0_140 = arith.constant 0 : index
    %c0_141 = arith.constant 0 : index
    %127 = vector.load %arg6[%c0_140, %c0_141] : memref<128x128xbf16, #tpu.memory_space<vmem>>, vector<128x128xbf16>
    %cst_142 = arith.constant dense<0.000000e+00> : vector<64x128xf32>
    %128 = tpu.matmul %126, %127, %cst_142 {dimension_numbers = #tpu.dot_dimension_numbers<[1], [0], [0], [1], [0, 0, 1, 1], [], []>} : vector<64x128xbf16>, vector<128x128xbf16>, vector<64x128xf32> -> vector<64x128xf32>
    %c0_143 = arith.constant 0 : index
    %c0_144 = arith.constant 0 : index
    %129 = vector.load %arg7[%c0_143, %c0_144] : memref<1x128xf32, #tpu.memory_space<vmem>>, vector<1x128xf32>
    %130 = vector.broadcast %129 : vector<1x128xf32> to vector<64x128xf32>
    %131 = arith.addf %128, %130 : vector<64x128xf32>
    %132 = arith.addf %123, %131 : vector<64x128xf32>
    %cst_145 = arith.constant 0.000000e+00 : f32
    %133 = vector.broadcast %cst_145 : f32 to vector<64x128xf32>
    %134 = arith.maximumf %132, %133 : vector<64x128xf32>
    %135 = arith.truncf %134 : vector<64x128xf32> to vector<64x128xbf16>
    %136 = vector.shape_cast %135 : vector<64x128xbf16> to vector<8x8x128xbf16>
    %c0_146 = arith.constant 0 : index
    %c0_147 = arith.constant 0 : index
    %c0_148 = arith.constant 0 : index
    %c0_149 = arith.constant 0 : index
    %137 = vector.load %arg8[%c0_146, %c0_147, %c0_148, %c0_149] : memref<1x8x8x128xbf16, #tpu.memory_space<vmem>>, vector<1x8x8x128xbf16>
    %138 = vector.shape_cast %137 : vector<1x8x8x128xbf16> to vector<8x8x128xbf16>
    %139 = vector.shape_cast %136 : vector<8x8x128xbf16> to vector<1x8x8x128xbf16>
    tpu.vector_store %arg8[%c0_146, %c0_147, %c0_148, %c0_149], %139 {strides = array<i32>} : memref<1x8x8x128xbf16, #tpu.memory_space<vmem>>, vector<1x8x8x128xbf16>,
    return
  }
  func.func @transform_0(%arg0: i32) -> (i32, i32, i32, i32) {
    %c0_i32 = arith.constant 0 : i32
    %c0_i32_0 = arith.constant 0 : i32
    %c0_i32_1 = arith.constant 0 : i32
    %c0_i32_2 = arith.constant 0 : i32
    return %arg0, %c0_i32, %c0_i32_0, %c0_i32_1 : i32, i32, i32, i32
  }
  func.func @transform_1(%arg0: i32) -> (i32, i32) {
    %c0_i32 = arith.constant 0 : i32
    %c0_i32_0 = arith.constant 0 : i32
    %c0_i32_1 = arith.constant 0 : i32
    return %c0_i32, %c0_i32_0 : i32, i32
  }
  func.func @transform_2(%arg0: i32) -> (i32, i32) {
    %c0_i32 = arith.constant 0 : i32
    %c0_i32_0 = arith.constant 0 : i32
    %c0_i32_1 = arith.constant 0 : i32
    return %c0_i32, %c0_i32_0 : i32, i32
  }
  func.func @transform_3(%arg0: i32) -> (i32, i32) {
    %c0_i32 = arith.constant 0 : i32
    %c0_i32_0 = arith.constant 0 : i32
    %c0_i32_1 = arith.constant 0 : i32
    return %c0_i32, %c0_i32_0 : i32, i32
  }
  func.func @transform_4(%arg0: i32) -> (i32, i32) {
    %c0_i32 = arith.constant 0 : i32
    %c0_i32_0 = arith.constant 0 : i32
    %c0_i32_1 = arith.constant 0 : i32
    return %c0_i32, %c0_i32_0 : i32, i32
  }
  func.func @transform_5(%arg0: i32) -> (i32, i32) {
    %c0_i32 = arith.constant 0 : i32
    %c0_i32_0 = arith.constant 0 : i32
    %c0_i32_1 = arith.constant 0 : i32
    return %c0_i32, %c0_i32_0 : i32, i32
  }
  func.func @transform_6(%arg0: i32) -> (i32, i32) {
    %c0_i32 = arith.constant 0 : i32
    %c0_i32_0 = arith.constant 0 : i32
    %c0_i32_1 = arith.constant 0 : i32
    return %c0_i32, %c0_i32_0 : i32, i32
  }
  func.func @transform_7(%arg0: i32) -> (i32, i32, i32, i32) {
    %c0_i32 = arith.constant 0 : i32
    %c0_i32_0 = arith.constant 0 : i32
    %c0_i32_1 = arith.constant 0 : i32
    %c0_i32_2 = arith.constant 0 : i32
    return %arg0, %c0_i32, %c0_i32_0, %c0_i32_1 : i32, i32, i32, i32
  }
}

</mosaic_0001>

<llo_original>
// kernel: tpu_custom_call.1
$region0: #{tpu_custom_call.1}
  #allocation0 [shape = 'u32[]', space=smem, size = 0x4, offset = 0x4, fixed_abs, tag = 'smem constant byte address 0x4 - core index']
  #allocation1 [shape = 'u32[144,128]{1,0:T(1,128)}', space=vmem, size = 0x12000, scoped, tag = 'internal scratch']
  #allocation2 [shape = 'f32[18,18,128]{2,1,0:T(8,128)}', space=vmem, size = 0x36000, scoped, tag = 'scratch operand']
  #allocation3 [shape = 'bf16[10,10,128]{2,1,0:T(8,128)(2,1)}', space=vmem, size = 0xa000, scoped, tag = 'scratch operand']
  %s0 = inlined_call_operand.hbm [shape: bf16[2,16,16,128], index: 0, kind: input, shape index: {}]
  %s1 = inlined_call_operand.hbm [shape: bf16[1152,128], index: 1, kind: input, shape index: {}]
  %s2 = inlined_call_operand.vmem [shape: f32[1,128], index: 2, kind: input, shape index: {}]
  %s3 = inlined_call_operand.hbm [shape: bf16[1152,128], index: 3, kind: input, shape index: {}]
  %s4 = inlined_call_operand.vmem [shape: f32[1,128], index: 4, kind: input, shape index: {}]
  %s5 = inlined_call_operand.hbm [shape: bf16[128,128], index: 5, kind: input, shape index: {}]
  %s6 = inlined_call_operand.vmem [shape: f32[1,128], index: 6, kind: input, shape index: {}]
  %s7 = inlined_call_operand.hbm [shape: bf16[2,8,8,128], index: 7, kind: output, shape index: {}]
  %s8 = sld [smem:[#allocation0]]
  $region77: #{tpu_custom_call.1} parent=0
    _
  %s10 = ssub.s32 1, %s8
  %s11 = scalar_select 0, %s10, %s8
  $region1: #{tpu_custom_call.1} parent=0
    #allocation4 [shape = 'u8[131072]{0}', space=vmem, size = 0x20000, scoped, tag = 'input window, operand 0']
    #allocation5 [shape = 's32[2]{0}', space=sflag, size = 0x8, scoped, tag = 'scoped memory for tpu_custom_call.1']
    #allocation6 [shape = 's32[2]{0}', space=sflag, size = 0x8, scoped, tag = 'scoped memory for tpu_custom_call.1']
    #allocation7 [shape = 'u8[294912]{0}', space=vmem, size = 0x48000, scoped, tag = 'input window, operand 1, single buffered']
    #allocation8 [shape = 's32[1]{0}', space=sflag, size = 0x4, scoped, tag = 'scoped memory for tpu_custom_call.1']
    #allocation9 [shape = 'u8[294912]{0}', space=vmem, size = 0x48000, scoped, tag = 'input window, operand 3, single buffered']
    #allocation10 [shape = 'u8[32768]{0}', space=vmem, size = 0x8000, scoped, tag = 'input window, operand 5, single buffered']
    #allocation11 [shape = 's32[1]{0}', space=sflag, size = 0x4, scoped, tag = 'scoped memory for tpu_custom_call.1']
    #allocation12 [shape = 'u8[32768]{0}', space=vmem, size = 0x8000, scoped, tag = 'output window, operand 0']
    %12 = vsyncpa [#allocation5], 0
    %s13 = scalar_lea.sflag [#allocation5], 1
    %14 = vsyncpa %s13, 0
    %15 = vsyncpa [#allocation8], 0
    %16 = vsyncpa [#allocation11], 0
    %17 = vsyncpa [#allocation6], 0
    %s18 = scalar_lea.sflag [#allocation6], 1
    %19 = vsyncpa %s18, 0
    loop: start=0, step=1, limit=4
    $region2: #{tpu_custom_call.1} parent=1 // loop_pre_header
      _
    $region3: #{tpu_custom_call.1} parent=1 // loop_header
      %s21 = sphi 0, %s25
      %p22 = scmp.ge.s32.totalorder %s21, 4
      %s31 = sphi 0, %s33
      %s34 = sphi 0, %s31
      %s35 = sphi 0, %s34
      %s51 = sphi 0, %s35
      %s55 = sphi 0, %s55
      %s57 = sphi 0, %s55
      %s58 = sphi 0, %s57
      %s72 = sphi 0, %s58
      %s76 = sphi 0, %s76
      %s78 = sphi 0, %s76
      %s79 = sphi 0, %s78
      %s93 = sphi 0, %s79
      %s97 = sphi 0, %s97
      %s99 = sphi 0, %s97
      %s100 = sphi 0, %s99
      %s114 = sphi 0, %s100
      %s118 = sphi 0, %s118
      %s120 = sphi 0, %s118
      %s121 = sphi 0, %s120
      %s135 = sphi 0, %s121
      %s139 = sphi 0, %s139
      %s141 = sphi 0, %s139
      %s142 = sphi 0, %s141
      %s156 = sphi 0, %s142
      %s160 = sphi 0, %s160
      %s162 = sphi 0, %s160
      %s163 = sphi 0, %s162
      %s177 = sphi 0, %s163
      %s183 = sphi 0, %s185
      %s186 = sphi 0, %s183
      %s187 = sphi 0, %s186
      %s203 = sphi 0, %s187
    $region4: #{tpu_custom_call.1} parent=1 // loop_header_branch
      %24 = sbr.rel (%p22) target = $region8
    $region5: #{tpu_custom_call.1} parent=1 // loop_body
      %s26 = ssub.s32 %s21, 1
      %s27 = ssub.s32 %s21, 2
      %s28 = sadd.s32 %s21, 1
      %s29 = ssub.s32 %s21, %s28
      %p30 = scmp.eq.s32.totalorder %s29, 0
      %s32 = sadd.s32 %s31, 1
      %s33 = scalar_select %p30, %s31, %s32
      %p36 = pneg %p30
      %p37 = scmp.eq.s32.totalorder %s21, 1
      %p38 = por %p36, %p37
      %p39 = scmp.ne.s32.totalorder %s31, %s34
      %p40 = scmp.eq.s32.totalorder %s21, 0
      %p41 = por %p39, %p40
      %p42 = scmp.ne.s32.totalorder %s31, %s34
      %p43 = scmp.eq.s32.totalorder %s26, 1
      %p44 = por %p42, %p43
      %p45 = scmp.ne.s32.totalorder %s34, %s35
      %p46 = scmp.eq.s32.totalorder %s26, 0
      %p47 = por %p45, %p46
      %p48 = scmp.ne.s32.totalorder %s34, %s35
      %p49 = scmp.eq.s32.totalorder %s27, 1
      %p50 = por %p48, %p49
      %p52 = scmp.ne.s32.totalorder %s35, %s51
      %p53 = scmp.eq.s32.totalorder %s27, 0
      %p54 = por %p52, %p53
      %s56 = sadd.s32 %s55, 1
      %p59 = scmp.eq.s32.totalorder %s21, 1
      %p60 = scmp.ne.s32.totalorder %s55, %s57
      %p61 = scmp.eq.s32.totalorder %s21, 0
      %p62 = por %p60, %p61
      %p63 = scmp.ne.s32.totalorder %s55, %s57
      %p64 = scmp.eq.s32.totalorder %s26, 1
      %p65 = por %p63, %p64
      %p66 = scmp.ne.s32.totalorder %s57, %s58
      %p67 = scmp.eq.s32.totalorder %s26, 0
      %p68 = por %p66, %p67
      %p69 = scmp.ne.s32.totalorder %s57, %s58
      %p70 = scmp.eq.s32.totalorder %s27, 1
      %p71 = por %p69, %p70
      %p73 = scmp.ne.s32.totalorder %s58, %s72
      %p74 = scmp.eq.s32.totalorder %s27, 0
      %p75 = por %p73, %p74
      %s77 = sadd.s32 %s76, 1
      %p80 = scmp.eq.s32.totalorder %s21, 1
      %p81 = scmp.ne.s32.totalorder %s76, %s78
      %p82 = scmp.eq.s32.totalorder %s21, 0
      %p83 = por %p81, %p82
      %p84 = scmp.ne.s32.totalorder %s76, %s78
      %p85 = scmp.eq.s32.totalorder %s26, 1
      %p86 = por %p84, %p85
      %p87 = scmp.ne.s32.totalorder %s78, %s79
      %p88 = scmp.eq.s32.totalorder %s26, 0
      %p89 = por %p87, %p88
      %p90 = scmp.ne.s32.totalorder %s78, %s79
      %p91 = scmp.eq.s32.totalorder %s27, 1
      %p92 = por %p90, %p91
      %p94 = scmp.ne.s32.totalorder %s79, %s93
      %p95 = scmp.eq.s32.totalorder %s27, 0
      %p96 = por %p94, %p95
      %s98 = sadd.s32 %s97, 1
      %p101 = scmp.eq.s32.totalorder %s21, 1
      %p102 = scmp.ne.s32.totalorder %s97, %s99
      %p103 = scmp.eq.s32.totalorder %s21, 0
      %p104 = por %p102, %p103
      %p105 = scmp.ne.s32.totalorder %s97, %s99
      %p106 = scmp.eq.s32.totalorder %s26, 1
      %p107 = por %p105, %p106
      %p108 = scmp.ne.s32.totalorder %s99, %s100
      %p109 = scmp.eq.s32.totalorder %s26, 0
      %p110 = por %p108, %p109
      %p111 = scmp.ne.s32.totalorder %s99, %s100
      %p112 = scmp.eq.s32.totalorder %s27, 1
      %p113 = por %p111, %p112
      %p115 = scmp.ne.s32.totalorder %s100, %s114
      %p116 = scmp.eq.s32.totalorder %s27, 0
      %p117 = por %p115, %p116
      %s119 = sadd.s32 %s118, 1
      %p122 = scmp.eq.s32.totalorder %s21, 1
      %p123 = scmp.ne.s32.totalorder %s118, %s120
      %p124 = scmp.eq.s32.totalorder %s21, 0
      %p125 = por %p123, %p124
      %p126 = scmp.ne.s32.totalorder %s118, %s120
      %p127 = scmp.eq.s32.totalorder %s26, 1
      %p128 = por %p126, %p127
      %p129 = scmp.ne.s32.totalorder %s120, %s121
      %p130 = scmp.eq.s32.totalorder %s26, 0
      %p131 = por %p129, %p130
      %p132 = scmp.ne.s32.totalorder %s120, %s121
      %p133 = scmp.eq.s32.totalorder %s27, 1
      %p134 = por %p132, %p133
      %p136 = scmp.ne.s32.totalorder %s121, %s135
      %p137 = scmp.eq.s32.totalorder %s27, 0
      %p138 = por %p136, %p137
      %s140 = sadd.s32 %s139, 1
      %p143 = scmp.eq.s32.totalorder %s21, 1
      %p144 = scmp.ne.s32.totalorder %s139, %s141
      %p145 = scmp.eq.s32.totalorder %s21, 0
      %p146 = por %p144, %p145
      %p147 = scmp.ne.s32.totalorder %s139, %s141
      %p148 = scmp.eq.s32.totalorder %s26, 1
      %p149 = por %p147, %p148
      %p150 = scmp.ne.s32.totalorder %s141, %s142
      %p151 = scmp.eq.s32.totalorder %s26, 0
      %p152 = por %p150, %p151
      %p153 = scmp.ne.s32.totalorder %s141, %s142
      %p154 = scmp.eq.s32.totalorder %s27, 1
      %p155 = por %p153, %p154
      %p157 = scmp.ne.s32.totalorder %s142, %s156
      %p158 = scmp.eq.s32.totalorder %s27, 0
      %p159 = por %p157, %p158
      %s161 = sadd.s32 %s160, 1
      %p164 = scmp.eq.s32.totalorder %s21, 1
      %p165 = scmp.ne.s32.totalorder %s160, %s162
      %p166 = scmp.eq.s32.totalorder %s21, 0
      %p167 = por %p165, %p166
      %p168 = scmp.ne.s32.totalorder %s160, %s162
      %p169 = scmp.eq.s32.totalorder %s26, 1
      %p170 = por %p168, %p169
      %p171 = scmp.ne.s32.totalorder %s162, %s163
      %p172 = scmp.eq.s32.totalorder %s26, 0
      %p173 = por %p171, %p172
      %p174 = scmp.ne.s32.totalorder %s162, %s163
      %p175 = scmp.eq.s32.totalorder %s27, 1
      %p176 = por %p174, %p175
      %p178 = scmp.ne.s32.totalorder %s163, %s177
      %p179 = scmp.eq.s32.totalorder %s27, 0
      %p180 = por %p178, %p179
      %s181 = ssub.s32 %s21, %s28
      %p182 = scmp.eq.s32.totalorder %s181, 0
      %s184 = sadd.s32 %s183, 1
      %s185 = scalar_select %p182, %s183, %s184
      %p188 = pneg %p182
      %p189 = scmp.eq.s32.totalorder %s21, 1
      %p190 = por %p188, %p189
      %p191 = scmp.ne.s32.totalorder %s183, %s186
      %p192 = scmp.eq.s32.totalorder %s21, 0
      %p193 = por %p191, %p192
      %p194 = scmp.ne.s32.totalorder %s183, %s186
      %p195 = scmp.eq.s32.totalorder %s26, 1
      %p196 = por %p194, %p195
      %p197 = scmp.ne.s32.totalorder %s186, %s187
      %p198 = scmp.eq.s32.totalorder %s26, 0
      %p199 = por %p197, %p198
      %p200 = scmp.ne.s32.totalorder %s186, %s187
      %p201 = scmp.eq.s32.totalorder %s27, 1
      %p202 = por %p200, %p201
      %p204 = scmp.ne.s32.totalorder %s187, %s203
      %p205 = scmp.eq.s32.totalorder %s27, 0
      %p206 = por %p204, %p205
      %p207 = scmp.le.s32.totalorder 1, %s21
      %p208 = scmp.lt.s32.totalorder %s21, 3
      %p209 = pnand %p207, %p208
      %p210 = pneg %p209
      // Predicated region
      $region9: #{tpu_custom_call.1} parent=5 // pred_check
        _
      $region10: #{tpu_custom_call.1} parent=5 // pred_check_branch
        %212 = sbr.rel (%p209) target = $region12
      $region11: #{tpu_custom_call.1} parent=5 // pred_region
        %s213 = ssub.s32 %s21, 1
        // Predicated region
        $region13: #{tpu_custom_call.1} parent=11 // pred_check
          %p214 = pneg %p68
        $region14: #{tpu_custom_call.1} parent=11 // pred_check_branch
          %216 = sbr.rel (%p214) target = $region16
        $region15: #{tpu_custom_call.1} parent=11 // pred_region
          %s218 = ssub.s32 9216, 9216
          %219 = vsyncadd [#allocation8], %s218
          %s220 = sshll.u32 [#allocation7], 4
          %s221 = int_to_ptr.vmem [resolvable:$true] %s220
          %226 = dma.hbm_to_vmem [thread:$0]  %s1, 9216, %s221, [#allocation8], 64, 64, 4
        $region16: #{tpu_custom_call.1} parent=11 // pred_fallthru
          _
        // Predicated region
        $region17: #{tpu_custom_call.1} parent=11 // pred_check
          %p227 = pneg %p89
        $region18: #{tpu_custom_call.1} parent=11 // pred_check_branch
          %229 = sbr.rel (%p227) target = $region20
        $region19: #{tpu_custom_call.1} parent=11 // pred_region
          _
        $region20: #{tpu_custom_call.1} parent=11 // pred_fallthru
          _
        // Predicated region
        $region21: #{tpu_custom_call.1} parent=11 // pred_check
          %p230 = pneg %p110
        $region22: #{tpu_custom_call.1} parent=11 // pred_check_branch
          %232 = sbr.rel (%p230) target = $region24
        $region23: #{tpu_custom_call.1} parent=11 // pred_region
          %s234 = ssub.s32 9216, 9216
          %235 = vsyncadd [#allocation8], %s234
          %s236 = sshll.u32 [#allocation9], 4
          %s237 = int_to_ptr.vmem [resolvable:$true] %s236
          %242 = dma.hbm_to_vmem [thread:$0]  %s3, 9216, %s237, [#allocation8], 64, 64, 4
        $region24: #{tpu_custom_call.1} parent=11 // pred_fallthru
          _
        // Predicated region
        $region25: #{tpu_custom_call.1} parent=11 // pred_check
          %p243 = pneg %p131
        $region26: #{tpu_custom_call.1} parent=11 // pred_check_branch
          %245 = sbr.rel (%p243) target = $region28
        $region27: #{tpu_custom_call.1} parent=11 // pred_region
          _
        $region28: #{tpu_custom_call.1} parent=11 // pred_fallthru
          _
        // Predicated region
        $region29: #{tpu_custom_call.1} parent=11 // pred_check
          %p246 = pneg %p152
        $region30: #{tpu_custom_call.1} parent=11 // pred_check_branch
          %248 = sbr.rel (%p246) target = $region32
        $region31: #{tpu_custom_call.1} parent=11 // pred_region
          %s250 = ssub.s32 1024, 1024
          %251 = vsyncadd [#allocation11], %s250
          %s252 = sshll.u32 [#allocation10], 4
          %s253 = int_to_ptr.vmem [resolvable:$true] %s252
          %258 = dma.hbm_to_vmem [thread:$0]  %s5, 1024, %s253, [#allocation11], 64, 64, 4
        $region32: #{tpu_custom_call.1} parent=11 // pred_fallthru
          _
        // Predicated region
        $region33: #{tpu_custom_call.1} parent=11 // pred_check
          %p259 = pneg %p173
        $region34: #{tpu_custom_call.1} parent=11 // pred_check_branch
          %261 = sbr.rel (%p259) target = $region36
        $region35: #{tpu_custom_call.1} parent=11 // pred_region
          _
        $region36: #{tpu_custom_call.1} parent=11 // pred_fallthru
          _
      $region12: #{tpu_custom_call.1} parent=5 // pred_fallthru
        _
      %p262 = scmp.lt.s32.totalorder %s21, 2
      // Predicated region
      $region37: #{tpu_custom_call.1} parent=5 // pred_check
        %p263 = pneg %p262
      $region38: #{tpu_custom_call.1} parent=5 // pred_check_branch
        %265 = sbr.rel (%p263) target = $region40
      $region39: #{tpu_custom_call.1} parent=5 // pred_region
        // Predicated region
        $region41: #{tpu_custom_call.1} parent=39 // pred_check
          %p266 = pneg %p41
        $region42: #{tpu_custom_call.1} parent=39 // pred_check_branch
          %268 = sbr.rel (%p266) target = $region44
        $region43: #{tpu_custom_call.1} parent=39 // pred_region
          %s269 = sand.u32 %s31, 1
          %s270 = scalar_lea.sflag [#allocation5], %s269
          %s271 = sand.u32 %s31, 1
          %s272 = smul.addr %s271, 128
          %s273 = scalar_lea.vmem [#allocation4], %s272
          %s275 = ssub.s32 2048, 2048
          %276 = vsyncadd %s270, %s275
          %s277 = smul.addr %s21, 32
          %s278 = smul.addr %s277, 64
          %s279 = scalar_lea.hbm %s0, %s278
          %s280 = sshll.u32 %s273, 4
          %s281 = int_to_ptr.vmem [resolvable:$true] %s280
          %286 = dma.hbm_to_vmem [thread:$0]  %s279, 2048, %s281, %s270, 64, 64, 4
        $region44: #{tpu_custom_call.1} parent=39 // pred_fallthru
          _
      $region40: #{tpu_custom_call.1} parent=5 // pred_fallthru
        _
      %p287 = scmp.le.s32.totalorder 1, %s21
      %p288 = scmp.lt.s32.totalorder %s21, 3
      %p289 = pnand %p287, %p288
      %p290 = pneg %p289
      // Predicated region
      $region45: #{tpu_custom_call.1} parent=5 // pred_check
        _
      $region46: #{tpu_custom_call.1} parent=5 // pred_check_branch
        %292 = sbr.rel (%p289) target = $region48
      $region47: #{tpu_custom_call.1} parent=5 // pred_region
        %s293 = ssub.s32 %s21, 1
        %s294 = sand.u32 %s34, 1
        %s295 = scalar_lea.sflag [#allocation5], %s294
        %s296 = sand.u32 %s34, 1
        %s297 = smul.addr %s296, 128
        %s298 = scalar_lea.vmem [#allocation4], %s297
        // Predicated region
        $region49: #{tpu_custom_call.1} parent=47 // pred_check
          %p299 = pneg %p47
        $region50: #{tpu_custom_call.1} parent=47 // pred_check_branch
          %301 = sbr.rel (%p299) target = $region52
        $region51: #{tpu_custom_call.1} parent=47 // pred_region
          %302 = dma.done %s295, 2048
        $region52: #{tpu_custom_call.1} parent=47 // pred_fallthru
          _
        // Predicated region
        $region53: #{tpu_custom_call.1} parent=47 // pred_check
          %p303 = pneg %p68
        $region54: #{tpu_custom_call.1} parent=47 // pred_check_branch
          %305 = sbr.rel (%p303) target = $region56
        $region55: #{tpu_custom_call.1} parent=47 // pred_region
          %306 = dma.done [#allocation8], 9216
        $region56: #{tpu_custom_call.1} parent=47 // pred_fallthru
          _
        // Predicated region
        $region57: #{tpu_custom_call.1} parent=47 // pred_check
          %p307 = pneg %p110
        $region58: #{tpu_custom_call.1} parent=47 // pred_check_branch
          %309 = sbr.rel (%p307) target = $region60
        $region59: #{tpu_custom_call.1} parent=47 // pred_region
          %310 = dma.done [#allocation8], 9216
        $region60: #{tpu_custom_call.1} parent=47 // pred_fallthru
          _
        // Predicated region
        $region61: #{tpu_custom_call.1} parent=47 // pred_check
          %p311 = pneg %p152
        $region62: #{tpu_custom_call.1} parent=47 // pred_check_branch
          %313 = sbr.rel (%p311) target = $region64
        $region63: #{tpu_custom_call.1} parent=47 // pred_region
          %314 = dma.done [#allocation11], 1024
        $region64: #{tpu_custom_call.1} parent=47 // pred_fallthru
          _
        %s315 = sand.u32 %s34, 1
        %s316 = scalar_lea.sflag [#allocation5], %s315
        %s317 = sand.u32 %s34, 1
        %s318 = smul.addr %s317, 128
        %s319 = scalar_lea.vmem [#allocation4], %s318
        %p320 = pneg %p47
        %p321 = pneg %p44
        %p322 = pneg %p68
        %p323 = pneg %p65
        %p324 = pneg %p89
        %p325 = pneg %p86
        %p326 = pneg %p110
        %p327 = pneg %p107
        %p328 = pneg %p131
        %p329 = pneg %p128
        %p330 = pneg %p152
        %p331 = pneg %p149
        %p332 = pneg %p173
        %p333 = pneg %p170
        %p334 = pneg %p199
        %p335 = pneg %p196
        %s336 = sand.u32 %s186, 1
        %s337 = scalar_lea.sflag [#allocation6], %s336
        %s338 = sand.u32 %s186, 1
        %s339 = smul.addr %s338, 32
        %s340 = scalar_lea.vmem [#allocation12], %s339
        %342 = vst [vmem:[#allocation2] sm:$0xff] 0.0
        %343 = vst [vmem:[#allocation2 + $0x8] sm:$0xff] 0.0
        %344 = vst [vmem:[#allocation2 + $0x10] sm:$0x3] 0.0
        %s345 = scalar_lea.vmem [#allocation2], 408
        %346 = vst [vmem:[%s345] sm:$0xff] 0.0
        %347 = vst [vmem:[%s345 + $0x8] sm:$0xff] 0.0
        %348 = vst [vmem:[%s345 + $0x10] sm:$0x3] 0.0
        %349 = vst [vmem:[#allocation2] sm:$0x1] 0.0
        %350 = vst [vmem:[#allocation2 + $0x18] sm:$0x1] 0.0
        %351 = vst [vmem:[#allocation2 + $0x30] sm:$0x1] 0.0
        %352 = vst [vmem:[#allocation2 + $0x48] sm:$0x1] 0.0
        %353 = vst [vmem:[#allocation2 + $0x60] sm:$0x1] 0.0
        %354 = vst [vmem:[#allocation2 + $0x78] sm:$0x1] 0.0
        %355 = vst [vmem:[#allocation2 + $0x90] sm:$0x1] 0.0
        %356 = vst [vmem:[#allocation2 + $0xa8] sm:$0x1] 0.0
        %357 = vst [vmem:[#allocation2 + $0xc0] sm:$0x1] 0.0
        %358 = vst [vmem:[#allocation2 + $0xd8] sm:$0x1] 0.0
        %359 = vst [vmem:[#allocation2 + $0xf0] sm:$0x1] 0.0
        %360 = vst [vmem:[#allocation2 + $0x108] sm:$0x1] 0.0
        %361 = vst [vmem:[#allocation2 + $0x120] sm:$0x1] 0.0
        %362 = vst [vmem:[#allocation2 + $0x138] sm:$0x1] 0.0
        %363 = vst [vmem:[#allocation2 + $0x150] sm:$0x1] 0.0
        %364 = vst [vmem:[#allocation2 + $0x168] sm:$0x1] 0.0
        %365 = vst [vmem:[#allocation2 + $0x180] sm:$0x1] 0.0
        %366 = vst [vmem:[#allocation2 + $0x198] sm:$0x1] 0.0
        %367 = vst [vmem:[#allocation2 + $0x11] sm:$0x1] 0.0
        %368 = vst [vmem:[#allocation2 + $0x29] sm:$0x1] 0.0
        %369 = vst [vmem:[#allocation2 + $0x41] sm:$0x1] 0.0
        %370 = vst [vmem:[#allocation2 + $0x59] sm:$0x1] 0.0
        %371 = vst [vmem:[#allocation2 + $0x71] sm:$0x1] 0.0
        %372 = vst [vmem:[#allocation2 + $0x89] sm:$0x1] 0.0
        %373 = vst [vmem:[#allocation2 + $0xa1] sm:$0x1] 0.0
        %374 = vst [vmem:[#allocation2 + $0xb9] sm:$0x1] 0.0
        %375 = vst [vmem:[#allocation2 + $0xd1] sm:$0x1] 0.0
        %376 = vst [vmem:[#allocation2 + $0xe9] sm:$0x1] 0.0
        %377 = vst [vmem:[#allocation2 + $0x101] sm:$0x1] 0.0
        %378 = vst [vmem:[#allocation2 + $0x119] sm:$0x1] 0.0
        %379 = vst [vmem:[#allocation2 + $0x131] sm:$0x1] 0.0
        %380 = vst [vmem:[#allocation2 + $0x149] sm:$0x1] 0.0
        %381 = vst [vmem:[#allocation2 + $0x161] sm:$0x1] 0.0
        %382 = vst [vmem:[#allocation2 + $0x179] sm:$0x1] 0.0
        %383 = vst [vmem:[#allocation2 + $0x191] sm:$0x1] 0.0
        %384 = vst [vmem:[#allocation2 + $0x1a9] sm:$0x1] 0.0
        %385 = vst [vmem:[#allocation3] sm:$0xf] 0
        %386 = vst [vmem:[#allocation3 + $0x4] sm:$0x1] 0
        %s387 = scalar_lea.vmem [#allocation3], 72
        %388 = vst [vmem:[%s387] sm:$0xf] 0
        %389 = vst [vmem:[%s387 + $0x4] sm:$0x1] 0
        %vm390 = vcmask 1040384
        %vm391 = vsmask.f32 256
        %vm392 = vmand %vm390, %vm391
        %v393 = vld [vmem:[#allocation3] sm:$0x1]
        %v394 = vsel %vm392, 0, %v393
        %395 = vst [vmem:[#allocation3] sm:$0x1] %v394
        %v396 = vld [vmem:[#allocation3 + $0x8] sm:$0x1]
        %v397 = vsel %vm392, 0, %v396
        %398 = vst [vmem:[#allocation3 + $0x8] sm:$0x1] %v397
        %v399 = vld [vmem:[#allocation3 + $0x10] sm:$0x1]
        %v400 = vsel %vm392, 0, %v399
        %401 = vst [vmem:[#allocation3 + $0x10] sm:$0x1] %v400
        %v402 = vld [vmem:[#allocation3 + $0x18] sm:$0x1]
        %v403 = vsel %vm392, 0, %v402
        %404 = vst [vmem:[#allocation3 + $0x18] sm:$0x1] %v403
        %v405 = vld [vmem:[#allocation3 + $0x20] sm:$0x1]
        %v406 = vsel %vm392, 0, %v405
        %407 = vst [vmem:[#allocation3 + $0x20] sm:$0x1] %v406
        %v408 = vld [vmem:[#allocation3 + $0x28] sm:$0x1]
        %v409 = vsel %vm392, 0, %v408
        %410 = vst [vmem:[#allocation3 + $0x28] sm:$0x1] %v409
        %v411 = vld [vmem:[#allocation3 + $0x30] sm:$0x1]
        %v412 = vsel %vm392, 0, %v411
        %413 = vst [vmem:[#allocation3 + $0x30] sm:$0x1] %v412
        %v414 = vld [vmem:[#allocation3 + $0x38] sm:$0x1]
        %v415 = vsel %vm392, 0, %v414
        %416 = vst [vmem:[#allocation3 + $0x38] sm:$0x1] %v415
        %v417 = vld [vmem:[#allocation3 + $0x40] sm:$0x1]
        %v418 = vsel %vm392, 0, %v417
        %419 = vst [vmem:[#allocation3 + $0x40] sm:$0x1] %v418
        %v420 = vld [vmem:[#allocation3 + $0x48] sm:$0x1]
        %v421 = vsel %vm392, 0, %v420
        %422 = vst [vmem:[#allocation3 + $0x48] sm:$0x1] %v421
        %vm423 = vsmask.f32 7938
        %vm424 = vmand %vm390, %vm423
        %v425 = vld [vmem:[#allocation3 + $0x4] sm:$0x1]
        %v426 = vsel %vm424, 0, %v425
        %427 = vst [vmem:[#allocation3 + $0x4] sm:$0x1] %v426
        %v428 = vld [vmem:[#allocation3 + $0xc] sm:$0x1]
        %v429 = vsel %vm424, 0, %v428
        %430 = vst [vmem:[#allocation3 + $0xc] sm:$0x1] %v429
        %v431 = vld [vmem:[#allocation3 + $0x14] sm:$0x1]
        %v432 = vsel %vm424, 0, %v431
        %433 = vst [vmem:[#allocation3 + $0x14] sm:$0x1] %v432
        %v434 = vld [vmem:[#allocation3 + $0x1c] sm:$0x1]
        %v435 = vsel %vm424, 0, %v434
        %436 = vst [vmem:[#allocation3 + $0x1c] sm:$0x1] %v435
        %v437 = vld [vmem:[#allocation3 + $0x24] sm:$0x1]
        %v438 = vsel %vm424, 0, %v437
        %439 = vst [vmem:[#allocation3 + $0x24] sm:$0x1] %v438
        %v440 = vld [vmem:[#allocation3 + $0x2c] sm:$0x1]
        %v441 = vsel %vm424, 0, %v440
        %442 = vst [vmem:[#allocation3 + $0x2c] sm:$0x1] %v441
        %v443 = vld [vmem:[#allocation3 + $0x34] sm:$0x1]
        %v444 = vsel %vm424, 0, %v443
        %445 = vst [vmem:[#allocation3 + $0x34] sm:$0x1] %v444
        %v446 = vld [vmem:[#allocation3 + $0x3c] sm:$0x1]
        %v447 = vsel %vm424, 0, %v446
        %448 = vst [vmem:[#allocation3 + $0x3c] sm:$0x1] %v447
        %v449 = vld [vmem:[#allocation3 + $0x44] sm:$0x1]
        %v450 = vsel %vm424, 0, %v449
        %451 = vst [vmem:[#allocation3 + $0x44] sm:$0x1] %v450
        %v452 = vld [vmem:[#allocation3 + $0x4c] sm:$0x1]
        %v453 = vsel %vm424, 0, %v452
        %454 = vst [vmem:[#allocation3 + $0x4c] sm:$0x1] %v453
        %v455 = vld [vmem:[%s298] sm:$0xf]
        %v456 = vld [vmem:[%s298 + $0x4] sm:$0xf]
        %v457 = vld [vmem:[%s298 + $0x8] sm:$0xf]
        %v458 = vld [vmem:[%s298 + $0xc] sm:$0xf]
        %v459 = vld [vmem:[%s298 + $0x10] sm:$0xf]
        %v460 = vld [vmem:[%s298 + $0x14] sm:$0xf]
        %v461 = vld [vmem:[%s298 + $0x18] sm:$0xf]
        %v462 = vld [vmem:[%s298 + $0x1c] sm:$0xf]
        %v463 = vld [vmem:[%s298 + $0x20] sm:$0xf]
        %v464 = vld [vmem:[%s298 + $0x24] sm:$0xf]
        %v465 = vld [vmem:[%s298 + $0x28] sm:$0xf]
        %v466 = vld [vmem:[%s298 + $0x2c] sm:$0xf]
        %v467 = vld [vmem:[%s298 + $0x30] sm:$0xf]
        %v468 = vld [vmem:[%s298 + $0x34] sm:$0xf]
        %v469 = vld [vmem:[%s298 + $0x38] sm:$0xf]
        %v470 = vld [vmem:[%s298 + $0x3c] sm:$0xf]
        %v471 = vld [vmem:[%s298 + $0x40] sm:$0xf]
        %v472 = vld [vmem:[%s298 + $0x44] sm:$0xf]
        %v473 = vld [vmem:[%s298 + $0x48] sm:$0xf]
        %v474 = vld [vmem:[%s298 + $0x4c] sm:$0xf]
        %v475 = vld [vmem:[%s298 + $0x50] sm:$0xf]
        %v476 = vld [vmem:[%s298 + $0x54] sm:$0xf]
        %v477 = vld [vmem:[%s298 + $0x58] sm:$0xf]
        %v478 = vld [vmem:[%s298 + $0x5c] sm:$0xf]
        %v479 = vld [vmem:[%s298 + $0x60] sm:$0xf]
        %v480 = vld [vmem:[%s298 + $0x64] sm:$0xf]
        %v481 = vld [vmem:[%s298 + $0x68] sm:$0xf]
        %v482 = vld [vmem:[%s298 + $0x6c] sm:$0xf]
        %v483 = vld [vmem:[%s298 + $0x70] sm:$0xf]
        %v484 = vld [vmem:[%s298 + $0x74] sm:$0xf]
        %v485 = vld [vmem:[%s298 + $0x78] sm:$0xf]
        %v486 = vld [vmem:[%s298 + $0x7c] sm:$0xf]
        %v487 = vunpack.c.l.bf16 %v455
        %v488 = vunpack.c.l.bf16 %v456
        %v489 = vunpack.c.l.bf16 %v457
        %v490 = vunpack.c.l.bf16 %v458
        %v491 = vunpack.c.l.bf16 %v459
        %v492 = vunpack.c.l.bf16 %v460
        %v493 = vunpack.c.l.bf16 %v461
        %v494 = vunpack.c.l.bf16 %v462
        %v495 = vunpack.c.l.bf16 %v463
        %v496 = vunpack.c.l.bf16 %v464
        %v497 = vunpack.c.l.bf16 %v465
        %v498 = vunpack.c.l.bf16 %v466
        %v499 = vunpack.c.l.bf16 %v467
        %v500 = vunpack.c.l.bf16 %v468
        %v501 = vunpack.c.l.bf16 %v469
        %v502 = vunpack.c.l.bf16 %v470
        %v503 = vunpack.c.l.bf16 %v471
        %v504 = vunpack.c.l.bf16 %v472
        %v505 = vunpack.c.l.bf16 %v473
        %v506 = vunpack.c.l.bf16 %v474
        %v507 = vunpack.c.l.bf16 %v475
        %v508 = vunpack.c.l.bf16 %v476
        %v509 = vunpack.c.l.bf16 %v477
        %v510 = vunpack.c.l.bf16 %v478
        %v511 = vunpack.c.l.bf16 %v479
        %v512 = vunpack.c.l.bf16 %v480
        %v513 = vunpack.c.l.bf16 %v481
        %v514 = vunpack.c.l.bf16 %v482
        %v515 = vunpack.c.l.bf16 %v483
        %v516 = vunpack.c.l.bf16 %v484
        %v517 = vunpack.c.l.bf16 %v485
        %v518 = vunpack.c.l.bf16 %v486
        %s519 = scalar_lea.vmem [#allocation2], 24
        %520 = vst [vmem:[%s519 + $0x1] sm:$0xff] %v487
        %521 = vst [vmem:[%s519 + $0x9] sm:$0xff] %v488
        %522 = vst [vmem:[%s519 + $0x19] sm:$0xff] %v489
        %523 = vst [vmem:[%s519 + $0x21] sm:$0xff] %v490
        %524 = vst [vmem:[%s519 + $0x31] sm:$0xff] %v491
        %525 = vst [vmem:[%s519 + $0x39] sm:$0xff] %v492
        %526 = vst [vmem:[%s519 + $0x49] sm:$0xff] %v493
        %527 = vst [vmem:[%s519 + $0x51] sm:$0xff] %v494
        %528 = vst [vmem:[%s519 + $0x61] sm:$0xff] %v495
        %529 = vst [vmem:[%s519 + $0x69] sm:$0xff] %v496
        %530 = vst [vmem:[%s519 + $0x79] sm:$0xff] %v497
        %531 = vst [vmem:[%s519 + $0x81] sm:$0xff] %v498
        %532 = vst [vmem:[%s519 + $0x91] sm:$0xff] %v499
        %533 = vst [vmem:[%s519 + $0x99] sm:$0xff] %v500
        %534 = vst [vmem:[%s519 + $0xa9] sm:$0xff] %v501
        %535 = vst [vmem:[%s519 + $0xb1] sm:$0xff] %v502
        %536 = vst [vmem:[%s519 + $0xc1] sm:$0xff] %v503
        %537 = vst [vmem:[%s519 + $0xc9] sm:$0xff] %v504
        %538 = vst [vmem:[%s519 + $0xd9] sm:$0xff] %v505
        %539 = vst [vmem:[%s519 + $0xe1] sm:$0xff] %v506
        %540 = vst [vmem:[%s519 + $0xf1] sm:$0xff] %v507
        %541 = vst [vmem:[%s519 + $0xf9] sm:$0xff] %v508
        %542 = vst [vmem:[%s519 + $0x109] sm:$0xff] %v509
        %543 = vst [vmem:[%s519 + $0x111] sm:$0xff] %v510
        %544 = vst [vmem:[%s519 + $0x121] sm:$0xff] %v511
        %545 = vst [vmem:[%s519 + $0x129] sm:$0xff] %v512
        %546 = vst [vmem:[%s519 + $0x139] sm:$0xff] %v513
        %547 = vst [vmem:[%s519 + $0x141] sm:$0xff] %v514
        %548 = vst [vmem:[%s519 + $0x151] sm:$0xff] %v515
        %549 = vst [vmem:[%s519 + $0x159] sm:$0xff] %v516
        %550 = vst [vmem:[%s519 + $0x169] sm:$0xff] %v517
        %551 = vst [vmem:[%s519 + $0x171] sm:$0xff] %v518
        %v552 = vld [vmem:[#allocation2] ss:$2 sm:$0xff]
        %s553 = scalar_lea.vmem [#allocation2], 48
        %v554 = vld [vmem:[%s553] ss:$2 sm:$0xff]
        %s555 = scalar_lea.vmem [#allocation2], 96
        %v556 = vld [vmem:[%s555] ss:$2 sm:$0xff]
        %s557 = scalar_lea.vmem [#allocation2], 144
        %v558 = vld [vmem:[%s557] ss:$2 sm:$0xff]
        %s559 = scalar_lea.vmem [#allocation2], 192
        %v560 = vld [vmem:[%s559] ss:$2 sm:$0xff]
        %s561 = scalar_lea.vmem [#allocation2], 240
        %v562 = vld [vmem:[%s561] ss:$2 sm:$0xff]
        %s563 = scalar_lea.vmem [#allocation2], 288
        %v564 = vld [vmem:[%s563] ss:$2 sm:$0xff]
        %s565 = scalar_lea.vmem [#allocation2], 336
        %v566 = vld [vmem:[%s565] ss:$2 sm:$0xff]
        %v567 = vpack.c.bf16 %v554, %v552
        %v568 = vpack.c.bf16 %v558, %v556
        %v569 = vpack.c.bf16 %v562, %v560
        %v570 = vpack.c.bf16 %v566, %v564
        %v571 = vld [vmem:[#allocation7] sm:$0xf]
        %v572 = vld [vmem:[#allocation7 + $0x4] sm:$0xf]
        %v573 = vld [vmem:[#allocation7 + $0x8] sm:$0xf]
        %v574 = vld [vmem:[#allocation7 + $0xc] sm:$0xf]
        %v575 = vld [vmem:[#allocation7 + $0x10] sm:$0xf]
        %v576 = vld [vmem:[#allocation7 + $0x14] sm:$0xf]
        %v577 = vld [vmem:[#allocation7 + $0x18] sm:$0xf]
        %v578 = vld [vmem:[#allocation7 + $0x1c] sm:$0xf]
        %v579 = vld [vmem:[#allocation7 + $0x20] sm:$0xf]
        %v580 = vld [vmem:[#allocation7 + $0x24] sm:$0xf]
        %v581 = vld [vmem:[#allocation7 + $0x28] sm:$0xf]
        %v582 = vld [vmem:[#allocation7 + $0x2c] sm:$0xf]
        %v583 = vld [vmem:[#allocation7 + $0x30] sm:$0xf]
        %v584 = vld [vmem:[#allocation7 + $0x34] sm:$0xf]
        %v585 = vld [vmem:[#allocation7 + $0x38] sm:$0xf]
        %v586 = vld [vmem:[#allocation7 + $0x3c] sm:$0xf]
        %s587 = scalar_lea.vmem [#allocation2], 1
        %v588 = vld [vmem:[%s587] ss:$2 sm:$0xff]
        %s589 = scalar_lea.vmem [#allocation2], 49
        %v590 = vld [vmem:[%s589] ss:$2 sm:$0xff]
        %s591 = scalar_lea.vmem [#allocation2], 97
        %v592 = vld [vmem:[%s591] ss:$2 sm:$0xff]
        %s593 = scalar_lea.vmem [#allocation2], 145
        %v594 = vld [vmem:[%s593] ss:$2 sm:$0xff]
        %s595 = scalar_lea.vmem [#allocation2], 193
        %v596 = vld [vmem:[%s595] ss:$2 sm:$0xff]
        %s597 = scalar_lea.vmem [#allocation2], 241
        %v598 = vld [vmem:[%s597] ss:$2 sm:$0xff]
        %s599 = scalar_lea.vmem [#allocation2], 289
        %v600 = vld [vmem:[%s599] ss:$2 sm:$0xff]
        %s601 = scalar_lea.vmem [#allocation2], 337
        %v602 = vld [vmem:[%s601] ss:$2 sm:$0xff]
        %v603 = vpack.c.bf16 %v590, %v588
        %v604 = vpack.c.bf16 %v594, %v592
        %v605 = vpack.c.bf16 %v598, %v596
        %v606 = vpack.c.bf16 %v602, %v600
        %v607 = vld [vmem:[#allocation7 + $0x40] sm:$0xf]
        %v608 = vld [vmem:[#allocation7 + $0x44] sm:$0xf]
        %v609 = vld [vmem:[#allocation7 + $0x48] sm:$0xf]
        %v610 = vld [vmem:[#allocation7 + $0x4c] sm:$0xf]
        %v611 = vld [vmem:[#allocation7 + $0x50] sm:$0xf]
        %v612 = vld [vmem:[#allocation7 + $0x54] sm:$0xf]
        %v613 = vld [vmem:[#allocation7 + $0x58] sm:$0xf]
        %v614 = vld [vmem:[#allocation7 + $0x5c] sm:$0xf]
        %v615 = vld [vmem:[#allocation7 + $0x60] sm:$0xf]
        %v616 = vld [vmem:[#allocation7 + $0x64] sm:$0xf]
        %v617 = vld [vmem:[#allocation7 + $0x68] sm:$0xf]
        %v618 = vld [vmem:[#allocation7 + $0x6c] sm:$0xf]
        %v619 = vld [vmem:[#allocation7 + $0x70] sm:$0xf]
        %v620 = vld [vmem:[#allocation7 + $0x74] sm:$0xf]
        %v621 = vld [vmem:[#allocation7 + $0x78] sm:$0xf]
        %v622 = vld [vmem:[#allocation7 + $0x7c] sm:$0xf]
        %v639 = vunpack.c.l.b16 %v607
        %v640 = vunpack.c.l.b16 %v608
        %v641 = vunpack.c.l.b16 %v609
        %v642 = vunpack.c.l.b16 %v610
        %v643 = vunpack.c.l.b16 %v611
        %v644 = vunpack.c.l.b16 %v612
        %v645 = vunpack.c.l.b16 %v613
        %v646 = vunpack.c.l.b16 %v614
        %v647 = vunpack.c.l.b16 %v615
        %v648 = vunpack.c.l.b16 %v616
        %v649 = vunpack.c.l.b16 %v617
        %v650 = vunpack.c.l.b16 %v618
        %v651 = vunpack.c.l.b16 %v619
        %v652 = vunpack.c.l.b16 %v620
        %v653 = vunpack.c.l.b16 %v621
        %v654 = vunpack.c.l.b16 %v622
        %v655 = vpack.c.b16 %v640, %v639
        %v656 = vpack.c.b16 %v642, %v641
        %v657 = vpack.c.b16 %v644, %v643
        %v658 = vpack.c.b16 %v646, %v645
        %v659 = vpack.c.b16 %v648, %v647
        %v660 = vpack.c.b16 %v650, %v649
        %v661 = vpack.c.b16 %v652, %v651
        %v662 = vpack.c.b16 %v654, %v653
        %671 = vmatprep.subr.bf16.mxu0 0
        %672 = vmatpush1.bf16.msra.mxu0 %v655
        %673 = vmatprep.subr.bf16.mxu0 0
        %674 = vmatpush1.bf16.msra.mxu0 %v656
        %675 = vmatprep.subr.bf16.mxu0 0
        %676 = vmatpush1.bf16.msra.mxu0 %v657
        %677 = vmatprep.subr.bf16.mxu0 0
        %678 = vmatpush1.bf16.msra.mxu0 %v658
        %679 = vmatprep.subr.bf16.mxu0 0
        %680 = vmatpush1.bf16.msra.mxu0 %v659
        %681 = vmatprep.subr.bf16.mxu0 0
        %682 = vmatpush1.bf16.msra.mxu0 %v660
        %683 = vmatprep.subr.bf16.mxu0 0
        %684 = vmatpush1.bf16.msra.mxu0 %v661
        %685 = vmatprep.subr.bf16.mxu0 0
        %686 = vmatpush1.bf16.msra.mxu0 %v662
        %687 = vmatprep.subr.bf16.mxu0 0
        %688 = vmatpush1.bf16.msra.mxu0 0
        %689 = vmatprep.subr.bf16.mxu0 0
        %690 = vmatpush1.bf16.msra.mxu0 0
        %691 = vmatprep.subr.bf16.mxu0 0
        %692 = vmatpush1.bf16.msra.mxu0 0
        %693 = vmatprep.subr.bf16.mxu0 0
        %694 = vmatpush1.bf16.msra.mxu0 0
        %695 = vmatprep.subr.bf16.mxu0 0
        %696 = vmatpush1.bf16.msra.mxu0 0
        %697 = vmatprep.subr.bf16.mxu0 0
        %698 = vmatpush1.bf16.msra.mxu0 0
        %699 = vmatprep.subr.bf16.mxu0 0
        %700 = vmatpush1.bf16.msra.mxu0 0
        %701 = vmatprep.subr.bf16.mxu0 0
        %702 = vmatpush1.bf16.msra.mxu0 0
        %703 = vmatprep.mubr.bf16.mxu0 0
        %704 = vmatmul.mubr.bf16.gmra.mrb[0].mxu0 %v603
        %v705 = vpop.f32.mrb[0].mxu0
        %v706 = vadd.f32 0.0, %v705
        %v707 = vpop.f32.mrb[0].mxu0
        %v708 = vpop.f32.mrb[0].mxu0
        %v709 = vadd.f32 0.0, %v708
        %v710 = vpop.f32.mrb[0].mxu0
        %711 = vmatprep.mubr.bf16.mxu0 0
        %712 = vmatmul.mubr.bf16.gmra.mrb[0].mxu0 %v604
        %v713 = vpop.f32.mrb[0].mxu0
        %v714 = vadd.f32 0.0, %v713
        %v715 = vpop.f32.mrb[0].mxu0
        %v716 = vpop.f32.mrb[0].mxu0
        %v717 = vadd.f32 0.0, %v716
        %v718 = vpop.f32.mrb[0].mxu0
        %719 = vmatprep.mubr.bf16.mxu0 0
        %720 = vmatmul.mubr.bf16.gmra.mrb[0].mxu0 %v605
        %v721 = vpop.f32.mrb[0].mxu0
        %v722 = vadd.f32 0.0, %v721
        %v723 = vpop.f32.mrb[0].mxu0
        %v724 = vpop.f32.mrb[0].mxu0
        %v725 = vadd.f32 0.0, %v724
        %v726 = vpop.f32.mrb[0].mxu0
        %727 = vmatprep.mubr.bf16.mxu0 0
        %728 = vmatmul.mubr.bf16.gmra.mrb[0].mxu0 %v606
        %v729 = vpop.f32.mrb[0].mxu0
        %v730 = vadd.f32 0.0, %v729
        %v731 = vpop.f32.mrb[0].mxu0
        %v732 = vpop.f32.mrb[0].mxu0
        %v733 = vadd.f32 0.0, %v732
        %v734 = vpop.f32.mrb[0].mxu0
        %735 = vdwg.mxu0
        %v752 = vunpack.c.l.b16 %v571
        %v753 = vunpack.c.l.b16 %v572
        %v754 = vunpack.c.l.b16 %v573
        %v755 = vunpack.c.l.b16 %v574
        %v756 = vunpack.c.l.b16 %v575
        %v757 = vunpack.c.l.b16 %v576
        %v758 = vunpack.c.l.b16 %v577
        %v759 = vunpack.c.l.b16 %v578
        %v760 = vunpack.c.l.b16 %v579
        %v761 = vunpack.c.l.b16 %v580
        %v762 = vunpack.c.l.b16 %v581
        %v763 = vunpack.c.l.b16 %v582
        %v764 = vunpack.c.l.b16 %v583
        %v765 = vunpack.c.l.b16 %v584
        %v766 = vunpack.c.l.b16 %v585
        %v767 = vunpack.c.l.b16 %v586
        %v768 = vpack.c.b16 %v753, %v752
        %v769 = vpack.c.b16 %v755, %v754
        %v770 = vpack.c.b16 %v757, %v756
        %v771 = vpack.c.b16 %v759, %v758
        %v772 = vpack.c.b16 %v761, %v760
        %v773 = vpack.c.b16 %v763, %v762
        %v774 = vpack.c.b16 %v765, %v764
        %v775 = vpack.c.b16 %v767, %v766
        %784 = vmatprep.subr.bf16.mxu0 0
        %785 = vmatpush1.bf16.msra.mxu0 %v768
        %786 = vmatprep.subr.bf16.mxu0 0
        %787 = vmatpush1.bf16.msra.mxu0 %v769
        %788 = vmatprep.subr.bf16.mxu0 0
        %789 = vmatpush1.bf16.msra.mxu0 %v770
        %790 = vmatprep.subr.bf16.mxu0 0
        %791 = vmatpush1.bf16.msra.mxu0 %v771
        %792 = vmatprep.subr.bf16.mxu0 0
        %793 = vmatpush1.bf16.msra.mxu0 %v772
        %794 = vmatprep.subr.bf16.mxu0 0
        %795 = vmatpush1.bf16.msra.mxu0 %v773
        %796 = vmatprep.subr.bf16.mxu0 0
        %797 = vmatpush1.bf16.msra.mxu0 %v774
        %798 = vmatprep.subr.bf16.mxu0 0
        %799 = vmatpush1.bf16.msra.mxu0 %v775
        %800 = vmatprep.subr.bf16.mxu0 0
        %801 = vmatpush1.bf16.msra.mxu0 0
        %802 = vmatprep.subr.bf16.mxu0 0
        %803 = vmatpush1.bf16.msra.mxu0 0
        %804 = vmatprep.subr.bf16.mxu0 0
        %805 = vmatpush1.bf16.msra.mxu0 0
        %806 = vmatprep.subr.bf16.mxu0 0
        %807 = vmatpush1.bf16.msra.mxu0 0
        %808 = vmatprep.subr.bf16.mxu0 0
        %809 = vmatpush1.bf16.msra.mxu0 0
        %810 = vmatprep.subr.bf16.mxu0 0
        %811 = vmatpush1.bf16.msra.mxu0 0
        %812 = vmatprep.subr.bf16.mxu0 0
        %813 = vmatpush1.bf16.msra.mxu0 0
        %814 = vmatprep.subr.bf16.mxu0 0
        %815 = vmatpush1.bf16.msra.mxu0 0
        %816 = vmatprep.mubr.bf16.mxu0 0
        %817 = vmatmul.mubr.bf16.gmra.mrb[0].mxu0 %v567
        %v818 = vpop.f32.mrb[0].mxu0
        %v819 = vadd.f32 %v706, %v818
        %v820 = vpop.f32.mrb[0].mxu0
        %v821 = vpop.f32.mrb[0].mxu0
        %v822 = vadd.f32 %v709, %v821
        %v823 = vpop.f32.mrb[0].mxu0
        %824 = vmatprep.mubr.bf16.mxu0 0
        %825 = vmatmul.mubr.bf16.gmra.mrb[0].mxu0 %v568
        %v826 = vpop.f32.mrb[0].mxu0
        %v827 = vadd.f32 %v714, %v826
        %v828 = vpop.f32.mrb[0].mxu0
        %v829 = vpop.f32.mrb[0].mxu0
        %v830 = vadd.f32 %v717, %v829
        %v831 = vpop.f32.mrb[0].mxu0
        %832 = vmatprep.mubr.bf16.mxu0 0
        %833 = vmatmul.mubr.bf16.gmra.mrb[0].mxu0 %v569
        %v834 = vpop.f32.mrb[0].mxu0
        %v835 = vadd.f32 %v722, %v834
        %v836 = vpop.f32.mrb[0].mxu0
        %v837 = vpop.f32.mrb[0].mxu0
        %v838 = vadd.f32 %v725, %v837
        %v839 = vpop.f32.mrb[0].mxu0
        %840 = vmatprep.mubr.bf16.mxu0 0
        %841 = vmatmul.mubr.bf16.gmra.mrb[0].mxu0 %v570
        %v842 = vpop.f32.mrb[0].mxu0
        %v843 = vadd.f32 %v730, %v842
        %v844 = vpop.f32.mrb[0].mxu0
        %v845 = vpop.f32.mrb[0].mxu0
        %v846 = vadd.f32 %v733, %v845
        %v847 = vpop.f32.mrb[0].mxu0
        %848 = vdwg.mxu0
        %s849 = scalar_lea.vmem [#allocation2], 2
        %v850 = vld [vmem:[%s849] ss:$2 sm:$0xff]
        %s851 = scalar_lea.vmem [#allocation2], 50
        %v852 = vld [vmem:[%s851] ss:$2 sm:$0xff]
        %s853 = scalar_lea.vmem [#allocation2], 98
        %v854 = vld [vmem:[%s853] ss:$2 sm:$0xff]
        %s855 = scalar_lea.vmem [#allocation2], 146
        %v856 = vld [vmem:[%s855] ss:$2 sm:$0xff]
        %s857 = scalar_lea.vmem [#allocation2], 194
        %v858 = vld [vmem:[%s857] ss:$2 sm:$0xff]
        %s859 = scalar_lea.vmem [#allocation2], 242
        %v860 = vld [vmem:[%s859] ss:$2 sm:$0xff]
        %s861 = scalar_lea.vmem [#allocation2], 290
        %v862 = vld [vmem:[%s861] ss:$2 sm:$0xff]
        %s863 = scalar_lea.vmem [#allocation2], 338
        %v864 = vld [vmem:[%s863] ss:$2 sm:$0xff]
        %v865 = vpack.c.bf16 %v852, %v850
        %v866 = vpack.c.bf16 %v856, %v854
        %v867 = vpack.c.bf16 %v860, %v858
        %v868 = vpack.c.bf16 %v864, %v862
        %v869 = vld [vmem:[#allocation7 + $0x80] sm:$0xf]
        %v870 = vld [vmem:[#allocation7 + $0x84] sm:$0xf]
        %v871 = vld [vmem:[#allocation7 + $0x88] sm:$0xf]
        %v872 = vld [vmem:[#allocation7 + $0x8c] sm:$0xf]
        %v873 = vld [vmem:[#allocation7 + $0x90] sm:$0xf]
        %v874 = vld [vmem:[#allocation7 + $0x94] sm:$0xf]
        %v875 = vld [vmem:[#allocation7 + $0x98] sm:$0xf]
        %v876 = vld [vmem:[#allocation7 + $0x9c] sm:$0xf]
        %v877 = vld [vmem:[#allocation7 + $0xa0] sm:$0xf]
        %v878 = vld [vmem:[#allocation7 + $0xa4] sm:$0xf]
        %v879 = vld [vmem:[#allocation7 + $0xa8] sm:$0xf]
        %v880 = vld [vmem:[#allocation7 + $0xac] sm:$0xf]
        %v881 = vld [vmem:[#allocation7 + $0xb0] sm:$0xf]
        %v882 = vld [vmem:[#allocation7 + $0xb4] sm:$0xf]
        %v883 = vld [vmem:[#allocation7 + $0xb8] sm:$0xf]
        %v884 = vld [vmem:[#allocation7 + $0xbc] sm:$0xf]
        %v901 = vunpack.c.l.b16 %v869
        %v902 = vunpack.c.l.b16 %v870
        %v903 = vunpack.c.l.b16 %v871
        %v904 = vunpack.c.l.b16 %v872
        %v905 = vunpack.c.l.b16 %v873
        %v906 = vunpack.c.l.b16 %v874
        %v907 = vunpack.c.l.b16 %v875
        %v908 = vunpack.c.l.b16 %v876
        %v909 = vunpack.c.l.b16 %v877
        %v910 = vunpack.c.l.b16 %v878
        %v911 = vunpack.c.l.b16 %v879
        %v912 = vunpack.c.l.b16 %v880
        %v913 = vunpack.c.l.b16 %v881
        %v914 = vunpack.c.l.b16 %v882
        %v915 = vunpack.c.l.b16 %v883
        %v916 = vunpack.c.l.b16 %v884
        %v917 = vpack.c.b16 %v902, %v901
        %v918 = vpack.c.b16 %v904, %v903
        %v919 = vpack.c.b16 %v906, %v905
        %v920 = vpack.c.b16 %v908, %v907
        %v921 = vpack.c.b16 %v910, %v909
        %v922 = vpack.c.b16 %v912, %v911
        %v923 = vpack.c.b16 %v914, %v913
        %v924 = vpack.c.b16 %v916, %v915
        %933 = vmatprep.subr.bf16.mxu0 0
        %934 = vmatpush1.bf16.msra.mxu0 %v917
        %935 = vmatprep.subr.bf16.mxu0 0
        %936 = vmatpush1.bf16.msra.mxu0 %v918
        %937 = vmatprep.subr.bf16.mxu0 0
        %938 = vmatpush1.bf16.msra.mxu0 %v919
        %939 = vmatprep.subr.bf16.mxu0 0
        %940 = vmatpush1.bf16.msra.mxu0 %v920
        %941 = vmatprep.subr.bf16.mxu0 0
        %942 = vmatpush1.bf16.msra.mxu0 %v921
        %943 = vmatprep.subr.bf16.mxu0 0
        %944 = vmatpush1.bf16.msra.mxu0 %v922
        %945 = vmatprep.subr.bf16.mxu0 0
        %946 = vmatpush1.bf16.msra.mxu0 %v923
        %947 = vmatprep.subr.bf16.mxu0 0
        %948 = vmatpush1.bf16.msra.mxu0 %v924
        %949 = vmatprep.subr.bf16.mxu0 0
        %950 = vmatpush1.bf16.msra.mxu0 0
        %951 = vmatprep.subr.bf16.mxu0 0
        %952 = vmatpush1.bf16.msra.mxu0 0
        %953 = vmatprep.subr.bf16.mxu0 0
        %954 = vmatpush1.bf16.msra.mxu0 0
        %955 = vmatprep.subr.bf16.mxu0 0
        %956 = vmatpush1.bf16.msra.mxu0 0
        %957 = vmatprep.subr.bf16.mxu0 0
        %958 = vmatpush1.bf16.msra.mxu0 0
        %959 = vmatprep.subr.bf16.mxu0 0
        %960 = vmatpush1.bf16.msra.mxu0 0
        %961 = vmatprep.subr.bf16.mxu0 0
        %962 = vmatpush1.bf16.msra.mxu0 0
        %963 = vmatprep.subr.bf16.mxu0 0
        %964 = vmatpush1.bf16.msra.mxu0 0
        %965 = vmatprep.mubr.bf16.mxu0 0
        %966 = vmatmul.mubr.bf16.gmra.mrb[0].mxu0 %v865
        %v967 = vpop.f32.mrb[0].mxu0
        %v968 = vadd.f32 0.0, %v967
        %v969 = vpop.f32.mrb[0].mxu0
        %v970 = vpop.f32.mrb[0].mxu0
        %v971 = vadd.f32 0.0, %v970
        %v972 = vpop.f32.mrb[0].mxu0
        %973 = vmatprep.mubr.bf16.mxu0 0
        %974 = vmatmul.mubr.bf16.gmra.mrb[0].mxu0 %v866
        %v975 = vpop.f32.mrb[0].mxu0
        %v976 = vadd.f32 0.0, %v975
        %v977 = vpop.f32.mrb[0].mxu0
        %v978 = vpop.f32.mrb[0].mxu0
        %v979 = vadd.f32 0.0, %v978
        %v980 = vpop.f32.mrb[0].mxu0
        %981 = vmatprep.mubr.bf16.mxu0 0
        %982 = vmatmul.mubr.bf16.gmra.mrb[0].mxu0 %v867
        %v983 = vpop.f32.mrb[0].mxu0
        %v984 = vadd.f32 0.0, %v983
        %v985 = vpop.f32.mrb[0].mxu0
        %v986 = vpop.f32.mrb[0].mxu0
        %v987 = vadd.f32 0.0, %v986
        %v988 = vpop.f32.mrb[0].mxu0
        %989 = vmatprep.mubr.bf16.mxu0 0
        %990 = vmatmul.mubr.bf16.gmra.mrb[0].mxu0 %v868
        %v991 = vpop.f32.mrb[0].mxu0
        %v992 = vadd.f32 0.0, %v991
        %v993 = vpop.f32.mrb[0].mxu0
        %v994 = vpop.f32.mrb[0].mxu0
        %v995 = vadd.f32 0.0, %v994
        %v996 = vpop.f32.mrb[0].mxu0
        %997 = vdwg.mxu0
        %v998 = vadd.f32 %v819, %v968
        %v999 = vadd.f32 %v822, %v971
        %v1000 = vadd.f32 %v827, %v976
        %v1001 = vadd.f32 %v830, %v979
        %v1002 = vadd.f32 %v835, %v984
        %v1003 = vadd.f32 %v838, %v987
        %v1004 = vadd.f32 %v843, %v992
        %v1005 = vadd.f32 %v846, %v995
        %v1006 = vld [vmem:[%s519] ss:$2 sm:$0xff]
        %s1007 = scalar_lea.vmem %s519, 48 [#allocation2]
        %v1008 = vld [vmem:[%s1007] ss:$2 sm:$0xff]
        %s1009 = scalar_lea.vmem %s519, 96 [#allocation2]
        %v1010 = vld [vmem:[%s1009] ss:$2 sm:$0xff]
        %s1011 = scalar_lea.vmem %s519, 144 [#allocation2]
        %v1012 = vld [vmem:[%s1011] ss:$2 sm:$0xff]
        %s1013 = scalar_lea.vmem %s519, 192 [#allocation2]
        %v1014 = vld [vmem:[%s1013] ss:$2 sm:$0xff]
        %s1015 = scalar_lea.vmem %s519, 240 [#allocation2]
        %v1016 = vld [vmem:[%s1015] ss:$2 sm:$0xff]
        %s1017 = scalar_lea.vmem %s519, 288 [#allocation2]
        %v1018 = vld [vmem:[%s1017] ss:$2 sm:$0xff]
        %s1019 = scalar_lea.vmem %s519, 336 [#allocation2]
        %v1020 = vld [vmem:[%s1019] ss:$2 sm:$0xff]
        %v1021 = vpack.c.bf16 %v1008, %v1006
        %v1022 = vpack.c.bf16 %v1012, %v1010
        %v1023 = vpack.c.bf16 %v1016, %v1014
        %v1024 = vpack.c.bf16 %v1020, %v1018
        %v1025 = vld [vmem:[#allocation7 + $0xc0] sm:$0xf]
        %v1026 = vld [vmem:[#allocation7 + $0xc4] sm:$0xf]
        %v1027 = vld [vmem:[#allocation7 + $0xc8] sm:$0xf]
        %v1028 = vld [vmem:[#allocation7 + $0xcc] sm:$0xf]
        %v1029 = vld [vmem:[#allocation7 + $0xd0] sm:$0xf]
        %v1030 = vld [vmem:[#allocation7 + $0xd4] sm:$0xf]
        %v1031 = vld [vmem:[#allocation7 + $0xd8] sm:$0xf]
        %v1032 = vld [vmem:[#allocation7 + $0xdc] sm:$0xf]
        %v1033 = vld [vmem:[#allocation7 + $0xe0] sm:$0xf]
        %v1034 = vld [vmem:[#allocation7 + $0xe4] sm:$0xf]
        %v1035 = vld [vmem:[#allocation7 + $0xe8] sm:$0xf]
        %v1036 = vld [vmem:[#allocation7 + $0xec] sm:$0xf]
        %v1037 = vld [vmem:[#allocation7 + $0xf0] sm:$0xf]
        %v1038 = vld [vmem:[#allocation7 + $0xf4] sm:$0xf]
        %v1039 = vld [vmem:[#allocation7 + $0xf8] sm:$0xf]
        %v1040 = vld [vmem:[#allocation7 + $0xfc] sm:$0xf]
        %v1057 = vunpack.c.l.b16 %v1025
        %v1058 = vunpack.c.l.b16 %v1026
        %v1059 = vunpack.c.l.b16 %v1027
        %v1060 = vunpack.c.l.b16 %v1028
        %v1061 = vunpack.c.l.b16 %v1029
        %v1062 = vunpack.c.l.b16 %v1030
        %v1063 = vunpack.c.l.b16 %v1031
        %v1064 = vunpack.c.l.b16 %v1032
        %v1065 = vunpack.c.l.b16 %v1033
        %v1066 = vunpack.c.l.b16 %v1034
        %v1067 = vunpack.c.l.b16 %v1035
        %v1068 = vunpack.c.l.b16 %v1036
        %v1069 = vunpack.c.l.b16 %v1037
        %v1070 = vunpack.c.l.b16 %v1038
        %v1071 = vunpack.c.l.b16 %v1039
        %v1072 = vunpack.c.l.b16 %v1040
        %v1073 = vpack.c.b16 %v1058, %v1057
        %v1074 = vpack.c.b16 %v1060, %v1059
        %v1075 = vpack.c.b16 %v1062, %v1061
        %v1076 = vpack.c.b16 %v1064, %v1063
        %v1077 = vpack.c.b16 %v1066, %v1065
        %v1078 = vpack.c.b16 %v1068, %v1067
        %v1079 = vpack.c.b16 %v1070, %v1069
        %v1080 = vpack.c.b16 %v1072, %v1071
        %1089 = vmatprep.subr.bf16.mxu0 0
        %1090 = vmatpush1.bf16.msra.mxu0 %v1073
        %1091 = vmatprep.subr.bf16.mxu0 0
        %1092 = vmatpush1.bf16.msra.mxu0 %v1074
        %1093 = vmatprep.subr.bf16.mxu0 0
        %1094 = vmatpush1.bf16.msra.mxu0 %v1075
        %1095 = vmatprep.subr.bf16.mxu0 0
        %1096 = vmatpush1.bf16.msra.mxu0 %v1076
        %1097 = vmatprep.subr.bf16.mxu0 0
        %1098 = vmatpush1.bf16.msra.mxu0 %v1077
        %1099 = vmatprep.subr.bf16.mxu0 0
        %1100 = vmatpush1.bf16.msra.mxu0 %v1078
        %1101 = vmatprep.subr.bf16.mxu0 0
        %1102 = vmatpush1.bf16.msra.mxu0 %v1079
        %1103 = vmatprep.subr.bf16.mxu0 0
        %1104 = vmatpush1.bf16.msra.mxu0 %v1080
        %1105 = vmatprep.subr.bf16.mxu0 0
        %1106 = vmatpush1.bf16.msra.mxu0 0
        %1107 = vmatprep.subr.bf16.mxu0 0
        %1108 = vmatpush1.bf16.msra.mxu0 0
        %1109 = vmatprep.subr.bf16.mxu0 0
        %1110 = vmatpush1.bf16.msra.mxu0 0
        %1111 = vmatprep.subr.bf16.mxu0 0
        %1112 = vmatpush1.bf16.msra.mxu0 0
        %1113 = vmatprep.subr.bf16.mxu0 0
        %1114 = vmatpush1.bf16.msra.mxu0 0
        %1115 = vmatprep.subr.bf16.mxu0 0
        %1116 = vmatpush1.bf16.msra.mxu0 0
        %1117 = vmatprep.subr.bf16.mxu0 0
        %1118 = vmatpush1.bf16.msra.mxu0 0
        %1119 = vmatprep.subr.bf16.mxu0 0
        %1120 = vmatpush1.bf16.msra.mxu0 0
        %1121 = vmatprep.mubr.bf16.mxu0 0
        %1122 = vmatmul.mubr.bf16.gmra.mrb[0].mxu0 %v1021
        %v1123 = vpop.f32.mrb[0].mxu0
        %v1124 = vadd.f32 0.0, %v1123
        %v1125 = vpop.f32.mrb[0].mxu0
        %v1126 = vpop.f32.mrb[0].mxu0
        %v1127 = vadd.f32 0.0, %v1126
        %v1128 = vpop.f32.mrb[0].mxu0
        %1129 = vmatprep.mubr.bf16.mxu0 0
        %1130 = vmatmul.mubr.bf16.gmra.mrb[0].mxu0 %v1022
        %v1131 = vpop.f32.mrb[0].mxu0
        %v1132 = vadd.f32 0.0, %v1131
        %v1133 = vpop.f32.mrb[0].mxu0
        %v1134 = vpop.f32.mrb[0].mxu0
        %v1135 = vadd.f32 0.0, %v1134
        %v1136 = vpop.f32.mrb[0].mxu0
        %1137 = vmatprep.mubr.bf16.mxu0 0
        %1138 = vmatmul.mubr.bf16.gmra.mrb[0].mxu0 %v1023
        %v1139 = vpop.f32.mrb[0].mxu0
        %v1140 = vadd.f32 0.0, %v1139
        %v1141 = vpop.f32.mrb[0].mxu0
        %v1142 = vpop.f32.mrb[0].mxu0
        %v1143 = vadd.f32 0.0, %v1142
        %v1144 = vpop.f32.mrb[0].mxu0
        %1145 = vmatprep.mubr.bf16.mxu0 0
        %1146 = vmatmul.mubr.bf16.gmra.mrb[0].mxu0 %v1024
        %v1147 = vpop.f32.mrb[0].mxu0
        %v1148 = vadd.f32 0.0, %v1147
        %v1149 = vpop.f32.mrb[0].mxu0
        %v1150 = vpop.f32.mrb[0].mxu0
        %v1151 = vadd.f32 0.0, %v1150
        %v1152 = vpop.f32.mrb[0].mxu0
        %1153 = vdwg.mxu0
        %v1154 = vadd.f32 %v998, %v1124
        %v1155 = vadd.f32 %v999, %v1127
        %v1156 = vadd.f32 %v1000, %v1132
        %v1157 = vadd.f32 %v1001, %v1135
        %v1158 = vadd.f32 %v1002, %v1140
        %v1159 = vadd.f32 %v1003, %v1143
        %v1160 = vadd.f32 %v1004, %v1148
        %v1161 = vadd.f32 %v1005, %v1151
        %s1162 = scalar_lea.vmem %s519, 1 [#allocation2]
        %v1163 = vld [vmem:[%s1162] ss:$2 sm:$0xff]
        %s1164 = scalar_lea.vmem %s519, 49 [#allocation2]
        %v1165 = vld [vmem:[%s1164] ss:$2 sm:$0xff]
        %s1166 = scalar_lea.vmem %s519, 97 [#allocation2]
        %v1167 = vld [vmem:[%s1166] ss:$2 sm:$0xff]
        %s1168 = scalar_lea.vmem %s519, 145 [#allocation2]
        %v1169 = vld [vmem:[%s1168] ss:$2 sm:$0xff]
        %s1170 = scalar_lea.vmem %s519, 193 [#allocation2]
        %v1171 = vld [vmem:[%s1170] ss:$2 sm:$0xff]
        %s1172 = scalar_lea.vmem %s519, 241 [#allocation2]
        %v1173 = vld [vmem:[%s1172] ss:$2 sm:$0xff]
        %s1174 = scalar_lea.vmem %s519, 289 [#allocation2]
        %v1175 = vld [vmem:[%s1174] ss:$2 sm:$0xff]
        %s1176 = scalar_lea.vmem %s519, 337 [#allocation2]
        %v1177 = vld [vmem:[%s1176] ss:$2 sm:$0xff]
        %v1178 = vpack.c.bf16 %v1165, %v1163
        %v1179 = vpack.c.bf16 %v1169, %v1167
        %v1180 = vpack.c.bf16 %v1173, %v1171
        %v1181 = vpack.c.bf16 %v1177, %v1175
        %v1182 = vld [vmem:[#allocation7 + $0x100] sm:$0xf]
        %v1183 = vld [vmem:[#allocation7 + $0x104] sm:$0xf]
        %v1184 = vld [vmem:[#allocation7 + $0x108] sm:$0xf]
        %v1185 = vld [vmem:[#allocation7 + $0x10c] sm:$0xf]
        %v1186 = vld [vmem:[#allocation7 + $0x110] sm:$0xf]
        %v1187 = vld [vmem:[#allocation7 + $0x114] sm:$0xf]
        %v1188 = vld [vmem:[#allocation7 + $0x118] sm:$0xf]
        %v1189 = vld [vmem:[#allocation7 + $0x11c] sm:$0xf]
        %v1190 = vld [vmem:[#allocation7 + $0x120] sm:$0xf]
        %v1191 = vld [vmem:[#allocation7 + $0x124] sm:$0xf]
        %v1192 = vld [vmem:[#allocation7 + $0x128] sm:$0xf]
        %v1193 = vld [vmem:[#allocation7 + $0x12c] sm:$0xf]
        %v1194 = vld [vmem:[#allocation7 + $0x130] sm:$0xf]
        %v1195 = vld [vmem:[#allocation7 + $0x134] sm:$0xf]
        %v1196 = vld [vmem:[#allocation7 + $0x138] sm:$0xf]
        %v1197 = vld [vmem:[#allocation7 + $0x13c] sm:$0xf]
        %v1214 = vunpack.c.l.b16 %v1182
        %v1215 = vunpack.c.l.b16 %v1183
        %v1216 = vunpack.c.l.b16 %v1184
        %v1217 = vunpack.c.l.b16 %v1185
        %v1218 = vunpack.c.l.b16 %v1186
        %v1219 = vunpack.c.l.b16 %v1187
        %v1220 = vunpack.c.l.b16 %v1188
        %v1221 = vunpack.c.l.b16 %v1189
        %v1222 = vunpack.c.l.b16 %v1190
        %v1223 = vunpack.c.l.b16 %v1191
        %v1224 = vunpack.c.l.b16 %v1192
        %v1225 = vunpack.c.l.b16 %v1193
        %v1226 = vunpack.c.l.b16 %v1194
        %v1227 = vunpack.c.l.b16 %v1195
        %v1228 = vunpack.c.l.b16 %v1196
        %v1229 = vunpack.c.l.b16 %v1197
        %v1230 = vpack.c.b16 %v1215, %v1214
        %v1231 = vpack.c.b16 %v1217, %v1216
        %v1232 = vpack.c.b16 %v1219, %v1218
        %v1233 = vpack.c.b16 %v1221, %v1220
        %v1234 = vpack.c.b16 %v1223, %v1222
        %v1235 = vpack.c.b16 %v1225, %v1224
        %v1236 = vpack.c.b16 %v1227, %v1226
        %v1237 = vpack.c.b16 %v1229, %v1228
        %1246 = vmatprep.subr.bf16.mxu0 0
        %1247 = vmatpush1.bf16.msra.mxu0 %v1230
        %1248 = vmatprep.subr.bf16.mxu0 0
        %1249 = vmatpush1.bf16.msra.mxu0 %v1231
        %1250 = vmatprep.subr.bf16.mxu0 0
        %1251 = vmatpush1.bf16.msra.mxu0 %v1232
        %1252 = vmatprep.subr.bf16.mxu0 0
        %1253 = vmatpush1.bf16.msra.mxu0 %v1233
        %1254 = vmatprep.subr.bf16.mxu0 0
        %1255 = vmatpush1.bf16.msra.mxu0 %v1234
        %1256 = vmatprep.subr.bf16.mxu0 0
        %1257 = vmatpush1.bf16.msra.mxu0 %v1235
        %1258 = vmatprep.subr.bf16.mxu0 0
        %1259 = vmatpush1.bf16.msra.mxu0 %v1236
        %1260 = vmatprep.subr.bf16.mxu0 0
        %1261 = vmatpush1.bf16.msra.mxu0 %v1237
        %1262 = vmatprep.subr.bf16.mxu0 0
        %1263 = vmatpush1.bf16.msra.mxu0 0
        %1264 = vmatprep.subr.bf16.mxu0 0
        %1265 = vmatpush1.bf16.msra.mxu0 0
        %1266 = vmatprep.subr.bf16.mxu0 0
        %1267 = vmatpush1.bf16.msra.mxu0 0
        %1268 = vmatprep.subr.bf16.mxu0 0
        %1269 = vmatpush1.bf16.msra.mxu0 0
        %1270 = vmatprep.subr.bf16.mxu0 0
        %1271 = vmatpush1.bf16.msra.mxu0 0
        %1272 = vmatprep.subr.bf16.mxu0 0
        %1273 = vmatpush1.bf16.msra.mxu0 0
        %1274 = vmatprep.subr.bf16.mxu0 0
        %1275 = vmatpush1.bf16.msra.mxu0 0
        %1276 = vmatprep.subr.bf16.mxu0 0
        %1277 = vmatpush1.bf16.msra.mxu0 0
        %1278 = vmatprep.mubr.bf16.mxu0 0
        %1279 = vmatmul.mubr.bf16.gmra.mrb[0].mxu0 %v1178
        %v1280 = vpop.f32.mrb[0].mxu0
        %v1281 = vadd.f32 0.0, %v1280
        %v1282 = vpop.f32.mrb[0].mxu0
        %v1283 = vpop.f32.mrb[0].mxu0
        %v1284 = vadd.f32 0.0, %v1283
        %v1285 = vpop.f32.mrb[0].mxu0
        %1286 = vmatprep.mubr.bf16.mxu0 0
        %1287 = vmatmul.mubr.bf16.gmra.mrb[0].mxu0 %v1179
        %v1288 = vpop.f32.mrb[0].mxu0
        %v1289 = vadd.f32 0.0, %v1288
        %v1290 = vpop.f32.mrb[0].mxu0
        %v1291 = vpop.f32.mrb[0].mxu0
        %v1292 = vadd.f32 0.0, %v1291
        %v1293 = vpop.f32.mrb[0].mxu0
        %1294 = vmatprep.mubr.bf16.mxu0 0
        %1295 = vmatmul.mubr.bf16.gmra.mrb[0].mxu0 %v1180
        %v1296 = vpop.f32.mrb[0].mxu0
        %v1297 = vadd.f32 0.0, %v1296
        %v1298 = vpop.f32.mrb[0].mxu0
        %v1299 = vpop.f32.mrb[0].mxu0
        %v1300 = vadd.f32 0.0, %v1299
        %v1301 = vpop.f32.mrb[0].mxu0
        %1302 = vmatprep.mubr.bf16.mxu0 0
        %1303 = vmatmul.mubr.bf16.gmra.mrb[0].mxu0 %v1181
        %v1304 = vpop.f32.mrb[0].mxu0
        %v1305 = vadd.f32 0.0, %v1304
        %v1306 = vpop.f32.mrb[0].mxu0
        %v1307 = vpop.f32.mrb[0].mxu0
        %v1308 = vadd.f32 0.0, %v1307
        %v1309 = vpop.f32.mrb[0].mxu0
        %1310 = vdwg.mxu0
        %v1311 = vadd.f32 %v1154, %v1281
        %v1312 = vadd.f32 %v1155, %v1284
        %v1313 = vadd.f32 %v1156, %v1289
        %v1314 = vadd.f32 %v1157, %v1292
        %v1315 = vadd.f32 %v1158, %v1297
        %v1316 = vadd.f32 %v1159, %v1300
        %v1317 = vadd.f32 %v1160, %v1305
        %v1318 = vadd.f32 %v1161, %v1308
        %s1319 = scalar_lea.vmem %s519, 2 [#allocation2]
        %v1320 = vld [vmem:[%s1319] ss:$2 sm:$0xff]
        %s1321 = scalar_lea.vmem %s519, 50 [#allocation2]
        %v1322 = vld [vmem:[%s1321] ss:$2 sm:$0xff]
        %s1323 = scalar_lea.vmem %s519, 98 [#allocation2]
        %v1324 = vld [vmem:[%s1323] ss:$2 sm:$0xff]
        %s1325 = scalar_lea.vmem %s519, 146 [#allocation2]
        %v1326 = vld [vmem:[%s1325] ss:$2 sm:$0xff]
        %s1327 = scalar_lea.vmem %s519, 194 [#allocation2]
        %v1328 = vld [vmem:[%s1327] ss:$2 sm:$0xff]
        %s1329 = scalar_lea.vmem %s519, 242 [#allocation2]
        %v1330 = vld [vmem:[%s1329] ss:$2 sm:$0xff]
        %s1331 = scalar_lea.vmem %s519, 290 [#allocation2]
        %v1332 = vld [vmem:[%s1331] ss:$2 sm:$0xff]
        %s1333 = scalar_lea.vmem %s519, 338 [#allocation2]
        %v1334 = vld [vmem:[%s1333] ss:$2 sm:$0xff]
        %v1335 = vpack.c.bf16 %v1322, %v1320
        %v1336 = vpack.c.bf16 %v1326, %v1324
        %v1337 = vpack.c.bf16 %v1330, %v1328
        %v1338 = vpack.c.bf16 %v1334, %v1332
        %v1339 = vld [vmem:[#allocation7 + $0x140] sm:$0xf]
        %v1340 = vld [vmem:[#allocation7 + $0x144] sm:$0xf]
        %v1341 = vld [vmem:[#allocation7 + $0x148] sm:$0xf]
        %v1342 = vld [vmem:[#allocation7 + $0x14c] sm:$0xf]
        %v1343 = vld [vmem:[#allocation7 + $0x150] sm:$0xf]
        %v1344 = vld [vmem:[#allocation7 + $0x154] sm:$0xf]
        %v1345 = vld [vmem:[#allocation7 + $0x158] sm:$0xf]
        %v1346 = vld [vmem:[#allocation7 + $0x15c] sm:$0xf]
        %v1347 = vld [vmem:[#allocation7 + $0x160] sm:$0xf]
        %v1348 = vld [vmem:[#allocation7 + $0x164] sm:$0xf]
        %v1349 = vld [vmem:[#allocation7 + $0x168] sm:$0xf]
        %v1350 = vld [vmem:[#allocation7 + $0x16c] sm:$0xf]
        %v1351 = vld [vmem:[#allocation7 + $0x170] sm:$0xf]
        %v1352 = vld [vmem:[#allocation7 + $0x174] sm:$0xf]
        %v1353 = vld [vmem:[#allocation7 + $0x178] sm:$0xf]
        %v1354 = vld [vmem:[#allocation7 + $0x17c] sm:$0xf]
        %v1371 = vunpack.c.l.b16 %v1339
        %v1372 = vunpack.c.l.b16 %v1340
        %v1373 = vunpack.c.l.b16 %v1341
        %v1374 = vunpack.c.l.b16 %v1342
        %v1375 = vunpack.c.l.b16 %v1343
        %v1376 = vunpack.c.l.b16 %v1344
        %v1377 = vunpack.c.l.b16 %v1345
        %v1378 = vunpack.c.l.b16 %v1346
        %v1379 = vunpack.c.l.b16 %v1347
        %v1380 = vunpack.c.l.b16 %v1348
        %v1381 = vunpack.c.l.b16 %v1349
        %v1382 = vunpack.c.l.b16 %v1350
        %v1383 = vunpack.c.l.b16 %v1351
        %v1384 = vunpack.c.l.b16 %v1352
        %v1385 = vunpack.c.l.b16 %v1353
        %v1386 = vunpack.c.l.b16 %v1354
        %v1387 = vpack.c.b16 %v1372, %v1371
        %v1388 = vpack.c.b16 %v1374, %v1373
        %v1389 = vpack.c.b16 %v1376, %v1375
        %v1390 = vpack.c.b16 %v1378, %v1377
        %v1391 = vpack.c.b16 %v1380, %v1379
        %v1392 = vpack.c.b16 %v1382, %v1381
        %v1393 = vpack.c.b16 %v1384, %v1383
        %v1394 = vpack.c.b16 %v1386, %v1385
        %1403 = vmatprep.subr.bf16.mxu0 0
        %1404 = vmatpush1.bf16.msra.mxu0 %v1387
        %1405 = vmatprep.subr.bf16.mxu0 0
        %1406 = vmatpush1.bf16.msra.mxu0 %v1388
        %1407 = vmatprep.subr.bf16.mxu0 0
        %1408 = vmatpush1.bf16.msra.mxu0 %v1389
        %1409 = vmatprep.subr.bf16.mxu0 0
        %1410 = vmatpush1.bf16.msra.mxu0 %v1390
        %1411 = vmatprep.subr.bf16.mxu0 0
        %1412 = vmatpush1.bf16.msra.mxu0 %v1391
        %1413 = vmatprep.subr.bf16.mxu0 0
        %1414 = vmatpush1.bf16.msra.mxu0 %v1392
        %1415 = vmatprep.subr.bf16.mxu0 0
        %1416 = vmatpush1.bf16.msra.mxu0 %v1393
        %1417 = vmatprep.subr.bf16.mxu0 0
        %1418 = vmatpush1.bf16.msra.mxu0 %v1394
        %1419 = vmatprep.subr.bf16.mxu0 0
        %1420 = vmatpush1.bf16.msra.mxu0 0
        %1421 = vmatprep.subr.bf16.mxu0 0
        %1422 = vmatpush1.bf16.msra.mxu0 0
        %1423 = vmatprep.subr.bf16.mxu0 0
        %1424 = vmatpush1.bf16.msra.mxu0 0
        %1425 = vmatprep.subr.bf16.mxu0 0
        %1426 = vmatpush1.bf16.msra.mxu0 0
        %1427 = vmatprep.subr.bf16.mxu0 0
        %1428 = vmatpush1.bf16.msra.mxu0 0
        %1429 = vmatprep.subr.bf16.mxu0 0
        %1430 = vmatpush1.bf16.msra.mxu0 0
        %1431 = vmatprep.subr.bf16.mxu0 0
        %1432 = vmatpush1.bf16.msra.mxu0 0
        %1433 = vmatprep.subr.bf16.mxu0 0
        %1434 = vmatpush1.bf16.msra.mxu0 0
        %1435 = vmatprep.mubr.bf16.mxu0 0
        %1436 = vmatmul.mubr.bf16.gmra.mrb[0].mxu0 %v1335
        %v1437 = vpop.f32.mrb[0].mxu0
        %v1438 = vadd.f32 0.0, %v1437
        %v1439 = vpop.f32.mrb[0].mxu0
        %v1440 = vpop.f32.mrb[0].mxu0
        %v1441 = vadd.f32 0.0, %v1440
        %v1442 = vpop.f32.mrb[0].mxu0
        %1443 = vmatprep.mubr.bf16.mxu0 0
        %1444 = vmatmul.mubr.bf16.gmra.mrb[0].mxu0 %v1336
        %v1445 = vpop.f32.mrb[0].mxu0
        %v1446 = vadd.f32 0.0, %v1445
        %v1447 = vpop.f32.mrb[0].mxu0
        %v1448 = vpop.f32.mrb[0].mxu0
        %v1449 = vadd.f32 0.0, %v1448
        %v1450 = vpop.f32.mrb[0].mxu0
        %1451 = vmatprep.mubr.bf16.mxu0 0
        %1452 = vmatmul.mubr.bf16.gmra.mrb[0].mxu0 %v1337
        %v1453 = vpop.f32.mrb[0].mxu0
        %v1454 = vadd.f32 0.0, %v1453
        %v1455 = vpop.f32.mrb[0].mxu0
        %v1456 = vpop.f32.mrb[0].mxu0
        %v1457 = vadd.f32 0.0, %v1456
        %v1458 = vpop.f32.mrb[0].mxu0
        %1459 = vmatprep.mubr.bf16.mxu0 0
        %1460 = vmatmul.mubr.bf16.gmra.mrb[0].mxu0 %v1338
        %v1461 = vpop.f32.mrb[0].mxu0
        %v1462 = vadd.f32 0.0, %v1461
        %v1463 = vpop.f32.mrb[0].mxu0
        %v1464 = vpop.f32.mrb[0].mxu0
        %v1465 = vadd.f32 0.0, %v1464
        %v1466 = vpop.f32.mrb[0].mxu0
        %1467 = vdwg.mxu0
        %v1468 = vadd.f32 %v1311, %v1438
        %v1469 = vadd.f32 %v1312, %v1441
        %v1470 = vadd.f32 %v1313, %v1446
        %v1471 = vadd.f32 %v1314, %v1449
        %v1472 = vadd.f32 %v1315, %v1454
        %v1473 = vadd.f32 %v1316, %v1457
        %v1474 = vadd.f32 %v1317, %v1462
        %v1475 = vadd.f32 %v1318, %v1465
        %s1476 = scalar_lea.vmem [#allocation2], 48
        %v1477 = vld [vmem:[%s1476] ss:$2 sm:$0xff]
        %s1478 = scalar_lea.vmem %s1476, 48 [#allocation2]
        %v1479 = vld [vmem:[%s1478] ss:$2 sm:$0xff]
        %s1480 = scalar_lea.vmem %s1476, 96 [#allocation2]
        %v1481 = vld [vmem:[%s1480] ss:$2 sm:$0xff]
        %s1482 = scalar_lea.vmem %s1476, 144 [#allocation2]
        %v1483 = vld [vmem:[%s1482] ss:$2 sm:$0xff]
        %s1484 = scalar_lea.vmem %s1476, 192 [#allocation2]
        %v1485 = vld [vmem:[%s1484] ss:$2 sm:$0xff]
        %s1486 = scalar_lea.vmem %s1476, 240 [#allocation2]
        %v1487 = vld [vmem:[%s1486] ss:$2 sm:$0xff]
        %s1488 = scalar_lea.vmem %s1476, 288 [#allocation2]
        %v1489 = vld [vmem:[%s1488] ss:$2 sm:$0xff]
        %s1490 = scalar_lea.vmem %s1476, 336 [#allocation2]
        %v1491 = vld [vmem:[%s1490] ss:$2 sm:$0xff]
        %v1492 = vpack.c.bf16 %v1479, %v1477
        %v1493 = vpack.c.bf16 %v1483, %v1481
        %v1494 = vpack.c.bf16 %v1487, %v1485
        %v1495 = vpack.c.bf16 %v1491, %v1489
        %v1496 = vld [vmem:[#allocation7 + $0x180] sm:$0xf]
        %v1497 = vld [vmem:[#allocation7 + $0x184] sm:$0xf]
        %v1498 = vld [vmem:[#allocation7 + $0x188] sm:$0xf]
        %v1499 = vld [vmem:[#allocation7 + $0x18c] sm:$0xf]
        %v1500 = vld [vmem:[#allocation7 + $0x190] sm:$0xf]
        %v1501 = vld [vmem:[#allocation7 + $0x194] sm:$0xf]
        %v1502 = vld [vmem:[#allocation7 + $0x198] sm:$0xf]
        %v1503 = vld [vmem:[#allocation7 + $0x19c] sm:$0xf]
        %v1504 = vld [vmem:[#allocation7 + $0x1a0] sm:$0xf]
        %v1505 = vld [vmem:[#allocation7 + $0x1a4] sm:$0xf]
        %v1506 = vld [vmem:[#allocation7 + $0x1a8] sm:$0xf]
        %v1507 = vld [vmem:[#allocation7 + $0x1ac] sm:$0xf]
        %v1508 = vld [vmem:[#allocation7 + $0x1b0] sm:$0xf]
        %v1509 = vld [vmem:[#allocation7 + $0x1b4] sm:$0xf]
        %v1510 = vld [vmem:[#allocation7 + $0x1b8] sm:$0xf]
        %v1511 = vld [vmem:[#allocation7 + $0x1bc] sm:$0xf]
        %v1528 = vunpack.c.l.b16 %v1496
        %v1529 = vunpack.c.l.b16 %v1497
        %v1530 = vunpack.c.l.b16 %v1498
        %v1531 = vunpack.c.l.b16 %v1499
        %v1532 = vunpack.c.l.b16 %v1500
        %v1533 = vunpack.c.l.b16 %v1501
        %v1534 = vunpack.c.l.b16 %v1502
        %v1535 = vunpack.c.l.b16 %v1503
        %v1536 = vunpack.c.l.b16 %v1504
        %v1537 = vunpack.c.l.b16 %v1505
        %v1538 = vunpack.c.l.b16 %v1506
        %v1539 = vunpack.c.l.b16 %v1507
        %v1540 = vunpack.c.l.b16 %v1508
        %v1541 = vunpack.c.l.b16 %v1509
        %v1542 = vunpack.c.l.b16 %v1510
        %v1543 = vunpack.c.l.b16 %v1511
        %v1544 = vpack.c.b16 %v1529, %v1528
        %v1545 = vpack.c.b16 %v1531, %v1530
        %v1546 = vpack.c.b16 %v1533, %v1532
        %v1547 = vpack.c.b16 %v1535, %v1534
        %v1548 = vpack.c.b16 %v1537, %v1536
        %v1549 = vpack.c.b16 %v1539, %v1538
        %v1550 = vpack.c.b16 %v1541, %v1540
        %v1551 = vpack.c.b16 %v1543, %v1542
        %1560 = vmatprep.subr.bf16.mxu0 0
        %1561 = vmatpush1.bf16.msra.mxu0 %v1544
        %1562 = vmatprep.subr.bf16.mxu0 0
        %1563 = vmatpush1.bf16.msra.mxu0 %v1545
        %1564 = vmatprep.subr.bf16.mxu0 0
        %1565 = vmatpush1.bf16.msra.mxu0 %v1546
        %1566 = vmatprep.subr.bf16.mxu0 0
        %1567 = vmatpush1.bf16.msra.mxu0 %v1547
        %1568 = vmatprep.subr.bf16.mxu0 0
        %1569 = vmatpush1.bf16.msra.mxu0 %v1548
        %1570 = vmatprep.subr.bf16.mxu0 0
        %1571 = vmatpush1.bf16.msra.mxu0 %v1549
        %1572 = vmatprep.subr.bf16.mxu0 0
        %1573 = vmatpush1.bf16.msra.mxu0 %v1550
        %1574 = vmatprep.subr.bf16.mxu0 0
        %1575 = vmatpush1.bf16.msra.mxu0 %v1551
        %1576 = vmatprep.subr.bf16.mxu0 0
        %1577 = vmatpush1.bf16.msra.mxu0 0
        %1578 = vmatprep.subr.bf16.mxu0 0
        %1579 = vmatpush1.bf16.msra.mxu0 0
        %1580 = vmatprep.subr.bf16.mxu0 0
        %1581 = vmatpush1.bf16.msra.mxu0 0
        %1582 = vmatprep.subr.bf16.mxu0 0
        %1583 = vmatpush1.bf16.msra.mxu0 0
        %1584 = vmatprep.subr.bf16.mxu0 0
        %1585 = vmatpush1.bf16.msra.mxu0 0
        %1586 = vmatprep.subr.bf16.mxu0 0
        %1587 = vmatpush1.bf16.msra.mxu0 0
        %1588 = vmatprep.subr.bf16.mxu0 0
        %1589 = vmatpush1.bf16.msra.mxu0 0
        %1590 = vmatprep.subr.bf16.mxu0 0
        %1591 = vmatpush1.bf16.msra.mxu0 0
        %1592 = vmatprep.mubr.bf16.mxu0 0
        %1593 = vmatmul.mubr.bf16.gmra.mrb[0].mxu0 %v1492
        %v1594 = vpop.f32.mrb[0].mxu0
        %v1595 = vadd.f32 0.0, %v1594
        %v1596 = vpop.f32.mrb[0].mxu0
        %v1597 = vpop.f32.mrb[0].mxu0
        %v1598 = vadd.f32 0.0, %v1597
        %v1599 = vpop.f32.mrb[0].mxu0
        %1600 = vmatprep.mubr.bf16.mxu0 0
        %1601 = vmatmul.mubr.bf16.gmra.mrb[0].mxu0 %v1493
        %v1602 = vpop.f32.mrb[0].mxu0
        %v1603 = vadd.f32 0.0, %v1602
        %v1604 = vpop.f32.mrb[0].mxu0
        %v1605 = vpop.f32.mrb[0].mxu0
        %v1606 = vadd.f32 0.0, %v1605
        %v1607 = vpop.f32.mrb[0].mxu0
        %1608 = vmatprep.mubr.bf16.mxu0 0
        %1609 = vmatmul.mubr.bf16.gmra.mrb[0].mxu0 %v1494
        %v1610 = vpop.f32.mrb[0].mxu0
        %v1611 = vadd.f32 0.0, %v1610
        %v1612 = vpop.f32.mrb[0].mxu0
        %v1613 = vpop.f32.mrb[0].mxu0
        %v1614 = vadd.f32 0.0, %v1613
        %v1615 = vpop.f32.mrb[0].mxu0
        %1616 = vmatprep.mubr.bf16.mxu0 0
        %1617 = vmatmul.mubr.bf16.gmra.mrb[0].mxu0 %v1495
        %v1618 = vpop.f32.mrb[0].mxu0
        %v1619 = vadd.f32 0.0, %v1618
        %v1620 = vpop.f32.mrb[0].mxu0
        %v1621 = vpop.f32.mrb[0].mxu0
        %v1622 = vadd.f32 0.0, %v1621
        %v1623 = vpop.f32.mrb[0].mxu0
        %1624 = vdwg.mxu0
        %v1625 = vadd.f32 %v1468, %v1595
        %v1626 = vadd.f32 %v1469, %v1598
        %v1627 = vadd.f32 %v1470, %v1603
        %v1628 = vadd.f32 %v1471, %v1606
        %v1629 = vadd.f32 %v1472, %v1611
        %v1630 = vadd.f32 %v1473, %v1614
        %v1631 = vadd.f32 %v1474, %v1619
        %v1632 = vadd.f32 %v1475, %v1622
        %s1633 = scalar_lea.vmem %s1476, 1 [#allocation2]
        %v1634 = vld [vmem:[%s1633] ss:$2 sm:$0xff]
        %s1635 = scalar_lea.vmem %s1476, 49 [#allocation2]
        %v1636 = vld [vmem:[%s1635] ss:$2 sm:$0xff]
        %s1637 = scalar_lea.vmem %s1476, 97 [#allocation2]
        %v1638 = vld [vmem:[%s1637] ss:$2 sm:$0xff]
        %s1639 = scalar_lea.vmem %s1476, 145 [#allocation2]
        %v1640 = vld [vmem:[%s1639] ss:$2 sm:$0xff]
        %s1641 = scalar_lea.vmem %s1476, 193 [#allocation2]
        %v1642 = vld [vmem:[%s1641] ss:$2 sm:$0xff]
        %s1643 = scalar_lea.vmem %s1476, 241 [#allocation2]
        %v1644 = vld [vmem:[%s1643] ss:$2 sm:$0xff]
        %s1645 = scalar_lea.vmem %s1476, 289 [#allocation2]
        %v1646 = vld [vmem:[%s1645] ss:$2 sm:$0xff]
        %s1647 = scalar_lea.vmem %s1476, 337 [#allocation2]
        %v1648 = vld [vmem:[%s1647] ss:$2 sm:$0xff]
        %v1649 = vpack.c.bf16 %v1636, %v1634
        %v1650 = vpack.c.bf16 %v1640, %v1638
        %v1651 = vpack.c.bf16 %v1644, %v1642
        %v1652 = vpack.c.bf16 %v1648, %v1646
        %v1653 = vld [vmem:[#allocation7 + $0x1c0] sm:$0xf]
        %v1654 = vld [vmem:[#allocation7 + $0x1c4] sm:$0xf]
        %v1655 = vld [vmem:[#allocation7 + $0x1c8] sm:$0xf]
        %v1656 = vld [vmem:[#allocation7 + $0x1cc] sm:$0xf]
        %v1657 = vld [vmem:[#allocation7 + $0x1d0] sm:$0xf]
        %v1658 = vld [vmem:[#allocation7 + $0x1d4] sm:$0xf]
        %v1659 = vld [vmem:[#allocation7 + $0x1d8] sm:$0xf]
        %v1660 = vld [vmem:[#allocation7 + $0x1dc] sm:$0xf]
        %v1661 = vld [vmem:[#allocation7 + $0x1e0] sm:$0xf]
        %v1662 = vld [vmem:[#allocation7 + $0x1e4] sm:$0xf]
        %v1663 = vld [vmem:[#allocation7 + $0x1e8] sm:$0xf]
        %v1664 = vld [vmem:[#allocation7 + $0x1ec] sm:$0xf]
        %v1665 = vld [vmem:[#allocation7 + $0x1f0] sm:$0xf]
        %v1666 = vld [vmem:[#allocation7 + $0x1f4] sm:$0xf]
        %v1667 = vld [vmem:[#allocation7 + $0x1f8] sm:$0xf]
        %v1668 = vld [vmem:[#allocation7 + $0x1fc] sm:$0xf]
        %v1685 = vunpack.c.l.b16 %v1653
        %v1686 = vunpack.c.l.b16 %v1654
        %v1687 = vunpack.c.l.b16 %v1655
        %v1688 = vunpack.c.l.b16 %v1656
        %v1689 = vunpack.c.l.b16 %v1657
        %v1690 = vunpack.c.l.b16 %v1658
        %v1691 = vunpack.c.l.b16 %v1659
        %v1692 = vunpack.c.l.b16 %v1660
        %v1693 = vunpack.c.l.b16 %v1661
        %v1694 = vunpack.c.l.b16 %v1662
        %v1695 = vunpack.c.l.b16 %v1663
        %v1696 = vunpack.c.l.b16 %v1664
        %v1697 = vunpack.c.l.b16 %v1665
        %v1698 = vunpack.c.l.b16 %v1666
        %v1699 = vunpack.c.l.b16 %v1667
        %v1700 = vunpack.c.l.b16 %v1668
        %v1701 = vpack.c.b16 %v1686, %v1685
        %v1702 = vpack.c.b16 %v1688, %v1687
        %v1703 = vpack.c.b16 %v1690, %v1689
        %v1704 = vpack.c.b16 %v1692, %v1691
        %v1705 = vpack.c.b16 %v1694, %v1693
        %v1706 = vpack.c.b16 %v1696, %v1695
        %v1707 = vpack.c.b16 %v1698, %v1697
        %v1708 = vpack.c.b16 %v1700, %v1699
        %1717 = vmatprep.subr.bf16.mxu0 0
        %1718 = vmatpush1.bf16.msra.mxu0 %v1701
        %1719 = vmatprep.subr.bf16.mxu0 0
        %1720 = vmatpush1.bf16.msra.mxu0 %v1702
        %1721 = vmatprep.subr.bf16.mxu0 0
        %1722 = vmatpush1.bf16.msra.mxu0 %v1703
        %1723 = vmatprep.subr.bf16.mxu0 0
        %1724 = vmatpush1.bf16.msra.mxu0 %v1704
        %1725 = vmatprep.subr.bf16.mxu0 0
        %1726 = vmatpush1.bf16.msra.mxu0 %v1705
        %1727 = vmatprep.subr.bf16.mxu0 0
        %1728 = vmatpush1.bf16.msra.mxu0 %v1706
        %1729 = vmatprep.subr.bf16.mxu0 0
        %1730 = vmatpush1.bf16.msra.mxu0 %v1707
        %1731 = vmatprep.subr.bf16.mxu0 0
        %1732 = vmatpush1.bf16.msra.mxu0 %v1708
        %1733 = vmatprep.subr.bf16.mxu0 0
        %1734 = vmatpush1.bf16.msra.mxu0 0
        %1735 = vmatprep.subr.bf16.mxu0 0
        %1736 = vmatpush1.bf16.msra.mxu0 0
        %1737 = vmatprep.subr.bf16.mxu0 0
        %1738 = vmatpush1.bf16.msra.mxu0 0
        %1739 = vmatprep.subr.bf16.mxu0 0
        %1740 = vmatpush1.bf16.msra.mxu0 0
        %1741 = vmatprep.subr.bf16.mxu0 0
        %1742 = vmatpush1.bf16.msra.mxu0 0
        %1743 = vmatprep.subr.bf16.mxu0 0
        %1744 = vmatpush1.bf16.msra.mxu0 0
        %1745 = vmatprep.subr.bf16.mxu0 0
        %1746 = vmatpush1.bf16.msra.mxu0 0
        %1747 = vmatprep.subr.bf16.mxu0 0
        %1748 = vmatpush1.bf16.msra.mxu0 0
        %1749 = vmatprep.mubr.bf16.mxu0 0
        %1750 = vmatmul.mubr.bf16.gmra.mrb[0].mxu0 %v1649
        %v1751 = vpop.f32.mrb[0].mxu0
        %v1752 = vadd.f32 0.0, %v1751
        %v1753 = vpop.f32.mrb[0].mxu0
        %v1754 = vpop.f32.mrb[0].mxu0
        %v1755 = vadd.f32 0.0, %v1754
        %v1756 = vpop.f32.mrb[0].mxu0
        %1757 = vmatprep.mubr.bf16.mxu0 0
        %1758 = vmatmul.mubr.bf16.gmra.mrb[0].mxu0 %v1650
        %v1759 = vpop.f32.mrb[0].mxu0
        %v1760 = vadd.f32 0.0, %v1759
        %v1761 = vpop.f32.mrb[0].mxu0
        %v1762 = vpop.f32.mrb[0].mxu0
        %v1763 = vadd.f32 0.0, %v1762
        %v1764 = vpop.f32.mrb[0].mxu0
        %1765 = vmatprep.mubr.bf16.mxu0 0
        %1766 = vmatmul.mubr.bf16.gmra.mrb[0].mxu0 %v1651
        %v1767 = vpop.f32.mrb[0].mxu0
        %v1768 = vadd.f32 0.0, %v1767
        %v1769 = vpop.f32.mrb[0].mxu0
        %v1770 = vpop.f32.mrb[0].mxu0
        %v1771 = vadd.f32 0.0, %v1770
        %v1772 = vpop.f32.mrb[0].mxu0
        %1773 = vmatprep.mubr.bf16.mxu0 0
        %1774 = vmatmul.mubr.bf16.gmra.mrb[0].mxu0 %v1652
        %v1775 = vpop.f32.mrb[0].mxu0
        %v1776 = vadd.f32 0.0, %v1775
        %v1777 = vpop.f32.mrb[0].mxu0
        %v1778 = vpop.f32.mrb[0].mxu0
        %v1779 = vadd.f32 0.0, %v1778
        %v1780 = vpop.f32.mrb[0].mxu0
        %1781 = vdwg.mxu0
        %v1782 = vadd.f32 %v1625, %v1752
        %v1783 = vadd.f32 %v1626, %v1755
        %v1784 = vadd.f32 %v1627, %v1760
        %v1785 = vadd.f32 %v1628, %v1763
        %v1786 = vadd.f32 %v1629, %v1768
        %v1787 = vadd.f32 %v1630, %v1771
        %v1788 = vadd.f32 %v1631, %v1776
        %v1789 = vadd.f32 %v1632, %v1779
        %s1790 = scalar_lea.vmem %s1476, 2 [#allocation2]
        %v1791 = vld [vmem:[%s1790] ss:$2 sm:$0xff]
        %s1792 = scalar_lea.vmem %s1476, 50 [#allocation2]
        %v1793 = vld [vmem:[%s1792] ss:$2 sm:$0xff]
        %s1794 = scalar_lea.vmem %s1476, 98 [#allocation2]
        %v1795 = vld [vmem:[%s1794] ss:$2 sm:$0xff]
        %s1796 = scalar_lea.vmem %s1476, 146 [#allocation2]
        %v1797 = vld [vmem:[%s1796] ss:$2 sm:$0xff]
        %s1798 = scalar_lea.vmem %s1476, 194 [#allocation2]
        %v1799 = vld [vmem:[%s1798] ss:$2 sm:$0xff]
        %s1800 = scalar_lea.vmem %s1476, 242 [#allocation2]
        %v1801 = vld [vmem:[%s1800] ss:$2 sm:$0xff]
        %s1802 = scalar_lea.vmem %s1476, 290 [#allocation2]
        %v1803 = vld [vmem:[%s1802] ss:$2 sm:$0xff]
        %s1804 = scalar_lea.vmem %s1476, 338 [#allocation2]
        %v1805 = vld [vmem:[%s1804] ss:$2 sm:$0xff]
        %v1806 = vpack.c.bf16 %v1793, %v1791
        %v1807 = vpack.c.bf16 %v1797, %v1795
        %v1808 = vpack.c.bf16 %v1801, %v1799
        %v1809 = vpack.c.bf16 %v1805, %v1803
        %v1810 = vld [vmem:[#allocation7 + $0x200] sm:$0xf]
        %v1811 = vld [vmem:[#allocation7 + $0x204] sm:$0xf]
        %v1812 = vld [vmem:[#allocation7 + $0x208] sm:$0xf]
        %v1813 = vld [vmem:[#allocation7 + $0x20c] sm:$0xf]
        %v1814 = vld [vmem:[#allocation7 + $0x210] sm:$0xf]
        %v1815 = vld [vmem:[#allocation7 + $0x214] sm:$0xf]
        %v1816 = vld [vmem:[#allocation7 + $0x218] sm:$0xf]
        %v1817 = vld [vmem:[#allocation7 + $0x21c] sm:$0xf]
        %v1818 = vld [vmem:[#allocation7 + $0x220] sm:$0xf]
        %v1819 = vld [vmem:[#allocation7 + $0x224] sm:$0xf]
        %v1820 = vld [vmem:[#allocation7 + $0x228] sm:$0xf]
        %v1821 = vld [vmem:[#allocation7 + $0x22c] sm:$0xf]
        %v1822 = vld [vmem:[#allocation7 + $0x230] sm:$0xf]
        %v1823 = vld [vmem:[#allocation7 + $0x234] sm:$0xf]
        %v1824 = vld [vmem:[#allocation7 + $0x238] sm:$0xf]
        %v1825 = vld [vmem:[#allocation7 + $0x23c] sm:$0xf]
        %v1842 = vunpack.c.l.b16 %v1810
        %v1843 = vunpack.c.l.b16 %v1811
        %v1844 = vunpack.c.l.b16 %v1812
        %v1845 = vunpack.c.l.b16 %v1813
        %v1846 = vunpack.c.l.b16 %v1814
        %v1847 = vunpack.c.l.b16 %v1815
        %v1848 = vunpack.c.l.b16 %v1816
        %v1849 = vunpack.c.l.b16 %v1817
        %v1850 = vunpack.c.l.b16 %v1818
        %v1851 = vunpack.c.l.b16 %v1819
        %v1852 = vunpack.c.l.b16 %v1820
        %v1853 = vunpack.c.l.b16 %v1821
        %v1854 = vunpack.c.l.b16 %v1822
        %v1855 = vunpack.c.l.b16 %v1823
        %v1856 = vunpack.c.l.b16 %v1824
        %v1857 = vunpack.c.l.b16 %v1825
        %v1858 = vpack.c.b16 %v1843, %v1842
        %v1859 = vpack.c.b16 %v1845, %v1844
        %v1860 = vpack.c.b16 %v1847, %v1846
        %v1861 = vpack.c.b16 %v1849, %v1848
        %v1862 = vpack.c.b16 %v1851, %v1850
        %v1863 = vpack.c.b16 %v1853, %v1852
        %v1864 = vpack.c.b16 %v1855, %v1854
        %v1865 = vpack.c.b16 %v1857, %v1856
        %1874 = vmatprep.subr.bf16.mxu0 0
        %1875 = vmatpush1.bf16.msra.mxu0 %v1858
        %1876 = vmatprep.subr.bf16.mxu0 0
        %1877 = vmatpush1.bf16.msra.mxu0 %v1859
        %1878 = vmatprep.subr.bf16.mxu0 0
        %1879 = vmatpush1.bf16.msra.mxu0 %v1860
        %1880 = vmatprep.subr.bf16.mxu0 0
        %1881 = vmatpush1.bf16.msra.mxu0 %v1861
        %1882 = vmatprep.subr.bf16.mxu0 0
        %1883 = vmatpush1.bf16.msra.mxu0 %v1862
        %1884 = vmatprep.subr.bf16.mxu0 0
        %1885 = vmatpush1.bf16.msra.mxu0 %v1863
        %1886 = vmatprep.subr.bf16.mxu0 0
        %1887 = vmatpush1.bf16.msra.mxu0 %v1864
        %1888 = vmatprep.subr.bf16.mxu0 0
        %1889 = vmatpush1.bf16.msra.mxu0 %v1865
        %1890 = vmatprep.subr.bf16.mxu0 0
        %1891 = vmatpush1.bf16.msra.mxu0 0
        %1892 = vmatprep.subr.bf16.mxu0 0
        %1893 = vmatpush1.bf16.msra.mxu0 0
        %1894 = vmatprep.subr.bf16.mxu0 0
        %1895 = vmatpush1.bf16.msra.mxu0 0
        %1896 = vmatprep.subr.bf16.mxu0 0
        %1897 = vmatpush1.bf16.msra.mxu0 0
        %1898 = vmatprep.subr.bf16.mxu0 0
        %1899 = vmatpush1.bf16.msra.mxu0 0
        %1900 = vmatprep.subr.bf16.mxu0 0
        %1901 = vmatpush1.bf16.msra.mxu0 0
        %1902 = vmatprep.subr.bf16.mxu0 0
        %1903 = vmatpush1.bf16.msra.mxu0 0
        %1904 = vmatprep.subr.bf16.mxu0 0
        %1905 = vmatpush1.bf16.msra.mxu0 0
        %1906 = vmatprep.mubr.bf16.mxu0 0
        %1907 = vmatmul.mubr.bf16.gmra.mrb[0].mxu0 %v1806
        %v1908 = vpop.f32.mrb[0].mxu0
        %v1909 = vadd.f32 0.0, %v1908
        %v1910 = vpop.f32.mrb[0].mxu0
        %v1911 = vpop.f32.mrb[0].mxu0
        %v1912 = vadd.f32 0.0, %v1911
        %v1913 = vpop.f32.mrb[0].mxu0
        %1914 = vmatprep.mubr.bf16.mxu0 0
        %1915 = vmatmul.mubr.bf16.gmra.mrb[0].mxu0 %v1807
        %v1916 = vpop.f32.mrb[0].mxu0
        %v1917 = vadd.f32 0.0, %v1916
        %v1918 = vpop.f32.mrb[0].mxu0
        %v1919 = vpop.f32.mrb[0].mxu0
        %v1920 = vadd.f32 0.0, %v1919
        %v1921 = vpop.f32.mrb[0].mxu0
        %1922 = vmatprep.mubr.bf16.mxu0 0
        %1923 = vmatmul.mubr.bf16.gmra.mrb[0].mxu0 %v1808
        %v1924 = vpop.f32.mrb[0].mxu0
        %v1925 = vadd.f32 0.0, %v1924
        %v1926 = vpop.f32.mrb[0].mxu0
        %v1927 = vpop.f32.mrb[0].mxu0
        %v1928 = vadd.f32 0.0, %v1927
        %v1929 = vpop.f32.mrb[0].mxu0
        %1930 = vmatprep.mubr.bf16.mxu0 0
        %1931 = vmatmul.mubr.bf16.gmra.mrb[0].mxu0 %v1809
        %v1932 = vpop.f32.mrb[0].mxu0
        %v1933 = vadd.f32 0.0, %v1932
        %v1934 = vpop.f32.mrb[0].mxu0
        %v1935 = vpop.f32.mrb[0].mxu0
        %v1936 = vadd.f32 0.0, %v1935
        %v1937 = vpop.f32.mrb[0].mxu0
        %1938 = vdwg.mxu0
        %v1939 = vadd.f32 %v1782, %v1909
        %v1940 = vadd.f32 %v1783, %v1912
        %v1941 = vadd.f32 %v1784, %v1917
        %v1942 = vadd.f32 %v1785, %v1920
        %v1943 = vadd.f32 %v1786, %v1925
        %v1944 = vadd.f32 %v1787, %v1928
        %v1945 = vadd.f32 %v1788, %v1933
        %v1946 = vadd.f32 %v1789, %v1936
        %v1947 = vld [vmem:[%s2] sm:$0x1]
        %v1949 = vlaneseq
        %v1950 = vshrl.u32 %v1949, 7
        %v1951 = vsub.s32 0, %v1950
        %v1952 = vrot.slane %v1947, %v1951
        %v1954 = vadd.f32 %v1939, %v1952
        %v1955 = vadd.f32 %v1940, %v1952
        %v1956 = vadd.f32 %v1941, %v1952
        %v1957 = vadd.f32 %v1942, %v1952
        %v1958 = vadd.f32 %v1943, %v1952
        %v1959 = vadd.f32 %v1944, %v1952
        %v1960 = vadd.f32 %v1945, %v1952
        %v1961 = vadd.f32 %v1946, %v1952
        %v1962 = vmax.f32 %v1954, 0.0
        %v1963 = vmax.f32 %v1955, 0.0
        %v1964 = vmax.f32 %v1956, 0.0
        %v1965 = vmax.f32 %v1957, 0.0
        %v1966 = vmax.f32 %v1958, 0.0
        %v1967 = vmax.f32 %v1959, 0.0
        %v1968 = vmax.f32 %v1960, 0.0
        %v1969 = vmax.f32 %v1961, 0.0
        %v1970 = vpack.c.bf16 %v1963, %v1962
        %v1971 = vpack.c.bf16 %v1965, %v1964
        %v1972 = vpack.c.bf16 %v1967, %v1966
        %v1973 = vpack.c.bf16 %v1969, %v1968
        %v1978 = vunpack.c.l.b16 %v1970
        %v1979 = vunpack.c.h.b16 %v1970
        %v1980 = vunpack.c.l.b16 %v1971
        %v1981 = vunpack.c.h.b16 %v1971
        %v1982 = vunpack.c.l.b16 %v1972
        %v1983 = vunpack.c.h.b16 %v1972
        %v1984 = vunpack.c.l.b16 %v1973
        %v1985 = vunpack.c.h.b16 %v1973
        %v1986 = vpack.c.b16 %v1978, %v1978
        %v1987 = vpack.c.b16 %v1979, %v1979
        %v1988 = vpack.c.b16 %v1980, %v1980
        %v1989 = vpack.c.b16 %v1981, %v1981
        %v1990 = vpack.c.b16 %v1982, %v1982
        %v1991 = vpack.c.b16 %v1983, %v1983
        %v1992 = vpack.c.b16 %v1984, %v1984
        %v1993 = vpack.c.b16 %v1985, %v1985
        %v1995 = vshrl.u32 %v1986, 16
        %v1997 = vrot.slane %v1995, 7
        %v1998 = vshll.u32 %v1986, 16
        %v2000 = vor.u32 %v1997, %v1998
        %v2001 = vrot.slane %v1997, 4
        %v2003 = vshrl.u32 %v1987, 16
        %v2005 = vrot.slane %v2003, 7
        %v2006 = vshll.u32 %v1987, 16
        %v2008 = vor.u32 %v2005, %v2006
        %v2009 = vrot.slane %v2005, 4
        %v2011 = vshrl.u32 %v1988, 16
        %v2013 = vrot.slane %v2011, 7
        %v2014 = vshll.u32 %v1988, 16
        %v2016 = vor.u32 %v2013, %v2014
        %v2017 = vrot.slane %v2013, 4
        %v2019 = vshrl.u32 %v1989, 16
        %v2021 = vrot.slane %v2019, 7
        %v2022 = vshll.u32 %v1989, 16
        %v2024 = vor.u32 %v2021, %v2022
        %v2025 = vrot.slane %v2021, 4
        %v2027 = vshrl.u32 %v1990, 16
        %v2029 = vrot.slane %v2027, 7
        %v2030 = vshll.u32 %v1990, 16
        %v2032 = vor.u32 %v2029, %v2030
        %v2033 = vrot.slane %v2029, 4
        %v2035 = vshrl.u32 %v1991, 16
        %v2037 = vrot.slane %v2035, 7
        %v2038 = vshll.u32 %v1991, 16
        %v2040 = vor.u32 %v2037, %v2038
        %v2041 = vrot.slane %v2037, 4
        %v2043 = vshrl.u32 %v1992, 16
        %v2045 = vrot.slane %v2043, 7
        %v2046 = vshll.u32 %v1992, 16
        %v2048 = vor.u32 %v2045, %v2046
        %v2049 = vrot.slane %v2045, 4
        %v2051 = vshrl.u32 %v1993, 16
        %v2053 = vrot.slane %v2051, 7
        %v2054 = vshll.u32 %v1993, 16
        %v2056 = vor.u32 %v2053, %v2054
        %v2057 = vrot.slane %v2053, 4
        %s2074 = scalar_lea.vmem [#allocation3], 8
        %vm2075 = vcmask 1043456
        %vm2076 = vmand %vm2075, %vm423
        %v2077 = vld [vmem:[%s2074] sm:$0xf]
        %v2078 = vsel %vm2076, %v2000, %v2077
        %2079 = vst [vmem:[%s2074] sm:$0xf] %v2078
        %v2080 = vld [vmem:[%s2074 + $0x4] sm:$0x1]
        %v2081 = vsel %vm392, %v2001, %v2080
        %2082 = vst [vmem:[%s2074 + $0x4] sm:$0x1] %v2081
        %v2083 = vld [vmem:[%s2074 + $0x8] sm:$0xf]
        %v2084 = vsel %vm2076, %v2008, %v2083
        %2085 = vst [vmem:[%s2074 + $0x8] sm:$0xf] %v2084
        %v2086 = vld [vmem:[%s2074 + $0xc] sm:$0x1]
        %v2087 = vsel %vm392, %v2009, %v2086
        %2088 = vst [vmem:[%s2074 + $0xc] sm:$0x1] %v2087
        %v2089 = vld [vmem:[%s2074 + $0x10] sm:$0xf]
        %v2090 = vsel %vm2076, %v2016, %v2089
        %2091 = vst [vmem:[%s2074 + $0x10] sm:$0xf] %v2090
        %v2092 = vld [vmem:[%s2074 + $0x14] sm:$0x1]
        %v2093 = vsel %vm392, %v2017, %v2092
        %2094 = vst [vmem:[%s2074 + $0x14] sm:$0x1] %v2093
        %v2095 = vld [vmem:[%s2074 + $0x18] sm:$0xf]
        %v2096 = vsel %vm2076, %v2024, %v2095
        %2097 = vst [vmem:[%s2074 + $0x18] sm:$0xf] %v2096
        %v2098 = vld [vmem:[%s2074 + $0x1c] sm:$0x1]
        %v2099 = vsel %vm392, %v2025, %v2098
        %2100 = vst [vmem:[%s2074 + $0x1c] sm:$0x1] %v2099
        %v2101 = vld [vmem:[%s2074 + $0x20] sm:$0xf]
        %v2102 = vsel %vm2076, %v2032, %v2101
        %2103 = vst [vmem:[%s2074 + $0x20] sm:$0xf] %v2102
        %v2104 = vld [vmem:[%s2074 + $0x24] sm:$0x1]
        %v2105 = vsel %vm392, %v2033, %v2104
        %2106 = vst [vmem:[%s2074 + $0x24] sm:$0x1] %v2105
        %v2107 = vld [vmem:[%s2074 + $0x28] sm:$0xf]
        %v2108 = vsel %vm2076, %v2040, %v2107
        %2109 = vst [vmem:[%s2074 + $0x28] sm:$0xf] %v2108
        %v2110 = vld [vmem:[%s2074 + $0x2c] sm:$0x1]
        %v2111 = vsel %vm392, %v2041, %v2110
        %2112 = vst [vmem:[%s2074 + $0x2c] sm:$0x1] %v2111
        %v2113 = vld [vmem:[%s2074 + $0x30] sm:$0xf]
        %v2114 = vsel %vm2076, %v2048, %v2113
        %2115 = vst [vmem:[%s2074 + $0x30] sm:$0xf] %v2114
        %v2116 = vld [vmem:[%s2074 + $0x34] sm:$0x1]
        %v2117 = vsel %vm392, %v2049, %v2116
        %2118 = vst [vmem:[%s2074 + $0x34] sm:$0x1] %v2117
        %v2119 = vld [vmem:[%s2074 + $0x38] sm:$0xf]
        %v2120 = vsel %vm2076, %v2056, %v2119
        %2121 = vst [vmem:[%s2074 + $0x38] sm:$0xf] %v2120
        %v2122 = vld [vmem:[%s2074 + $0x3c] sm:$0x1]
        %v2123 = vsel %vm392, %v2057, %v2122
        %2124 = vst [vmem:[%s2074 + $0x3c] sm:$0x1] %v2123
        %v2125 = vld [vmem:[#allocation3] sm:$0xf]
        %v2126 = vld [vmem:[#allocation3 + $0x8] sm:$0xf]
        %v2127 = vld [vmem:[#allocation3 + $0x10] sm:$0xf]
        %v2128 = vld [vmem:[#allocation3 + $0x18] sm:$0xf]
        %v2129 = vld [vmem:[#allocation3 + $0x20] sm:$0xf]
        %v2130 = vld [vmem:[#allocation3 + $0x28] sm:$0xf]
        %v2131 = vld [vmem:[#allocation3 + $0x30] sm:$0xf]
        %v2132 = vld [vmem:[#allocation3 + $0x38] sm:$0xf]
        %v2133 = vld [vmem:[#allocation9] sm:$0xf]
        %v2134 = vld [vmem:[#allocation9 + $0x4] sm:$0xf]
        %v2135 = vld [vmem:[#allocation9 + $0x8] sm:$0xf]
        %v2136 = vld [vmem:[#allocation9 + $0xc] sm:$0xf]
        %v2137 = vld [vmem:[#allocation9 + $0x10] sm:$0xf]
        %v2138 = vld [vmem:[#allocation9 + $0x14] sm:$0xf]
        %v2139 = vld [vmem:[#allocation9 + $0x18] sm:$0xf]
        %v2140 = vld [vmem:[#allocation9 + $0x1c] sm:$0xf]
        %v2141 = vld [vmem:[#allocation9 + $0x20] sm:$0xf]
        %v2142 = vld [vmem:[#allocation9 + $0x24] sm:$0xf]
        %v2143 = vld [vmem:[#allocation9 + $0x28] sm:$0xf]
        %v2144 = vld [vmem:[#allocation9 + $0x2c] sm:$0xf]
        %v2145 = vld [vmem:[#allocation9 + $0x30] sm:$0xf]
        %v2146 = vld [vmem:[#allocation9 + $0x34] sm:$0xf]
        %v2147 = vld [vmem:[#allocation9 + $0x38] sm:$0xf]
        %v2148 = vld [vmem:[#allocation9 + $0x3c] sm:$0xf]
        %v2149 = vld [vmem:[#allocation3 + $0x4] sm:$0x1]
        %v2150 = vld [vmem:[#allocation3 + $0xc] sm:$0x1]
        %v2151 = vld [vmem:[#allocation3 + $0x14] sm:$0x1]
        %v2152 = vld [vmem:[#allocation3 + $0x1c] sm:$0x1]
        %v2153 = vld [vmem:[#allocation3 + $0x24] sm:$0x1]
        %v2154 = vld [vmem:[#allocation3 + $0x2c] sm:$0x1]
        %v2155 = vld [vmem:[#allocation3 + $0x34] sm:$0x1]
        %v2156 = vld [vmem:[#allocation3 + $0x3c] sm:$0x1]
        %vm2157 = vsmask.f32 3328
        %vm2158 = vsmask.f32 7440
        %vm2159 = vmor %vm2157, %vm2158
        %v2161 = vshrl.u32 %v2125, 16
        %v2163 = vrot.slane %v2161, 4
        %v2164 = vshll.u32 %v2125, 16
        %v2166 = vrot.slane %v2164, 5
        %v2167 = vor.u32 %v2163, %v2166
        %v2168 = vrot.slane %v2167, 4
        %v2170 = vshll.u32 %v2149, 16
        %v2172 = vrot.slane %v2170, 5
        %v2173 = vsel %vm2159, %v2168, %v2172
        %v2175 = vshrl.u32 %v2126, 16
        %v2177 = vrot.slane %v2175, 4
        %v2178 = vshll.u32 %v2126, 16
        %v2180 = vrot.slane %v2178, 5
        %v2181 = vor.u32 %v2177, %v2180
        %v2182 = vrot.slane %v2181, 4
        %v2184 = vshll.u32 %v2150, 16
        %v2186 = vrot.slane %v2184, 5
        %v2187 = vsel %vm2159, %v2182, %v2186
        %v2189 = vshrl.u32 %v2127, 16
        %v2191 = vrot.slane %v2189, 4
        %v2192 = vshll.u32 %v2127, 16
        %v2194 = vrot.slane %v2192, 5
        %v2195 = vor.u32 %v2191, %v2194
        %v2196 = vrot.slane %v2195, 4
        %v2198 = vshll.u32 %v2151, 16
        %v2200 = vrot.slane %v2198, 5
        %v2201 = vsel %vm2159, %v2196, %v2200
        %v2203 = vshrl.u32 %v2128, 16
        %v2205 = vrot.slane %v2203, 4
        %v2206 = vshll.u32 %v2128, 16
        %v2208 = vrot.slane %v2206, 5
        %v2209 = vor.u32 %v2205, %v2208
        %v2210 = vrot.slane %v2209, 4
        %v2212 = vshll.u32 %v2152, 16
        %v2214 = vrot.slane %v2212, 5
        %v2215 = vsel %vm2159, %v2210, %v2214
        %v2217 = vshrl.u32 %v2129, 16
        %v2219 = vrot.slane %v2217, 4
        %v2220 = vshll.u32 %v2129, 16
        %v2222 = vrot.slane %v2220, 5
        %v2223 = vor.u32 %v2219, %v2222
        %v2224 = vrot.slane %v2223, 4
        %v2226 = vshll.u32 %v2153, 16
        %v2228 = vrot.slane %v2226, 5
        %v2229 = vsel %vm2159, %v2224, %v2228
        %v2231 = vshrl.u32 %v2130, 16
        %v2233 = vrot.slane %v2231, 4
        %v2234 = vshll.u32 %v2130, 16
        %v2236 = vrot.slane %v2234, 5
        %v2237 = vor.u32 %v2233, %v2236
        %v2238 = vrot.slane %v2237, 4
        %v2240 = vshll.u32 %v2154, 16
        %v2242 = vrot.slane %v2240, 5
        %v2243 = vsel %vm2159, %v2238, %v2242
        %v2245 = vshrl.u32 %v2131, 16
        %v2247 = vrot.slane %v2245, 4
        %v2248 = vshll.u32 %v2131, 16
        %v2250 = vrot.slane %v2248, 5
        %v2251 = vor.u32 %v2247, %v2250
        %v2252 = vrot.slane %v2251, 4
        %v2254 = vshll.u32 %v2155, 16
        %v2256 = vrot.slane %v2254, 5
        %v2257 = vsel %vm2159, %v2252, %v2256
        %v2259 = vshrl.u32 %v2132, 16
        %v2261 = vrot.slane %v2259, 4
        %v2262 = vshll.u32 %v2132, 16
        %v2264 = vrot.slane %v2262, 5
        %v2265 = vor.u32 %v2261, %v2264
        %v2266 = vrot.slane %v2265, 4
        %v2268 = vshll.u32 %v2156, 16
        %v2270 = vrot.slane %v2268, 5
        %v2271 = vsel %vm2159, %v2266, %v2270
        %v2272 = vld [vmem:[#allocation9 + $0x40] sm:$0xf]
        %v2273 = vld [vmem:[#allocation9 + $0x44] sm:$0xf]
        %v2274 = vld [vmem:[#allocation9 + $0x48] sm:$0xf]
        %v2275 = vld [vmem:[#allocation9 + $0x4c] sm:$0xf]
        %v2276 = vld [vmem:[#allocation9 + $0x50] sm:$0xf]
        %v2277 = vld [vmem:[#allocation9 + $0x54] sm:$0xf]
        %v2278 = vld [vmem:[#allocation9 + $0x58] sm:$0xf]
        %v2279 = vld [vmem:[#allocation9 + $0x5c] sm:$0xf]
        %v2280 = vld [vmem:[#allocation9 + $0x60] sm:$0xf]
        %v2281 = vld [vmem:[#allocation9 + $0x64] sm:$0xf]
        %v2282 = vld [vmem:[#allocation9 + $0x68] sm:$0xf]
        %v2283 = vld [vmem:[#allocation9 + $0x6c] sm:$0xf]
        %v2284 = vld [vmem:[#allocation9 + $0x70] sm:$0xf]
        %v2285 = vld [vmem:[#allocation9 + $0x74] sm:$0xf]
        %v2286 = vld [vmem:[#allocation9 + $0x78] sm:$0xf]
        %v2287 = vld [vmem:[#allocation9 + $0x7c] sm:$0xf]
        %v2288 = vunpack.c.l.b16 %v2173
        %v2289 = vunpack.c.l.b16 %v2187
        %v2290 = vunpack.c.l.b16 %v2201
        %v2291 = vunpack.c.l.b16 %v2215
        %v2292 = vunpack.c.l.b16 %v2229
        %v2293 = vunpack.c.l.b16 %v2243
        %v2294 = vunpack.c.l.b16 %v2257
        %v2295 = vunpack.c.l.b16 %v2271
        %v2296 = vpack.c.b16 %v2289, %v2288
        %v2297 = vpack.c.b16 %v2291, %v2290
        %v2298 = vpack.c.b16 %v2293, %v2292
        %v2299 = vpack.c.b16 %v2295, %v2294
        %v2320 = vunpack.c.l.b16 %v2272
        %v2321 = vunpack.c.l.b16 %v2273
        %v2322 = vunpack.c.l.b16 %v2274
        %v2323 = vunpack.c.l.b16 %v2275
        %v2324 = vunpack.c.l.b16 %v2276
        %v2325 = vunpack.c.l.b16 %v2277
        %v2326 = vunpack.c.l.b16 %v2278
        %v2327 = vunpack.c.l.b16 %v2279
        %v2328 = vunpack.c.l.b16 %v2280
        %v2329 = vunpack.c.l.b16 %v2281
        %v2330 = vunpack.c.l.b16 %v2282
        %v2331 = vunpack.c.l.b16 %v2283
        %v2332 = vunpack.c.l.b16 %v2284
        %v2333 = vunpack.c.l.b16 %v2285
        %v2334 = vunpack.c.l.b16 %v2286
        %v2335 = vunpack.c.l.b16 %v2287
        %v2336 = vpack.c.b16 %v2321, %v2320
        %v2337 = vpack.c.b16 %v2323, %v2322
        %v2338 = vpack.c.b16 %v2325, %v2324
        %v2339 = vpack.c.b16 %v2327, %v2326
        %v2340 = vpack.c.b16 %v2329, %v2328
        %v2341 = vpack.c.b16 %v2331, %v2330
        %v2342 = vpack.c.b16 %v2333, %v2332
        %v2343 = vpack.c.b16 %v2335, %v2334
        %2352 = vmatprep.subr.bf16.mxu0 0
        %2353 = vmatpush1.bf16.msra.mxu0 %v2336
        %2354 = vmatprep.subr.bf16.mxu0 0
        %2355 = vmatpush1.bf16.msra.mxu0 %v2337
        %2356 = vmatprep.subr.bf16.mxu0 0
        %2357 = vmatpush1.bf16.msra.mxu0 %v2338
        %2358 = vmatprep.subr.bf16.mxu0 0
        %2359 = vmatpush1.bf16.msra.mxu0 %v2339
        %2360 = vmatprep.subr.bf16.mxu0 0
        %2361 = vmatpush1.bf16.msra.mxu0 %v2340
        %2362 = vmatprep.subr.bf16.mxu0 0
        %2363 = vmatpush1.bf16.msra.mxu0 %v2341
        %2364 = vmatprep.subr.bf16.mxu0 0
        %2365 = vmatpush1.bf16.msra.mxu0 %v2342
        %2366 = vmatprep.subr.bf16.mxu0 0
        %2367 = vmatpush1.bf16.msra.mxu0 %v2343
        %2368 = vmatprep.subr.bf16.mxu0 0
        %2369 = vmatpush1.bf16.msra.mxu0 0
        %2370 = vmatprep.subr.bf16.mxu0 0
        %2371 = vmatpush1.bf16.msra.mxu0 0
        %2372 = vmatprep.subr.bf16.mxu0 0
        %2373 = vmatpush1.bf16.msra.mxu0 0
        %2374 = vmatprep.subr.bf16.mxu0 0
        %2375 = vmatpush1.bf16.msra.mxu0 0
        %2376 = vmatprep.subr.bf16.mxu0 0
        %2377 = vmatpush1.bf16.msra.mxu0 0
        %2378 = vmatprep.subr.bf16.mxu0 0
        %2379 = vmatpush1.bf16.msra.mxu0 0
        %2380 = vmatprep.subr.bf16.mxu0 0
        %2381 = vmatpush1.bf16.msra.mxu0 0
        %2382 = vmatprep.subr.bf16.mxu0 0
        %2383 = vmatpush1.bf16.msra.mxu0 0
        %2384 = vmatprep.mubr.bf16.mxu0 0
        %2385 = vmatmul.mubr.bf16.gmra.mrb[0].mxu0 %v2296
        %v2386 = vpop.f32.mrb[0].mxu0
        %v2387 = vadd.f32 0.0, %v2386
        %v2388 = vpop.f32.mrb[0].mxu0
        %v2389 = vpop.f32.mrb[0].mxu0
        %v2390 = vadd.f32 0.0, %v2389
        %v2391 = vpop.f32.mrb[0].mxu0
        %2392 = vmatprep.mubr.bf16.mxu0 0
        %2393 = vmatmul.mubr.bf16.gmra.mrb[0].mxu0 %v2297
        %v2394 = vpop.f32.mrb[0].mxu0
        %v2395 = vadd.f32 0.0, %v2394
        %v2396 = vpop.f32.mrb[0].mxu0
        %v2397 = vpop.f32.mrb[0].mxu0
        %v2398 = vadd.f32 0.0, %v2397
        %v2399 = vpop.f32.mrb[0].mxu0
        %2400 = vmatprep.mubr.bf16.mxu0 0
        %2401 = vmatmul.mubr.bf16.gmra.mrb[0].mxu0 %v2298
        %v2402 = vpop.f32.mrb[0].mxu0
        %v2403 = vadd.f32 0.0, %v2402
        %v2404 = vpop.f32.mrb[0].mxu0
        %v2405 = vpop.f32.mrb[0].mxu0
        %v2406 = vadd.f32 0.0, %v2405
        %v2407 = vpop.f32.mrb[0].mxu0
        %2408 = vmatprep.mubr.bf16.mxu0 0
        %2409 = vmatmul.mubr.bf16.gmra.mrb[0].mxu0 %v2299
        %v2410 = vpop.f32.mrb[0].mxu0
        %v2411 = vadd.f32 0.0, %v2410
        %v2412 = vpop.f32.mrb[0].mxu0
        %v2413 = vpop.f32.mrb[0].mxu0
        %v2414 = vadd.f32 0.0, %v2413
        %v2415 = vpop.f32.mrb[0].mxu0
        %2416 = vdwg.mxu0
        %v2425 = vunpack.c.l.b16 %v2125
        %v2426 = vunpack.c.l.b16 %v2126
        %v2427 = vunpack.c.l.b16 %v2127
        %v2428 = vunpack.c.l.b16 %v2128
        %v2429 = vunpack.c.l.b16 %v2129
        %v2430 = vunpack.c.l.b16 %v2130
        %v2431 = vunpack.c.l.b16 %v2131
        %v2432 = vunpack.c.l.b16 %v2132
        %v2433 = vpack.c.b16 %v2426, %v2425
        %v2434 = vpack.c.b16 %v2428, %v2427
        %v2435 = vpack.c.b16 %v2430, %v2429
        %v2436 = vpack.c.b16 %v2432, %v2431
        %v2457 = vunpack.c.l.b16 %v2133
        %v2458 = vunpack.c.l.b16 %v2134
        %v2459 = vunpack.c.l.b16 %v2135
        %v2460 = vunpack.c.l.b16 %v2136
        %v2461 = vunpack.c.l.b16 %v2137
        %v2462 = vunpack.c.l.b16 %v2138
        %v2463 = vunpack.c.l.b16 %v2139
        %v2464 = vunpack.c.l.b16 %v2140
        %v2465 = vunpack.c.l.b16 %v2141
        %v2466 = vunpack.c.l.b16 %v2142
        %v2467 = vunpack.c.l.b16 %v2143
        %v2468 = vunpack.c.l.b16 %v2144
        %v2469 = vunpack.c.l.b16 %v2145
        %v2470 = vunpack.c.l.b16 %v2146
        %v2471 = vunpack.c.l.b16 %v2147
        %v2472 = vunpack.c.l.b16 %v2148
        %v2473 = vpack.c.b16 %v2458, %v2457
        %v2474 = vpack.c.b16 %v2460, %v2459
        %v2475 = vpack.c.b16 %v2462, %v2461
        %v2476 = vpack.c.b16 %v2464, %v2463
        %v2477 = vpack.c.b16 %v2466, %v2465
        %v2478 = vpack.c.b16 %v2468, %v2467
        %v2479 = vpack.c.b16 %v2470, %v2469
        %v2480 = vpack.c.b16 %v2472, %v2471
        %2489 = vmatprep.subr.bf16.mxu0 0
        %2490 = vmatpush1.bf16.msra.mxu0 %v2473
        %2491 = vmatprep.subr.bf16.mxu0 0
        %2492 = vmatpush1.bf16.msra.mxu0 %v2474
        %2493 = vmatprep.subr.bf16.mxu0 0
        %2494 = vmatpush1.bf16.msra.mxu0 %v2475
        %2495 = vmatprep.subr.bf16.mxu0 0
        %2496 = vmatpush1.bf16.msra.mxu0 %v2476
        %2497 = vmatprep.subr.bf16.mxu0 0
        %2498 = vmatpush1.bf16.msra.mxu0 %v2477
        %2499 = vmatprep.subr.bf16.mxu0 0
        %2500 = vmatpush1.bf16.msra.mxu0 %v2478
        %2501 = vmatprep.subr.bf16.mxu0 0
        %2502 = vmatpush1.bf16.msra.mxu0 %v2479
        %2503 = vmatprep.subr.bf16.mxu0 0
        %2504 = vmatpush1.bf16.msra.mxu0 %v2480
        %2505 = vmatprep.subr.bf16.mxu0 0
        %2506 = vmatpush1.bf16.msra.mxu0 0
        %2507 = vmatprep.subr.bf16.mxu0 0
        %2508 = vmatpush1.bf16.msra.mxu0 0
        %2509 = vmatprep.subr.bf16.mxu0 0
        %2510 = vmatpush1.bf16.msra.mxu0 0
        %2511 = vmatprep.subr.bf16.mxu0 0
        %2512 = vmatpush1.bf16.msra.mxu0 0
        %2513 = vmatprep.subr.bf16.mxu0 0
        %2514 = vmatpush1.bf16.msra.mxu0 0
        %2515 = vmatprep.subr.bf16.mxu0 0
        %2516 = vmatpush1.bf16.msra.mxu0 0
        %2517 = vmatprep.subr.bf16.mxu0 0
        %2518 = vmatpush1.bf16.msra.mxu0 0
        %2519 = vmatprep.subr.bf16.mxu0 0
        %2520 = vmatpush1.bf16.msra.mxu0 0
        %2521 = vmatprep.mubr.bf16.mxu0 0
        %2522 = vmatmul.mubr.bf16.gmra.mrb[0].mxu0 %v2433
        %v2523 = vpop.f32.mrb[0].mxu0
        %v2524 = vadd.f32 %v2387, %v2523
        %v2525 = vpop.f32.mrb[0].mxu0
        %v2526 = vpop.f32.mrb[0].mxu0
        %v2527 = vadd.f32 %v2390, %v2526
        %v2528 = vpop.f32.mrb[0].mxu0
        %2529 = vmatprep.mubr.bf16.mxu0 0
        %2530 = vmatmul.mubr.bf16.gmra.mrb[0].mxu0 %v2434
        %v2531 = vpop.f32.mrb[0].mxu0
        %v2532 = vadd.f32 %v2395, %v2531
        %v2533 = vpop.f32.mrb[0].mxu0
        %v2534 = vpop.f32.mrb[0].mxu0
        %v2535 = vadd.f32 %v2398, %v2534
        %v2536 = vpop.f32.mrb[0].mxu0
        %2537 = vmatprep.mubr.bf16.mxu0 0
        %2538 = vmatmul.mubr.bf16.gmra.mrb[0].mxu0 %v2435
        %v2539 = vpop.f32.mrb[0].mxu0
        %v2540 = vadd.f32 %v2403, %v2539
        %v2541 = vpop.f32.mrb[0].mxu0
        %v2542 = vpop.f32.mrb[0].mxu0
        %v2543 = vadd.f32 %v2406, %v2542
        %v2544 = vpop.f32.mrb[0].mxu0
        %2545 = vmatprep.mubr.bf16.mxu0 0
        %2546 = vmatmul.mubr.bf16.gmra.mrb[0].mxu0 %v2436
        %v2547 = vpop.f32.mrb[0].mxu0
        %v2548 = vadd.f32 %v2411, %v2547
        %v2549 = vpop.f32.mrb[0].mxu0
        %v2550 = vpop.f32.mrb[0].mxu0
        %v2551 = vadd.f32 %v2414, %v2550
        %v2552 = vpop.f32.mrb[0].mxu0
        %2553 = vdwg.mxu0
        %v2554 = vld [vmem:[#allocation3] sm:$0xe]
        %v2555 = vld [vmem:[#allocation3 + $0x8] sm:$0xe]
        %v2556 = vld [vmem:[#allocation3 + $0x10] sm:$0xe]
        %v2557 = vld [vmem:[#allocation3 + $0x18] sm:$0xe]
        %v2558 = vld [vmem:[#allocation3 + $0x20] sm:$0xe]
        %v2559 = vld [vmem:[#allocation3 + $0x28] sm:$0xe]
        %v2560 = vld [vmem:[#allocation3 + $0x30] sm:$0xe]
        %v2561 = vld [vmem:[#allocation3 + $0x38] sm:$0xe]
        %vm2578 = vcmask 1042432
        %vm2579 = vcmask 1046532
        %vm2580 = vmor %vm2578, %vm2579
        %v2581 = vrot.slane %v2554, 5
        %v2582 = vrot.slane %v2581, 4
        %v2583 = vrot.slane %v2149, 5
        %v2584 = vsel %vm2580, %v2582, %v2583
        %v2585 = vrot.slane %v2555, 5
        %v2586 = vrot.slane %v2585, 4
        %v2587 = vrot.slane %v2150, 5
        %v2588 = vsel %vm2580, %v2586, %v2587
        %v2589 = vrot.slane %v2556, 5
        %v2590 = vrot.slane %v2589, 4
        %v2591 = vrot.slane %v2151, 5
        %v2592 = vsel %vm2580, %v2590, %v2591
        %v2593 = vrot.slane %v2557, 5
        %v2594 = vrot.slane %v2593, 4
        %v2595 = vrot.slane %v2152, 5
        %v2596 = vsel %vm2580, %v2594, %v2595
        %v2597 = vrot.slane %v2558, 5
        %v2598 = vrot.slane %v2597, 4
        %v2599 = vrot.slane %v2153, 5
        %v2600 = vsel %vm2580, %v2598, %v2599
        %v2601 = vrot.slane %v2559, 5
        %v2602 = vrot.slane %v2601, 4
        %v2603 = vrot.slane %v2154, 5
        %v2604 = vsel %vm2580, %v2602, %v2603
        %v2605 = vrot.slane %v2560, 5
        %v2606 = vrot.slane %v2605, 4
        %v2607 = vrot.slane %v2155, 5
        %v2608 = vsel %vm2580, %v2606, %v2607
        %v2609 = vrot.slane %v2561, 5
        %v2610 = vrot.slane %v2609, 4
        %v2611 = vrot.slane %v2156, 5
        %v2612 = vsel %vm2580, %v2610, %v2611
        %v2613 = vld [vmem:[#allocation9 + $0x80] sm:$0xf]
        %v2614 = vld [vmem:[#allocation9 + $0x84] sm:$0xf]
        %v2615 = vld [vmem:[#allocation9 + $0x88] sm:$0xf]
        %v2616 = vld [vmem:[#allocation9 + $0x8c] sm:$0xf]
        %v2617 = vld [vmem:[#allocation9 + $0x90] sm:$0xf]
        %v2618 = vld [vmem:[#allocation9 + $0x94] sm:$0xf]
        %v2619 = vld [vmem:[#allocation9 + $0x98] sm:$0xf]
        %v2620 = vld [vmem:[#allocation9 + $0x9c] sm:$0xf]
        %v2621 = vld [vmem:[#allocation9 + $0xa0] sm:$0xf]
        %v2622 = vld [vmem:[#allocation9 + $0xa4] sm:$0xf]
        %v2623 = vld [vmem:[#allocation9 + $0xa8] sm:$0xf]
        %v2624 = vld [vmem:[#allocation9 + $0xac] sm:$0xf]
        %v2625 = vld [vmem:[#allocation9 + $0xb0] sm:$0xf]
        %v2626 = vld [vmem:[#allocation9 + $0xb4] sm:$0xf]
        %v2627 = vld [vmem:[#allocation9 + $0xb8] sm:$0xf]
        %v2628 = vld [vmem:[#allocation9 + $0xbc] sm:$0xf]
        %v2629 = vunpack.c.l.b16 %v2584
        %v2630 = vunpack.c.l.b16 %v2588
        %v2631 = vunpack.c.l.b16 %v2592
        %v2632 = vunpack.c.l.b16 %v2596
        %v2633 = vunpack.c.l.b16 %v2600
        %v2634 = vunpack.c.l.b16 %v2604
        %v2635 = vunpack.c.l.b16 %v2608
        %v2636 = vunpack.c.l.b16 %v2612
        %v2637 = vpack.c.b16 %v2630, %v2629
        %v2638 = vpack.c.b16 %v2632, %v2631
        %v2639 = vpack.c.b16 %v2634, %v2633
        %v2640 = vpack.c.b16 %v2636, %v2635
        %v2661 = vunpack.c.l.b16 %v2613
        %v2662 = vunpack.c.l.b16 %v2614
        %v2663 = vunpack.c.l.b16 %v2615
        %v2664 = vunpack.c.l.b16 %v2616
        %v2665 = vunpack.c.l.b16 %v2617
        %v2666 = vunpack.c.l.b16 %v2618
        %v2667 = vunpack.c.l.b16 %v2619
        %v2668 = vunpack.c.l.b16 %v2620
        %v2669 = vunpack.c.l.b16 %v2621
        %v2670 = vunpack.c.l.b16 %v2622
        %v2671 = vunpack.c.l.b16 %v2623
        %v2672 = vunpack.c.l.b16 %v2624
        %v2673 = vunpack.c.l.b16 %v2625
        %v2674 = vunpack.c.l.b16 %v2626
        %v2675 = vunpack.c.l.b16 %v2627
        %v2676 = vunpack.c.l.b16 %v2628
        %v2677 = vpack.c.b16 %v2662, %v2661
        %v2678 = vpack.c.b16 %v2664, %v2663
        %v2679 = vpack.c.b16 %v2666, %v2665
        %v2680 = vpack.c.b16 %v2668, %v2667
        %v2681 = vpack.c.b16 %v2670, %v2669
        %v2682 = vpack.c.b16 %v2672, %v2671
        %v2683 = vpack.c.b16 %v2674, %v2673
        %v2684 = vpack.c.b16 %v2676, %v2675
        %2693 = vmatprep.subr.bf16.mxu0 0
        %2694 = vmatpush1.bf16.msra.mxu0 %v2677
        %2695 = vmatprep.subr.bf16.mxu0 0
        %2696 = vmatpush1.bf16.msra.mxu0 %v2678
        %2697 = vmatprep.subr.bf16.mxu0 0
        %2698 = vmatpush1.bf16.msra.mxu0 %v2679
        %2699 = vmatprep.subr.bf16.mxu0 0
        %2700 = vmatpush1.bf16.msra.mxu0 %v2680
        %2701 = vmatprep.subr.bf16.mxu0 0
        %2702 = vmatpush1.bf16.msra.mxu0 %v2681
        %2703 = vmatprep.subr.bf16.mxu0 0
        %2704 = vmatpush1.bf16.msra.mxu0 %v2682
        %2705 = vmatprep.subr.bf16.mxu0 0
        %2706 = vmatpush1.bf16.msra.mxu0 %v2683
        %2707 = vmatprep.subr.bf16.mxu0 0
        %2708 = vmatpush1.bf16.msra.mxu0 %v2684
        %2709 = vmatprep.subr.bf16.mxu0 0
        %2710 = vmatpush1.bf16.msra.mxu0 0
        %2711 = vmatprep.subr.bf16.mxu0 0
        %2712 = vmatpush1.bf16.msra.mxu0 0
        %2713 = vmatprep.subr.bf16.mxu0 0
        %2714 = vmatpush1.bf16.msra.mxu0 0
        %2715 = vmatprep.subr.bf16.mxu0 0
        %2716 = vmatpush1.bf16.msra.mxu0 0
        %2717 = vmatprep.subr.bf16.mxu0 0
        %2718 = vmatpush1.bf16.msra.mxu0 0
        %2719 = vmatprep.subr.bf16.mxu0 0
        %2720 = vmatpush1.bf16.msra.mxu0 0
        %2721 = vmatprep.subr.bf16.mxu0 0
        %2722 = vmatpush1.bf16.msra.mxu0 0
        %2723 = vmatprep.subr.bf16.mxu0 0
        %2724 = vmatpush1.bf16.msra.mxu0 0
        %2725 = vmatprep.mubr.bf16.mxu0 0
        %2726 = vmatmul.mubr.bf16.gmra.mrb[0].mxu0 %v2637
        %v2727 = vpop.f32.mrb[0].mxu0
        %v2728 = vadd.f32 0.0, %v2727
        %v2729 = vpop.f32.mrb[0].mxu0
        %v2730 = vpop.f32.mrb[0].mxu0
        %v2731 = vadd.f32 0.0, %v2730
        %v2732 = vpop.f32.mrb[0].mxu0
        %2733 = vmatprep.mubr.bf16.mxu0 0
        %2734 = vmatmul.mubr.bf16.gmra.mrb[0].mxu0 %v2638
        %v2735 = vpop.f32.mrb[0].mxu0
        %v2736 = vadd.f32 0.0, %v2735
        %v2737 = vpop.f32.mrb[0].mxu0
        %v2738 = vpop.f32.mrb[0].mxu0
        %v2739 = vadd.f32 0.0, %v2738
        %v2740 = vpop.f32.mrb[0].mxu0
        %2741 = vmatprep.mubr.bf16.mxu0 0
        %2742 = vmatmul.mubr.bf16.gmra.mrb[0].mxu0 %v2639
        %v2743 = vpop.f32.mrb[0].mxu0
        %v2744 = vadd.f32 0.0, %v2743
        %v2745 = vpop.f32.mrb[0].mxu0
        %v2746 = vpop.f32.mrb[0].mxu0
        %v2747 = vadd.f32 0.0, %v2746
        %v2748 = vpop.f32.mrb[0].mxu0
        %2749 = vmatprep.mubr.bf16.mxu0 0
        %2750 = vmatmul.mubr.bf16.gmra.mrb[0].mxu0 %v2640
        %v2751 = vpop.f32.mrb[0].mxu0
        %v2752 = vadd.f32 0.0, %v2751
        %v2753 = vpop.f32.mrb[0].mxu0
        %v2754 = vpop.f32.mrb[0].mxu0
        %v2755 = vadd.f32 0.0, %v2754
        %v2756 = vpop.f32.mrb[0].mxu0
        %2757 = vdwg.mxu0
        %v2758 = vadd.f32 %v2524, %v2728
        %v2759 = vadd.f32 %v2527, %v2731
        %v2760 = vadd.f32 %v2532, %v2736
        %v2761 = vadd.f32 %v2535, %v2739
        %v2762 = vadd.f32 %v2540, %v2744
        %v2763 = vadd.f32 %v2543, %v2747
        %v2764 = vadd.f32 %v2548, %v2752
        %v2765 = vadd.f32 %v2551, %v2755
        %v2766 = vld [vmem:[%s2074] sm:$0xf]
        %v2767 = vld [vmem:[%s2074 + $0x8] sm:$0xf]
        %v2768 = vld [vmem:[%s2074 + $0x10] sm:$0xf]
        %v2769 = vld [vmem:[%s2074 + $0x18] sm:$0xf]
        %v2770 = vld [vmem:[%s2074 + $0x20] sm:$0xf]
        %v2771 = vld [vmem:[%s2074 + $0x28] sm:$0xf]
        %v2772 = vld [vmem:[%s2074 + $0x30] sm:$0xf]
        %v2773 = vld [vmem:[%s2074 + $0x38] sm:$0xf]
        %v2774 = vld [vmem:[#allocation9 + $0xc0] sm:$0xf]
        %v2775 = vld [vmem:[#allocation9 + $0xc4] sm:$0xf]
        %v2776 = vld [vmem:[#allocation9 + $0xc8] sm:$0xf]
        %v2777 = vld [vmem:[#allocation9 + $0xcc] sm:$0xf]
        %v2778 = vld [vmem:[#allocation9 + $0xd0] sm:$0xf]
        %v2779 = vld [vmem:[#allocation9 + $0xd4] sm:$0xf]
        %v2780 = vld [vmem:[#allocation9 + $0xd8] sm:$0xf]
        %v2781 = vld [vmem:[#allocation9 + $0xdc] sm:$0xf]
        %v2782 = vld [vmem:[#allocation9 + $0xe0] sm:$0xf]
        %v2783 = vld [vmem:[#allocation9 + $0xe4] sm:$0xf]
        %v2784 = vld [vmem:[#allocation9 + $0xe8] sm:$0xf]
        %v2785 = vld [vmem:[#allocation9 + $0xec] sm:$0xf]
        %v2786 = vld [vmem:[#allocation9 + $0xf0] sm:$0xf]
        %v2787 = vld [vmem:[#allocation9 + $0xf4] sm:$0xf]
        %v2788 = vld [vmem:[#allocation9 + $0xf8] sm:$0xf]
        %v2789 = vld [vmem:[#allocation9 + $0xfc] sm:$0xf]
        %v2798 = vunpack.c.l.b16 %v2766
        %v2799 = vunpack.c.l.b16 %v2767
        %v2800 = vunpack.c.l.b16 %v2768
        %v2801 = vunpack.c.l.b16 %v2769
        %v2802 = vunpack.c.l.b16 %v2770
        %v2803 = vunpack.c.l.b16 %v2771
        %v2804 = vunpack.c.l.b16 %v2772
        %v2805 = vunpack.c.l.b16 %v2773
        %v2806 = vpack.c.b16 %v2799, %v2798
        %v2807 = vpack.c.b16 %v2801, %v2800
        %v2808 = vpack.c.b16 %v2803, %v2802
        %v2809 = vpack.c.b16 %v2805, %v2804
        %v2830 = vunpack.c.l.b16 %v2774
        %v2831 = vunpack.c.l.b16 %v2775
        %v2832 = vunpack.c.l.b16 %v2776
        %v2833 = vunpack.c.l.b16 %v2777
        %v2834 = vunpack.c.l.b16 %v2778
        %v2835 = vunpack.c.l.b16 %v2779
        %v2836 = vunpack.c.l.b16 %v2780
        %v2837 = vunpack.c.l.b16 %v2781
        %v2838 = vunpack.c.l.b16 %v2782
        %v2839 = vunpack.c.l.b16 %v2783
        %v2840 = vunpack.c.l.b16 %v2784
        %v2841 = vunpack.c.l.b16 %v2785
        %v2842 = vunpack.c.l.b16 %v2786
        %v2843 = vunpack.c.l.b16 %v2787
        %v2844 = vunpack.c.l.b16 %v2788
        %v2845 = vunpack.c.l.b16 %v2789
        %v2846 = vpack.c.b16 %v2831, %v2830
        %v2847 = vpack.c.b16 %v2833, %v2832
        %v2848 = vpack.c.b16 %v2835, %v2834
        %v2849 = vpack.c.b16 %v2837, %v2836
        %v2850 = vpack.c.b16 %v2839, %v2838
        %v2851 = vpack.c.b16 %v2841, %v2840
        %v2852 = vpack.c.b16 %v2843, %v2842
        %v2853 = vpack.c.b16 %v2845, %v2844
        %2862 = vmatprep.subr.bf16.mxu0 0
        %2863 = vmatpush1.bf16.msra.mxu0 %v2846
        %2864 = vmatprep.subr.bf16.mxu0 0
        %2865 = vmatpush1.bf16.msra.mxu0 %v2847
        %2866 = vmatprep.subr.bf16.mxu0 0
        %2867 = vmatpush1.bf16.msra.mxu0 %v2848
        %2868 = vmatprep.subr.bf16.mxu0 0
        %2869 = vmatpush1.bf16.msra.mxu0 %v2849
        %2870 = vmatprep.subr.bf16.mxu0 0
        %2871 = vmatpush1.bf16.msra.mxu0 %v2850
        %2872 = vmatprep.subr.bf16.mxu0 0
        %2873 = vmatpush1.bf16.msra.mxu0 %v2851
        %2874 = vmatprep.subr.bf16.mxu0 0
        %2875 = vmatpush1.bf16.msra.mxu0 %v2852
        %2876 = vmatprep.subr.bf16.mxu0 0
        %2877 = vmatpush1.bf16.msra.mxu0 %v2853
        %2878 = vmatprep.subr.bf16.mxu0 0
        %2879 = vmatpush1.bf16.msra.mxu0 0
        %2880 = vmatprep.subr.bf16.mxu0 0
        %2881 = vmatpush1.bf16.msra.mxu0 0
        %2882 = vmatprep.subr.bf16.mxu0 0
        %2883 = vmatpush1.bf16.msra.mxu0 0
        %2884 = vmatprep.subr.bf16.mxu0 0
        %2885 = vmatpush1.bf16.msra.mxu0 0
        %2886 = vmatprep.subr.bf16.mxu0 0
        %2887 = vmatpush1.bf16.msra.mxu0 0
        %2888 = vmatprep.subr.bf16.mxu0 0
        %2889 = vmatpush1.bf16.msra.mxu0 0
        %2890 = vmatprep.subr.bf16.mxu0 0
        %2891 = vmatpush1.bf16.msra.mxu0 0
        %2892 = vmatprep.subr.bf16.mxu0 0
        %2893 = vmatpush1.bf16.msra.mxu0 0
        %2894 = vmatprep.mubr.bf16.mxu0 0
        %2895 = vmatmul.mubr.bf16.gmra.mrb[0].mxu0 %v2806
        %v2896 = vpop.f32.mrb[0].mxu0
        %v2897 = vadd.f32 0.0, %v2896
        %v2898 = vpop.f32.mrb[0].mxu0
        %v2899 = vpop.f32.mrb[0].mxu0
        %v2900 = vadd.f32 0.0, %v2899
        %v2901 = vpop.f32.mrb[0].mxu0
        %2902 = vmatprep.mubr.bf16.mxu0 0
        %2903 = vmatmul.mubr.bf16.gmra.mrb[0].mxu0 %v2807
        %v2904 = vpop.f32.mrb[0].mxu0
        %v2905 = vadd.f32 0.0, %v2904
        %v2906 = vpop.f32.mrb[0].mxu0
        %v2907 = vpop.f32.mrb[0].mxu0
        %v2908 = vadd.f32 0.0, %v2907
        %v2909 = vpop.f32.mrb[0].mxu0
        %2910 = vmatprep.mubr.bf16.mxu0 0
        %2911 = vmatmul.mubr.bf16.gmra.mrb[0].mxu0 %v2808
        %v2912 = vpop.f32.mrb[0].mxu0
        %v2913 = vadd.f32 0.0, %v2912
        %v2914 = vpop.f32.mrb[0].mxu0
        %v2915 = vpop.f32.mrb[0].mxu0
        %v2916 = vadd.f32 0.0, %v2915
        %v2917 = vpop.f32.mrb[0].mxu0
        %2918 = vmatprep.mubr.bf16.mxu0 0
        %2919 = vmatmul.mubr.bf16.gmra.mrb[0].mxu0 %v2809
        %v2920 = vpop.f32.mrb[0].mxu0
        %v2921 = vadd.f32 0.0, %v2920
        %v2922 = vpop.f32.mrb[0].mxu0
        %v2923 = vpop.f32.mrb[0].mxu0
        %v2924 = vadd.f32 0.0, %v2923
        %v2925 = vpop.f32.mrb[0].mxu0
        %2926 = vdwg.mxu0
        %v2927 = vadd.f32 %v2758, %v2897
        %v2928 = vadd.f32 %v2759, %v2900
        %v2929 = vadd.f32 %v2760, %v2905
        %v2930 = vadd.f32 %v2761, %v2908
        %v2931 = vadd.f32 %v2762, %v2913
        %v2932 = vadd.f32 %v2763, %v2916
        %v2933 = vadd.f32 %v2764, %v2921
        %v2934 = vadd.f32 %v2765, %v2924
        %v2935 = vld [vmem:[%s2074] sm:$0xf]
        %v2936 = vld [vmem:[%s2074 + $0x4] sm:$0x1]
        %v2937 = vld [vmem:[%s2074 + $0x8] sm:$0xf]
        %v2938 = vld [vmem:[%s2074 + $0xc] sm:$0x1]
        %v2939 = vld [vmem:[%s2074 + $0x10] sm:$0xf]
        %v2940 = vld [vmem:[%s2074 + $0x14] sm:$0x1]
        %v2941 = vld [vmem:[%s2074 + $0x18] sm:$0xf]
        %v2942 = vld [vmem:[%s2074 + $0x1c] sm:$0x1]
        %v2943 = vld [vmem:[%s2074 + $0x20] sm:$0xf]
        %v2944 = vld [vmem:[%s2074 + $0x24] sm:$0x1]
        %v2945 = vld [vmem:[%s2074 + $0x28] sm:$0xf]
        %v2946 = vld [vmem:[%s2074 + $0x2c] sm:$0x1]
        %v2947 = vld [vmem:[%s2074 + $0x30] sm:$0xf]
        %v2948 = vld [vmem:[%s2074 + $0x34] sm:$0x1]
        %v2949 = vld [vmem:[%s2074 + $0x38] sm:$0xf]
        %v2950 = vld [vmem:[%s2074 + $0x3c] sm:$0x1]
        %v2952 = vshrl.u32 %v2935, 16
        %v2954 = vrot.slane %v2952, 4
        %v2955 = vshll.u32 %v2935, 16
        %v2957 = vrot.slane %v2955, 5
        %v2958 = vor.u32 %v2954, %v2957
        %v2959 = vrot.slane %v2958, 4
        %v2961 = vshll.u32 %v2936, 16
        %v2963 = vrot.slane %v2961, 5
        %v2964 = vsel %vm2159, %v2959, %v2963
        %v2966 = vshrl.u32 %v2937, 16
        %v2968 = vrot.slane %v2966, 4
        %v2969 = vshll.u32 %v2937, 16
        %v2971 = vrot.slane %v2969, 5
        %v2972 = vor.u32 %v2968, %v2971
        %v2973 = vrot.slane %v2972, 4
        %v2975 = vshll.u32 %v2938, 16
        %v2977 = vrot.slane %v2975, 5
        %v2978 = vsel %vm2159, %v2973, %v2977
        %v2980 = vshrl.u32 %v2939, 16
        %v2982 = vrot.slane %v2980, 4
        %v2983 = vshll.u32 %v2939, 16
        %v2985 = vrot.slane %v2983, 5
        %v2986 = vor.u32 %v2982, %v2985
        %v2987 = vrot.slane %v2986, 4
        %v2989 = vshll.u32 %v2940, 16
        %v2991 = vrot.slane %v2989, 5
        %v2992 = vsel %vm2159, %v2987, %v2991
        %v2994 = vshrl.u32 %v2941, 16
        %v2996 = vrot.slane %v2994, 4
        %v2997 = vshll.u32 %v2941, 16
        %v2999 = vrot.slane %v2997, 5
        %v3000 = vor.u32 %v2996, %v2999
        %v3001 = vrot.slane %v3000, 4
        %v3003 = vshll.u32 %v2942, 16
        %v3005 = vrot.slane %v3003, 5
        %v3006 = vsel %vm2159, %v3001, %v3005
        %v3008 = vshrl.u32 %v2943, 16
        %v3010 = vrot.slane %v3008, 4
        %v3011 = vshll.u32 %v2943, 16
        %v3013 = vrot.slane %v3011, 5
        %v3014 = vor.u32 %v3010, %v3013
        %v3015 = vrot.slane %v3014, 4
        %v3017 = vshll.u32 %v2944, 16
        %v3019 = vrot.slane %v3017, 5
        %v3020 = vsel %vm2159, %v3015, %v3019
        %v3022 = vshrl.u32 %v2945, 16
        %v3024 = vrot.slane %v3022, 4
        %v3025 = vshll.u32 %v2945, 16
        %v3027 = vrot.slane %v3025, 5
        %v3028 = vor.u32 %v3024, %v3027
        %v3029 = vrot.slane %v3028, 4
        %v3031 = vshll.u32 %v2946, 16
        %v3033 = vrot.slane %v3031, 5
        %v3034 = vsel %vm2159, %v3029, %v3033
        %v3036 = vshrl.u32 %v2947, 16
        %v3038 = vrot.slane %v3036, 4
        %v3039 = vshll.u32 %v2947, 16
        %v3041 = vrot.slane %v3039, 5
        %v3042 = vor.u32 %v3038, %v3041
        %v3043 = vrot.slane %v3042, 4
        %v3045 = vshll.u32 %v2948, 16
        %v3047 = vrot.slane %v3045, 5
        %v3048 = vsel %vm2159, %v3043, %v3047
        %v3050 = vshrl.u32 %v2949, 16
        %v3052 = vrot.slane %v3050, 4
        %v3053 = vshll.u32 %v2949, 16
        %v3055 = vrot.slane %v3053, 5
        %v3056 = vor.u32 %v3052, %v3055
        %v3057 = vrot.slane %v3056, 4
        %v3059 = vshll.u32 %v2950, 16
        %v3061 = vrot.slane %v3059, 5
        %v3062 = vsel %vm2159, %v3057, %v3061
        %v3063 = vld [vmem:[#allocation9 + $0x100] sm:$0xf]
        %v3064 = vld [vmem:[#allocation9 + $0x104] sm:$0xf]
        %v3065 = vld [vmem:[#allocation9 + $0x108] sm:$0xf]
        %v3066 = vld [vmem:[#allocation9 + $0x10c] sm:$0xf]
        %v3067 = vld [vmem:[#allocation9 + $0x110] sm:$0xf]
        %v3068 = vld [vmem:[#allocation9 + $0x114] sm:$0xf]
        %v3069 = vld [vmem:[#allocation9 + $0x118] sm:$0xf]
        %v3070 = vld [vmem:[#allocation9 + $0x11c] sm:$0xf]
        %v3071 = vld [vmem:[#allocation9 + $0x120] sm:$0xf]
        %v3072 = vld [vmem:[#allocation9 + $0x124] sm:$0xf]
        %v3073 = vld [vmem:[#allocation9 + $0x128] sm:$0xf]
        %v3074 = vld [vmem:[#allocation9 + $0x12c] sm:$0xf]
        %v3075 = vld [vmem:[#allocation9 + $0x130] sm:$0xf]
        %v3076 = vld [vmem:[#allocation9 + $0x134] sm:$0xf]
        %v3077 = vld [vmem:[#allocation9 + $0x138] sm:$0xf]
        %v3078 = vld [vmem:[#allocation9 + $0x13c] sm:$0xf]
        %v3079 = vunpack.c.l.b16 %v2964
        %v3080 = vunpack.c.l.b16 %v2978
        %v3081 = vunpack.c.l.b16 %v2992
        %v3082 = vunpack.c.l.b16 %v3006
        %v3083 = vunpack.c.l.b16 %v3020
        %v3084 = vunpack.c.l.b16 %v3034
        %v3085 = vunpack.c.l.b16 %v3048
        %v3086 = vunpack.c.l.b16 %v3062
        %v3087 = vpack.c.b16 %v3080, %v3079
        %v3088 = vpack.c.b16 %v3082, %v3081
        %v3089 = vpack.c.b16 %v3084, %v3083
        %v3090 = vpack.c.b16 %v3086, %v3085
        %v3111 = vunpack.c.l.b16 %v3063
        %v3112 = vunpack.c.l.b16 %v3064
        %v3113 = vunpack.c.l.b16 %v3065
        %v3114 = vunpack.c.l.b16 %v3066
        %v3115 = vunpack.c.l.b16 %v3067
        %v3116 = vunpack.c.l.b16 %v3068
        %v3117 = vunpack.c.l.b16 %v3069
        %v3118 = vunpack.c.l.b16 %v3070
        %v3119 = vunpack.c.l.b16 %v3071
        %v3120 = vunpack.c.l.b16 %v3072
        %v3121 = vunpack.c.l.b16 %v3073
        %v3122 = vunpack.c.l.b16 %v3074
        %v3123 = vunpack.c.l.b16 %v3075
        %v3124 = vunpack.c.l.b16 %v3076
        %v3125 = vunpack.c.l.b16 %v3077
        %v3126 = vunpack.c.l.b16 %v3078
        %v3127 = vpack.c.b16 %v3112, %v3111
        %v3128 = vpack.c.b16 %v3114, %v3113
        %v3129 = vpack.c.b16 %v3116, %v3115
        %v3130 = vpack.c.b16 %v3118, %v3117
        %v3131 = vpack.c.b16 %v3120, %v3119
        %v3132 = vpack.c.b16 %v3122, %v3121
        %v3133 = vpack.c.b16 %v3124, %v3123
        %v3134 = vpack.c.b16 %v3126, %v3125
        %3143 = vmatprep.subr.bf16.mxu0 0
        %3144 = vmatpush1.bf16.msra.mxu0 %v3127
        %3145 = vmatprep.subr.bf16.mxu0 0
        %3146 = vmatpush1.bf16.msra.mxu0 %v3128
        %3147 = vmatprep.subr.bf16.mxu0 0
        %3148 = vmatpush1.bf16.msra.mxu0 %v3129
        %3149 = vmatprep.subr.bf16.mxu0 0
        %3150 = vmatpush1.bf16.msra.mxu0 %v3130
        %3151 = vmatprep.subr.bf16.mxu0 0
        %3152 = vmatpush1.bf16.msra.mxu0 %v3131
        %3153 = vmatprep.subr.bf16.mxu0 0
        %3154 = vmatpush1.bf16.msra.mxu0 %v3132
        %3155 = vmatprep.subr.bf16.mxu0 0
        %3156 = vmatpush1.bf16.msra.mxu0 %v3133
        %3157 = vmatprep.subr.bf16.mxu0 0
        %3158 = vmatpush1.bf16.msra.mxu0 %v3134
        %3159 = vmatprep.subr.bf16.mxu0 0
        %3160 = vmatpush1.bf16.msra.mxu0 0
        %3161 = vmatprep.subr.bf16.mxu0 0
        %3162 = vmatpush1.bf16.msra.mxu0 0
        %3163 = vmatprep.subr.bf16.mxu0 0
        %3164 = vmatpush1.bf16.msra.mxu0 0
        %3165 = vmatprep.subr.bf16.mxu0 0
        %3166 = vmatpush1.bf16.msra.mxu0 0
        %3167 = vmatprep.subr.bf16.mxu0 0
        %3168 = vmatpush1.bf16.msra.mxu0 0
        %3169 = vmatprep.subr.bf16.mxu0 0
        %3170 = vmatpush1.bf16.msra.mxu0 0
        %3171 = vmatprep.subr.bf16.mxu0 0
        %3172 = vmatpush1.bf16.msra.mxu0 0
        %3173 = vmatprep.subr.bf16.mxu0 0
        %3174 = vmatpush1.bf16.msra.mxu0 0
        %3175 = vmatprep.mubr.bf16.mxu0 0
        %3176 = vmatmul.mubr.bf16.gmra.mrb[0].mxu0 %v3087
        %v3177 = vpop.f32.mrb[0].mxu0
        %v3178 = vadd.f32 0.0, %v3177
        %v3179 = vpop.f32.mrb[0].mxu0
        %v3180 = vpop.f32.mrb[0].mxu0
        %v3181 = vadd.f32 0.0, %v3180
        %v3182 = vpop.f32.mrb[0].mxu0
        %3183 = vmatprep.mubr.bf16.mxu0 0
        %3184 = vmatmul.mubr.bf16.gmra.mrb[0].mxu0 %v3088
        %v3185 = vpop.f32.mrb[0].mxu0
        %v3186 = vadd.f32 0.0, %v3185
        %v3187 = vpop.f32.mrb[0].mxu0
        %v3188 = vpop.f32.mrb[0].mxu0
        %v3189 = vadd.f32 0.0, %v3188
        %v3190 = vpop.f32.mrb[0].mxu0
        %3191 = vmatprep.mubr.bf16.mxu0 0
        %3192 = vmatmul.mubr.bf16.gmra.mrb[0].mxu0 %v3089
        %v3193 = vpop.f32.mrb[0].mxu0
        %v3194 = vadd.f32 0.0, %v3193
        %v3195 = vpop.f32.mrb[0].mxu0
        %v3196 = vpop.f32.mrb[0].mxu0
        %v3197 = vadd.f32 0.0, %v3196
        %v3198 = vpop.f32.mrb[0].mxu0
        %3199 = vmatprep.mubr.bf16.mxu0 0
        %3200 = vmatmul.mubr.bf16.gmra.mrb[0].mxu0 %v3090
        %v3201 = vpop.f32.mrb[0].mxu0
        %v3202 = vadd.f32 0.0, %v3201
        %v3203 = vpop.f32.mrb[0].mxu0
        %v3204 = vpop.f32.mrb[0].mxu0
        %v3205 = vadd.f32 0.0, %v3204
        %v3206 = vpop.f32.mrb[0].mxu0
        %3207 = vdwg.mxu0
        %v3208 = vadd.f32 %v2927, %v3178
        %v3209 = vadd.f32 %v2928, %v3181
        %v3210 = vadd.f32 %v2929, %v3186
        %v3211 = vadd.f32 %v2930, %v3189
        %v3212 = vadd.f32 %v2931, %v3194
        %v3213 = vadd.f32 %v2932, %v3197
        %v3214 = vadd.f32 %v2933, %v3202
        %v3215 = vadd.f32 %v2934, %v3205
        %v3216 = vld [vmem:[%s2074] sm:$0xe]
        %v3217 = vld [vmem:[%s2074 + $0x8] sm:$0xe]
        %v3218 = vld [vmem:[%s2074 + $0x10] sm:$0xe]
        %v3219 = vld [vmem:[%s2074 + $0x18] sm:$0xe]
        %v3220 = vld [vmem:[%s2074 + $0x20] sm:$0xe]
        %v3221 = vld [vmem:[%s2074 + $0x28] sm:$0xe]
        %v3222 = vld [vmem:[%s2074 + $0x30] sm:$0xe]
        %v3223 = vld [vmem:[%s2074 + $0x38] sm:$0xe]
        %v3240 = vrot.slane %v3216, 5
        %v3241 = vrot.slane %v3240, 4
        %v3242 = vrot.slane %v2936, 5
        %v3243 = vsel %vm2580, %v3241, %v3242
        %v3244 = vrot.slane %v3217, 5
        %v3245 = vrot.slane %v3244, 4
        %v3246 = vrot.slane %v2938, 5
        %v3247 = vsel %vm2580, %v3245, %v3246
        %v3248 = vrot.slane %v3218, 5
        %v3249 = vrot.slane %v3248, 4
        %v3250 = vrot.slane %v2940, 5
        %v3251 = vsel %vm2580, %v3249, %v3250
        %v3252 = vrot.slane %v3219, 5
        %v3253 = vrot.slane %v3252, 4
        %v3254 = vrot.slane %v2942, 5
        %v3255 = vsel %vm2580, %v3253, %v3254
        %v3256 = vrot.slane %v3220, 5
        %v3257 = vrot.slane %v3256, 4
        %v3258 = vrot.slane %v2944, 5
        %v3259 = vsel %vm2580, %v3257, %v3258
        %v3260 = vrot.slane %v3221, 5
        %v3261 = vrot.slane %v3260, 4
        %v3262 = vrot.slane %v2946, 5
        %v3263 = vsel %vm2580, %v3261, %v3262
        %v3264 = vrot.slane %v3222, 5
        %v3265 = vrot.slane %v3264, 4
        %v3266 = vrot.slane %v2948, 5
        %v3267 = vsel %vm2580, %v3265, %v3266
        %v3268 = vrot.slane %v3223, 5
        %v3269 = vrot.slane %v3268, 4
        %v3270 = vrot.slane %v2950, 5
        %v3271 = vsel %vm2580, %v3269, %v3270
        %v3272 = vld [vmem:[#allocation9 + $0x140] sm:$0xf]
        %v3273 = vld [vmem:[#allocation9 + $0x144] sm:$0xf]
        %v3274 = vld [vmem:[#allocation9 + $0x148] sm:$0xf]
        %v3275 = vld [vmem:[#allocation9 + $0x14c] sm:$0xf]
        %v3276 = vld [vmem:[#allocation9 + $0x150] sm:$0xf]
        %v3277 = vld [vmem:[#allocation9 + $0x154] sm:$0xf]
        %v3278 = vld [vmem:[#allocation9 + $0x158] sm:$0xf]
        %v3279 = vld [vmem:[#allocation9 + $0x15c] sm:$0xf]
        %v3280 = vld [vmem:[#allocation9 + $0x160] sm:$0xf]
        %v3281 = vld [vmem:[#allocation9 + $0x164] sm:$0xf]
        %v3282 = vld [vmem:[#allocation9 + $0x168] sm:$0xf]
        %v3283 = vld [vmem:[#allocation9 + $0x16c] sm:$0xf]
        %v3284 = vld [vmem:[#allocation9 + $0x170] sm:$0xf]
        %v3285 = vld [vmem:[#allocation9 + $0x174] sm:$0xf]
        %v3286 = vld [vmem:[#allocation9 + $0x178] sm:$0xf]
        %v3287 = vld [vmem:[#allocation9 + $0x17c] sm:$0xf]
        %v3288 = vunpack.c.l.b16 %v3243
        %v3289 = vunpack.c.l.b16 %v3247
        %v3290 = vunpack.c.l.b16 %v3251
        %v3291 = vunpack.c.l.b16 %v3255
        %v3292 = vunpack.c.l.b16 %v3259
        %v3293 = vunpack.c.l.b16 %v3263
        %v3294 = vunpack.c.l.b16 %v3267
        %v3295 = vunpack.c.l.b16 %v3271
        %v3296 = vpack.c.b16 %v3289, %v3288
        %v3297 = vpack.c.b16 %v3291, %v3290
        %v3298 = vpack.c.b16 %v3293, %v3292
        %v3299 = vpack.c.b16 %v3295, %v3294
        %v3320 = vunpack.c.l.b16 %v3272
        %v3321 = vunpack.c.l.b16 %v3273
        %v3322 = vunpack.c.l.b16 %v3274
        %v3323 = vunpack.c.l.b16 %v3275
        %v3324 = vunpack.c.l.b16 %v3276
        %v3325 = vunpack.c.l.b16 %v3277
        %v3326 = vunpack.c.l.b16 %v3278
        %v3327 = vunpack.c.l.b16 %v3279
        %v3328 = vunpack.c.l.b16 %v3280
        %v3329 = vunpack.c.l.b16 %v3281
        %v3330 = vunpack.c.l.b16 %v3282
        %v3331 = vunpack.c.l.b16 %v3283
        %v3332 = vunpack.c.l.b16 %v3284
        %v3333 = vunpack.c.l.b16 %v3285
        %v3334 = vunpack.c.l.b16 %v3286
        %v3335 = vunpack.c.l.b16 %v3287
        %v3336 = vpack.c.b16 %v3321, %v3320
        %v3337 = vpack.c.b16 %v3323, %v3322
        %v3338 = vpack.c.b16 %v3325, %v3324
        %v3339 = vpack.c.b16 %v3327, %v3326
        %v3340 = vpack.c.b16 %v3329, %v3328
        %v3341 = vpack.c.b16 %v3331, %v3330
        %v3342 = vpack.c.b16 %v3333, %v3332
        %v3343 = vpack.c.b16 %v3335, %v3334
        %3352 = vmatprep.subr.bf16.mxu0 0
        %3353 = vmatpush1.bf16.msra.mxu0 %v3336
        %3354 = vmatprep.subr.bf16.mxu0 0
        %3355 = vmatpush1.bf16.msra.mxu0 %v3337
        %3356 = vmatprep.subr.bf16.mxu0 0
        %3357 = vmatpush1.bf16.msra.mxu0 %v3338
        %3358 = vmatprep.subr.bf16.mxu0 0
        %3359 = vmatpush1.bf16.msra.mxu0 %v3339
        %3360 = vmatprep.subr.bf16.mxu0 0
        %3361 = vmatpush1.bf16.msra.mxu0 %v3340
        %3362 = vmatprep.subr.bf16.mxu0 0
        %3363 = vmatpush1.bf16.msra.mxu0 %v3341
        %3364 = vmatprep.subr.bf16.mxu0 0
        %3365 = vmatpush1.bf16.msra.mxu0 %v3342
        %3366 = vmatprep.subr.bf16.mxu0 0
        %3367 = vmatpush1.bf16.msra.mxu0 %v3343
        %3368 = vmatprep.subr.bf16.mxu0 0
        %3369 = vmatpush1.bf16.msra.mxu0 0
        %3370 = vmatprep.subr.bf16.mxu0 0
        %3371 = vmatpush1.bf16.msra.mxu0 0
        %3372 = vmatprep.subr.bf16.mxu0 0
        %3373 = vmatpush1.bf16.msra.mxu0 0
        %3374 = vmatprep.subr.bf16.mxu0 0
        %3375 = vmatpush1.bf16.msra.mxu0 0
        %3376 = vmatprep.subr.bf16.mxu0 0
        %3377 = vmatpush1.bf16.msra.mxu0 0
        %3378 = vmatprep.subr.bf16.mxu0 0
        %3379 = vmatpush1.bf16.msra.mxu0 0
        %3380 = vmatprep.subr.bf16.mxu0 0
        %3381 = vmatpush1.bf16.msra.mxu0 0
        %3382 = vmatprep.subr.bf16.mxu0 0
        %3383 = vmatpush1.bf16.msra.mxu0 0
        %3384 = vmatprep.mubr.bf16.mxu0 0
        %3385 = vmatmul.mubr.bf16.gmra.mrb[0].mxu0 %v3296
        %v3386 = vpop.f32.mrb[0].mxu0
        %v3387 = vadd.f32 0.0, %v3386
        %v3388 = vpop.f32.mrb[0].mxu0
        %v3389 = vpop.f32.mrb[0].mxu0
        %v3390 = vadd.f32 0.0, %v3389
        %v3391 = vpop.f32.mrb[0].mxu0
        %3392 = vmatprep.mubr.bf16.mxu0 0
        %3393 = vmatmul.mubr.bf16.gmra.mrb[0].mxu0 %v3297
        %v3394 = vpop.f32.mrb[0].mxu0
        %v3395 = vadd.f32 0.0, %v3394
        %v3396 = vpop.f32.mrb[0].mxu0
        %v3397 = vpop.f32.mrb[0].mxu0
        %v3398 = vadd.f32 0.0, %v3397
        %v3399 = vpop.f32.mrb[0].mxu0
        %3400 = vmatprep.mubr.bf16.mxu0 0
        %3401 = vmatmul.mubr.bf16.gmra.mrb[0].mxu0 %v3298
        %v3402 = vpop.f32.mrb[0].mxu0
        %v3403 = vadd.f32 0.0, %v3402
        %v3404 = vpop.f32.mrb[0].mxu0
        %v3405 = vpop.f32.mrb[0].mxu0
        %v3406 = vadd.f32 0.0, %v3405
        %v3407 = vpop.f32.mrb[0].mxu0
        %3408 = vmatprep.mubr.bf16.mxu0 0
        %3409 = vmatmul.mubr.bf16.gmra.mrb[0].mxu0 %v3299
        %v3410 = vpop.f32.mrb[0].mxu0
        %v3411 = vadd.f32 0.0, %v3410
        %v3412 = vpop.f32.mrb[0].mxu0
        %v3413 = vpop.f32.mrb[0].mxu0
        %v3414 = vadd.f32 0.0, %v3413
        %v3415 = vpop.f32.mrb[0].mxu0
        %3416 = vdwg.mxu0
        %v3417 = vadd.f32 %v3208, %v3387
        %v3418 = vadd.f32 %v3209, %v3390
        %v3419 = vadd.f32 %v3210, %v3395
        %v3420 = vadd.f32 %v3211, %v3398
        %v3421 = vadd.f32 %v3212, %v3403
        %v3422 = vadd.f32 %v3213, %v3406
        %v3423 = vadd.f32 %v3214, %v3411
        %v3424 = vadd.f32 %v3215, %v3414
        %s3425 = scalar_lea.vmem [#allocation3], 16
        %v3426 = vld [vmem:[%s3425] sm:$0xf]
        %v3427 = vld [vmem:[%s3425 + $0x8] sm:$0xf]
        %v3428 = vld [vmem:[%s3425 + $0x10] sm:$0xf]
        %v3429 = vld [vmem:[%s3425 + $0x18] sm:$0xf]
        %v3430 = vld [vmem:[%s3425 + $0x20] sm:$0xf]
        %v3431 = vld [vmem:[%s3425 + $0x28] sm:$0xf]
        %v3432 = vld [vmem:[%s3425 + $0x30] sm:$0xf]
        %v3433 = vld [vmem:[%s3425 + $0x38] sm:$0xf]
        %v3434 = vld [vmem:[#allocation9 + $0x180] sm:$0xf]
        %v3435 = vld [vmem:[#allocation9 + $0x184] sm:$0xf]
        %v3436 = vld [vmem:[#allocation9 + $0x188] sm:$0xf]
        %v3437 = vld [vmem:[#allocation9 + $0x18c] sm:$0xf]
        %v3438 = vld [vmem:[#allocation9 + $0x190] sm:$0xf]
        %v3439 = vld [vmem:[#allocation9 + $0x194] sm:$0xf]
        %v3440 = vld [vmem:[#allocation9 + $0x198] sm:$0xf]
        %v3441 = vld [vmem:[#allocation9 + $0x19c] sm:$0xf]
        %v3442 = vld [vmem:[#allocation9 + $0x1a0] sm:$0xf]
        %v3443 = vld [vmem:[#allocation9 + $0x1a4] sm:$0xf]
        %v3444 = vld [vmem:[#allocation9 + $0x1a8] sm:$0xf]
        %v3445 = vld [vmem:[#allocation9 + $0x1ac] sm:$0xf]
        %v3446 = vld [vmem:[#allocation9 + $0x1b0] sm:$0xf]
        %v3447 = vld [vmem:[#allocation9 + $0x1b4] sm:$0xf]
        %v3448 = vld [vmem:[#allocation9 + $0x1b8] sm:$0xf]
        %v3449 = vld [vmem:[#allocation9 + $0x1bc] sm:$0xf]
        %v3458 = vunpack.c.l.b16 %v3426
        %v3459 = vunpack.c.l.b16 %v3427
        %v3460 = vunpack.c.l.b16 %v3428
        %v3461 = vunpack.c.l.b16 %v3429
        %v3462 = vunpack.c.l.b16 %v3430
        %v3463 = vunpack.c.l.b16 %v3431
        %v3464 = vunpack.c.l.b16 %v3432
        %v3465 = vunpack.c.l.b16 %v3433
        %v3466 = vpack.c.b16 %v3459, %v3458
        %v3467 = vpack.c.b16 %v3461, %v3460
        %v3468 = vpack.c.b16 %v3463, %v3462
        %v3469 = vpack.c.b16 %v3465, %v3464
        %v3490 = vunpack.c.l.b16 %v3434
        %v3491 = vunpack.c.l.b16 %v3435
        %v3492 = vunpack.c.l.b16 %v3436
        %v3493 = vunpack.c.l.b16 %v3437
        %v3494 = vunpack.c.l.b16 %v3438
        %v3495 = vunpack.c.l.b16 %v3439
        %v3496 = vunpack.c.l.b16 %v3440
        %v3497 = vunpack.c.l.b16 %v3441
        %v3498 = vunpack.c.l.b16 %v3442
        %v3499 = vunpack.c.l.b16 %v3443
        %v3500 = vunpack.c.l.b16 %v3444
        %v3501 = vunpack.c.l.b16 %v3445
        %v3502 = vunpack.c.l.b16 %v3446
        %v3503 = vunpack.c.l.b16 %v3447
        %v3504 = vunpack.c.l.b16 %v3448
        %v3505 = vunpack.c.l.b16 %v3449
        %v3506 = vpack.c.b16 %v3491, %v3490
        %v3507 = vpack.c.b16 %v3493, %v3492
        %v3508 = vpack.c.b16 %v3495, %v3494
        %v3509 = vpack.c.b16 %v3497, %v3496
        %v3510 = vpack.c.b16 %v3499, %v3498
        %v3511 = vpack.c.b16 %v3501, %v3500
        %v3512 = vpack.c.b16 %v3503, %v3502
        %v3513 = vpack.c.b16 %v3505, %v3504
        %3522 = vmatprep.subr.bf16.mxu0 0
        %3523 = vmatpush1.bf16.msra.mxu0 %v3506
        %3524 = vmatprep.subr.bf16.mxu0 0
        %3525 = vmatpush1.bf16.msra.mxu0 %v3507
        %3526 = vmatprep.subr.bf16.mxu0 0
        %3527 = vmatpush1.bf16.msra.mxu0 %v3508
        %3528 = vmatprep.subr.bf16.mxu0 0
        %3529 = vmatpush1.bf16.msra.mxu0 %v3509
        %3530 = vmatprep.subr.bf16.mxu0 0
        %3531 = vmatpush1.bf16.msra.mxu0 %v3510
        %3532 = vmatprep.subr.bf16.mxu0 0
        %3533 = vmatpush1.bf16.msra.mxu0 %v3511
        %3534 = vmatprep.subr.bf16.mxu0 0
        %3535 = vmatpush1.bf16.msra.mxu0 %v3512
        %3536 = vmatprep.subr.bf16.mxu0 0
        %3537 = vmatpush1.bf16.msra.mxu0 %v3513
        %3538 = vmatprep.subr.bf16.mxu0 0
        %3539 = vmatpush1.bf16.msra.mxu0 0
        %3540 = vmatprep.subr.bf16.mxu0 0
        %3541 = vmatpush1.bf16.msra.mxu0 0
        %3542 = vmatprep.subr.bf16.mxu0 0
        %3543 = vmatpush1.bf16.msra.mxu0 0
        %3544 = vmatprep.subr.bf16.mxu0 0
        %3545 = vmatpush1.bf16.msra.mxu0 0
        %3546 = vmatprep.subr.bf16.mxu0 0
        %3547 = vmatpush1.bf16.msra.mxu0 0
        %3548 = vmatprep.subr.bf16.mxu0 0
        %3549 = vmatpush1.bf16.msra.mxu0 0
        %3550 = vmatprep.subr.bf16.mxu0 0
        %3551 = vmatpush1.bf16.msra.mxu0 0
        %3552 = vmatprep.subr.bf16.mxu0 0
        %3553 = vmatpush1.bf16.msra.mxu0 0
        %3554 = vmatprep.mubr.bf16.mxu0 0
        %3555 = vmatmul.mubr.bf16.gmra.mrb[0].mxu0 %v3466
        %v3556 = vpop.f32.mrb[0].mxu0
        %v3557 = vadd.f32 0.0, %v3556
        %v3558 = vpop.f32.mrb[0].mxu0
        %v3559 = vpop.f32.mrb[0].mxu0
        %v3560 = vadd.f32 0.0, %v3559
        %v3561 = vpop.f32.mrb[0].mxu0
        %3562 = vmatprep.mubr.bf16.mxu0 0
        %3563 = vmatmul.mubr.bf16.gmra.mrb[0].mxu0 %v3467
        %v3564 = vpop.f32.mrb[0].mxu0
        %v3565 = vadd.f32 0.0, %v3564
        %v3566 = vpop.f32.mrb[0].mxu0
        %v3567 = vpop.f32.mrb[0].mxu0
        %v3568 = vadd.f32 0.0, %v3567
        %v3569 = vpop.f32.mrb[0].mxu0
        %3570 = vmatprep.mubr.bf16.mxu0 0
        %3571 = vmatmul.mubr.bf16.gmra.mrb[0].mxu0 %v3468
        %v3572 = vpop.f32.mrb[0].mxu0
        %v3573 = vadd.f32 0.0, %v3572
        %v3574 = vpop.f32.mrb[0].mxu0
        %v3575 = vpop.f32.mrb[0].mxu0
        %v3576 = vadd.f32 0.0, %v3575
        %v3577 = vpop.f32.mrb[0].mxu0
        %3578 = vmatprep.mubr.bf16.mxu0 0
        %3579 = vmatmul.mubr.bf16.gmra.mrb[0].mxu0 %v3469
        %v3580 = vpop.f32.mrb[0].mxu0
        %v3581 = vadd.f32 0.0, %v3580
        %v3582 = vpop.f32.mrb[0].mxu0
        %v3583 = vpop.f32.mrb[0].mxu0
        %v3584 = vadd.f32 0.0, %v3583
        %v3585 = vpop.f32.mrb[0].mxu0
        %3586 = vdwg.mxu0
        %v3587 = vadd.f32 %v3417, %v3557
        %v3588 = vadd.f32 %v3418, %v3560
        %v3589 = vadd.f32 %v3419, %v3565
        %v3590 = vadd.f32 %v3420, %v3568
        %v3591 = vadd.f32 %v3421, %v3573
        %v3592 = vadd.f32 %v3422, %v3576
        %v3593 = vadd.f32 %v3423, %v3581
        %v3594 = vadd.f32 %v3424, %v3584
        %v3595 = vld [vmem:[%s3425] sm:$0xf]
        %v3596 = vld [vmem:[%s3425 + $0x4] sm:$0x1]
        %v3597 = vld [vmem:[%s3425 + $0x8] sm:$0xf]
        %v3598 = vld [vmem:[%s3425 + $0xc] sm:$0x1]
        %v3599 = vld [vmem:[%s3425 + $0x10] sm:$0xf]
        %v3600 = vld [vmem:[%s3425 + $0x14] sm:$0x1]
        %v3601 = vld [vmem:[%s3425 + $0x18] sm:$0xf]
        %v3602 = vld [vmem:[%s3425 + $0x1c] sm:$0x1]
        %v3603 = vld [vmem:[%s3425 + $0x20] sm:$0xf]
        %v3604 = vld [vmem:[%s3425 + $0x24] sm:$0x1]
        %v3605 = vld [vmem:[%s3425 + $0x28] sm:$0xf]
        %v3606 = vld [vmem:[%s3425 + $0x2c] sm:$0x1]
        %v3607 = vld [vmem:[%s3425 + $0x30] sm:$0xf]
        %v3608 = vld [vmem:[%s3425 + $0x34] sm:$0x1]
        %v3609 = vld [vmem:[%s3425 + $0x38] sm:$0xf]
        %v3610 = vld [vmem:[%s3425 + $0x3c] sm:$0x1]
        %v3612 = vshrl.u32 %v3595, 16
        %v3614 = vrot.slane %v3612, 4
        %v3615 = vshll.u32 %v3595, 16
        %v3617 = vrot.slane %v3615, 5
        %v3618 = vor.u32 %v3614, %v3617
        %v3619 = vrot.slane %v3618, 4
        %v3621 = vshll.u32 %v3596, 16
        %v3623 = vrot.slane %v3621, 5
        %v3624 = vsel %vm2159, %v3619, %v3623
        %v3626 = vshrl.u32 %v3597, 16
        %v3628 = vrot.slane %v3626, 4
        %v3629 = vshll.u32 %v3597, 16
        %v3631 = vrot.slane %v3629, 5
        %v3632 = vor.u32 %v3628, %v3631
        %v3633 = vrot.slane %v3632, 4
        %v3635 = vshll.u32 %v3598, 16
        %v3637 = vrot.slane %v3635, 5
        %v3638 = vsel %vm2159, %v3633, %v3637
        %v3640 = vshrl.u32 %v3599, 16
        %v3642 = vrot.slane %v3640, 4
        %v3643 = vshll.u32 %v3599, 16
        %v3645 = vrot.slane %v3643, 5
        %v3646 = vor.u32 %v3642, %v3645
        %v3647 = vrot.slane %v3646, 4
        %v3649 = vshll.u32 %v3600, 16
        %v3651 = vrot.slane %v3649, 5
        %v3652 = vsel %vm2159, %v3647, %v3651
        %v3654 = vshrl.u32 %v3601, 16
        %v3656 = vrot.slane %v3654, 4
        %v3657 = vshll.u32 %v3601, 16
        %v3659 = vrot.slane %v3657, 5
        %v3660 = vor.u32 %v3656, %v3659
        %v3661 = vrot.slane %v3660, 4
        %v3663 = vshll.u32 %v3602, 16
        %v3665 = vrot.slane %v3663, 5
        %v3666 = vsel %vm2159, %v3661, %v3665
        %v3668 = vshrl.u32 %v3603, 16
        %v3670 = vrot.slane %v3668, 4
        %v3671 = vshll.u32 %v3603, 16
        %v3673 = vrot.slane %v3671, 5
        %v3674 = vor.u32 %v3670, %v3673
        %v3675 = vrot.slane %v3674, 4
        %v3677 = vshll.u32 %v3604, 16
        %v3679 = vrot.slane %v3677, 5
        %v3680 = vsel %vm2159, %v3675, %v3679
        %v3682 = vshrl.u32 %v3605, 16
        %v3684 = vrot.slane %v3682, 4
        %v3685 = vshll.u32 %v3605, 16
        %v3687 = vrot.slane %v3685, 5
        %v3688 = vor.u32 %v3684, %v3687
        %v3689 = vrot.slane %v3688, 4
        %v3691 = vshll.u32 %v3606, 16
        %v3693 = vrot.slane %v3691, 5
        %v3694 = vsel %vm2159, %v3689, %v3693
        %v3696 = vshrl.u32 %v3607, 16
        %v3698 = vrot.slane %v3696, 4
        %v3699 = vshll.u32 %v3607, 16
        %v3701 = vrot.slane %v3699, 5
        %v3702 = vor.u32 %v3698, %v3701
        %v3703 = vrot.slane %v3702, 4
        %v3705 = vshll.u32 %v3608, 16
        %v3707 = vrot.slane %v3705, 5
        %v3708 = vsel %vm2159, %v3703, %v3707
        %v3710 = vshrl.u32 %v3609, 16
        %v3712 = vrot.slane %v3710, 4
        %v3713 = vshll.u32 %v3609, 16
        %v3715 = vrot.slane %v3713, 5
        %v3716 = vor.u32 %v3712, %v3715
        %v3717 = vrot.slane %v3716, 4
        %v3719 = vshll.u32 %v3610, 16
        %v3721 = vrot.slane %v3719, 5
        %v3722 = vsel %vm2159, %v3717, %v3721
        %v3723 = vld [vmem:[#allocation9 + $0x1c0] sm:$0xf]
        %v3724 = vld [vmem:[#allocation9 + $0x1c4] sm:$0xf]
        %v3725 = vld [vmem:[#allocation9 + $0x1c8] sm:$0xf]
        %v3726 = vld [vmem:[#allocation9 + $0x1cc] sm:$0xf]
        %v3727 = vld [vmem:[#allocation9 + $0x1d0] sm:$0xf]
        %v3728 = vld [vmem:[#allocation9 + $0x1d4] sm:$0xf]
        %v3729 = vld [vmem:[#allocation9 + $0x1d8] sm:$0xf]
        %v3730 = vld [vmem:[#allocation9 + $0x1dc] sm:$0xf]
        %v3731 = vld [vmem:[#allocation9 + $0x1e0] sm:$0xf]
        %v3732 = vld [vmem:[#allocation9 + $0x1e4] sm:$0xf]
        %v3733 = vld [vmem:[#allocation9 + $0x1e8] sm:$0xf]
        %v3734 = vld [vmem:[#allocation9 + $0x1ec] sm:$0xf]
        %v3735 = vld [vmem:[#allocation9 + $0x1f0] sm:$0xf]
        %v3736 = vld [vmem:[#allocation9 + $0x1f4] sm:$0xf]
        %v3737 = vld [vmem:[#allocation9 + $0x1f8] sm:$0xf]
        %v3738 = vld [vmem:[#allocation9 + $0x1fc] sm:$0xf]
        %v3739 = vunpack.c.l.b16 %v3624
        %v3740 = vunpack.c.l.b16 %v3638
        %v3741 = vunpack.c.l.b16 %v3652
        %v3742 = vunpack.c.l.b16 %v3666
        %v3743 = vunpack.c.l.b16 %v3680
        %v3744 = vunpack.c.l.b16 %v3694
        %v3745 = vunpack.c.l.b16 %v3708
        %v3746 = vunpack.c.l.b16 %v3722
        %v3747 = vpack.c.b16 %v3740, %v3739
        %v3748 = vpack.c.b16 %v3742, %v3741
        %v3749 = vpack.c.b16 %v3744, %v3743
        %v3750 = vpack.c.b16 %v3746, %v3745
        %v3771 = vunpack.c.l.b16 %v3723
        %v3772 = vunpack.c.l.b16 %v3724
        %v3773 = vunpack.c.l.b16 %v3725
        %v3774 = vunpack.c.l.b16 %v3726
        %v3775 = vunpack.c.l.b16 %v3727
        %v3776 = vunpack.c.l.b16 %v3728
        %v3777 = vunpack.c.l.b16 %v3729
        %v3778 = vunpack.c.l.b16 %v3730
        %v3779 = vunpack.c.l.b16 %v3731
        %v3780 = vunpack.c.l.b16 %v3732
        %v3781 = vunpack.c.l.b16 %v3733
        %v3782 = vunpack.c.l.b16 %v3734
        %v3783 = vunpack.c.l.b16 %v3735
        %v3784 = vunpack.c.l.b16 %v3736
        %v3785 = vunpack.c.l.b16 %v3737
        %v3786 = vunpack.c.l.b16 %v3738
        %v3787 = vpack.c.b16 %v3772, %v3771
        %v3788 = vpack.c.b16 %v3774, %v3773
        %v3789 = vpack.c.b16 %v3776, %v3775
        %v3790 = vpack.c.b16 %v3778, %v3777
        %v3791 = vpack.c.b16 %v3780, %v3779
        %v3792 = vpack.c.b16 %v3782, %v3781
        %v3793 = vpack.c.b16 %v3784, %v3783
        %v3794 = vpack.c.b16 %v3786, %v3785
        %3803 = vmatprep.subr.bf16.mxu0 0
        %3804 = vmatpush1.bf16.msra.mxu0 %v3787
        %3805 = vmatprep.subr.bf16.mxu0 0
        %3806 = vmatpush1.bf16.msra.mxu0 %v3788
        %3807 = vmatprep.subr.bf16.mxu0 0
        %3808 = vmatpush1.bf16.msra.mxu0 %v3789
        %3809 = vmatprep.subr.bf16.mxu0 0
        %3810 = vmatpush1.bf16.msra.mxu0 %v3790
        %3811 = vmatprep.subr.bf16.mxu0 0
        %3812 = vmatpush1.bf16.msra.mxu0 %v3791
        %3813 = vmatprep.subr.bf16.mxu0 0
        %3814 = vmatpush1.bf16.msra.mxu0 %v3792
        %3815 = vmatprep.subr.bf16.mxu0 0
        %3816 = vmatpush1.bf16.msra.mxu0 %v3793
        %3817 = vmatprep.subr.bf16.mxu0 0
        %3818 = vmatpush1.bf16.msra.mxu0 %v3794
        %3819 = vmatprep.subr.bf16.mxu0 0
        %3820 = vmatpush1.bf16.msra.mxu0 0
        %3821 = vmatprep.subr.bf16.mxu0 0
        %3822 = vmatpush1.bf16.msra.mxu0 0
        %3823 = vmatprep.subr.bf16.mxu0 0
        %3824 = vmatpush1.bf16.msra.mxu0 0
        %3825 = vmatprep.subr.bf16.mxu0 0
        %3826 = vmatpush1.bf16.msra.mxu0 0
        %3827 = vmatprep.subr.bf16.mxu0 0
        %3828 = vmatpush1.bf16.msra.mxu0 0
        %3829 = vmatprep.subr.bf16.mxu0 0
        %3830 = vmatpush1.bf16.msra.mxu0 0
        %3831 = vmatprep.subr.bf16.mxu0 0
        %3832 = vmatpush1.bf16.msra.mxu0 0
        %3833 = vmatprep.subr.bf16.mxu0 0
        %3834 = vmatpush1.bf16.msra.mxu0 0
        %3835 = vmatprep.mubr.bf16.mxu0 0
        %3836 = vmatmul.mubr.bf16.gmra.mrb[0].mxu0 %v3747
        %v3837 = vpop.f32.mrb[0].mxu0
        %v3838 = vadd.f32 0.0, %v3837
        %v3839 = vpop.f32.mrb[0].mxu0
        %v3840 = vpop.f32.mrb[0].mxu0
        %v3841 = vadd.f32 0.0, %v3840
        %v3842 = vpop.f32.mrb[0].mxu0
        %3843 = vmatprep.mubr.bf16.mxu0 0
        %3844 = vmatmul.mubr.bf16.gmra.mrb[0].mxu0 %v3748
        %v3845 = vpop.f32.mrb[0].mxu0
        %v3846 = vadd.f32 0.0, %v3845
        %v3847 = vpop.f32.mrb[0].mxu0
        %v3848 = vpop.f32.mrb[0].mxu0
        %v3849 = vadd.f32 0.0, %v3848
        %v3850 = vpop.f32.mrb[0].mxu0
        %3851 = vmatprep.mubr.bf16.mxu0 0
        %3852 = vmatmul.mubr.bf16.gmra.mrb[0].mxu0 %v3749
        %v3853 = vpop.f32.mrb[0].mxu0
        %v3854 = vadd.f32 0.0, %v3853
        %v3855 = vpop.f32.mrb[0].mxu0
        %v3856 = vpop.f32.mrb[0].mxu0
        %v3857 = vadd.f32 0.0, %v3856
        %v3858 = vpop.f32.mrb[0].mxu0
        %3859 = vmatprep.mubr.bf16.mxu0 0
        %3860 = vmatmul.mubr.bf16.gmra.mrb[0].mxu0 %v3750
        %v3861 = vpop.f32.mrb[0].mxu0
        %v3862 = vadd.f32 0.0, %v3861
        %v3863 = vpop.f32.mrb[0].mxu0
        %v3864 = vpop.f32.mrb[0].mxu0
        %v3865 = vadd.f32 0.0, %v3864
        %v3866 = vpop.f32.mrb[0].mxu0
        %3867 = vdwg.mxu0
        %v3868 = vadd.f32 %v3587, %v3838
        %v3869 = vadd.f32 %v3588, %v3841
        %v3870 = vadd.f32 %v3589, %v3846
        %v3871 = vadd.f32 %v3590, %v3849
        %v3872 = vadd.f32 %v3591, %v3854
        %v3873 = vadd.f32 %v3592, %v3857
        %v3874 = vadd.f32 %v3593, %v3862
        %v3875 = vadd.f32 %v3594, %v3865
        %v3876 = vld [vmem:[%s3425] sm:$0xe]
        %v3877 = vld [vmem:[%s3425 + $0x8] sm:$0xe]
        %v3878 = vld [vmem:[%s3425 + $0x10] sm:$0xe]
        %v3879 = vld [vmem:[%s3425 + $0x18] sm:$0xe]
        %v3880 = vld [vmem:[%s3425 + $0x20] sm:$0xe]
        %v3881 = vld [vmem:[%s3425 + $0x28] sm:$0xe]
        %v3882 = vld [vmem:[%s3425 + $0x30] sm:$0xe]
        %v3883 = vld [vmem:[%s3425 + $0x38] sm:$0xe]
        %v3900 = vrot.slane %v3876, 5
        %v3901 = vrot.slane %v3900, 4
        %v3902 = vrot.slane %v3596, 5
        %v3903 = vsel %vm2580, %v3901, %v3902
        %v3904 = vrot.slane %v3877, 5
        %v3905 = vrot.slane %v3904, 4
        %v3906 = vrot.slane %v3598, 5
        %v3907 = vsel %vm2580, %v3905, %v3906
        %v3908 = vrot.slane %v3878, 5
        %v3909 = vrot.slane %v3908, 4
        %v3910 = vrot.slane %v3600, 5
        %v3911 = vsel %vm2580, %v3909, %v3910
        %v3912 = vrot.slane %v3879, 5
        %v3913 = vrot.slane %v3912, 4
        %v3914 = vrot.slane %v3602, 5
        %v3915 = vsel %vm2580, %v3913, %v3914
        %v3916 = vrot.slane %v3880, 5
        %v3917 = vrot.slane %v3916, 4
        %v3918 = vrot.slane %v3604, 5
        %v3919 = vsel %vm2580, %v3917, %v3918
        %v3920 = vrot.slane %v3881, 5
        %v3921 = vrot.slane %v3920, 4
        %v3922 = vrot.slane %v3606, 5
        %v3923 = vsel %vm2580, %v3921, %v3922
        %v3924 = vrot.slane %v3882, 5
        %v3925 = vrot.slane %v3924, 4
        %v3926 = vrot.slane %v3608, 5
        %v3927 = vsel %vm2580, %v3925, %v3926
        %v3928 = vrot.slane %v3883, 5
        %v3929 = vrot.slane %v3928, 4
        %v3930 = vrot.slane %v3610, 5
        %v3931 = vsel %vm2580, %v3929, %v3930
        %v3932 = vld [vmem:[#allocation9 + $0x200] sm:$0xf]
        %v3933 = vld [vmem:[#allocation9 + $0x204] sm:$0xf]
        %v3934 = vld [vmem:[#allocation9 + $0x208] sm:$0xf]
        %v3935 = vld [vmem:[#allocation9 + $0x20c] sm:$0xf]
        %v3936 = vld [vmem:[#allocation9 + $0x210] sm:$0xf]
        %v3937 = vld [vmem:[#allocation9 + $0x214] sm:$0xf]
        %v3938 = vld [vmem:[#allocation9 + $0x218] sm:$0xf]
        %v3939 = vld [vmem:[#allocation9 + $0x21c] sm:$0xf]
        %v3940 = vld [vmem:[#allocation9 + $0x220] sm:$0xf]
        %v3941 = vld [vmem:[#allocation9 + $0x224] sm:$0xf]
        %v3942 = vld [vmem:[#allocation9 + $0x228] sm:$0xf]
        %v3943 = vld [vmem:[#allocation9 + $0x22c] sm:$0xf]
        %v3944 = vld [vmem:[#allocation9 + $0x230] sm:$0xf]
        %v3945 = vld [vmem:[#allocation9 + $0x234] sm:$0xf]
        %v3946 = vld [vmem:[#allocation9 + $0x238] sm:$0xf]
        %v3947 = vld [vmem:[#allocation9 + $0x23c] sm:$0xf]
        %v3948 = vunpack.c.l.b16 %v3903
        %v3949 = vunpack.c.l.b16 %v3907
        %v3950 = vunpack.c.l.b16 %v3911
        %v3951 = vunpack.c.l.b16 %v3915
        %v3952 = vunpack.c.l.b16 %v3919
        %v3953 = vunpack.c.l.b16 %v3923
        %v3954 = vunpack.c.l.b16 %v3927
        %v3955 = vunpack.c.l.b16 %v3931
        %v3956 = vpack.c.b16 %v3949, %v3948
        %v3957 = vpack.c.b16 %v3951, %v3950
        %v3958 = vpack.c.b16 %v3953, %v3952
        %v3959 = vpack.c.b16 %v3955, %v3954
        %v3980 = vunpack.c.l.b16 %v3932
        %v3981 = vunpack.c.l.b16 %v3933
        %v3982 = vunpack.c.l.b16 %v3934
        %v3983 = vunpack.c.l.b16 %v3935
        %v3984 = vunpack.c.l.b16 %v3936
        %v3985 = vunpack.c.l.b16 %v3937
        %v3986 = vunpack.c.l.b16 %v3938
        %v3987 = vunpack.c.l.b16 %v3939
        %v3988 = vunpack.c.l.b16 %v3940
        %v3989 = vunpack.c.l.b16 %v3941
        %v3990 = vunpack.c.l.b16 %v3942
        %v3991 = vunpack.c.l.b16 %v3943
        %v3992 = vunpack.c.l.b16 %v3944
        %v3993 = vunpack.c.l.b16 %v3945
        %v3994 = vunpack.c.l.b16 %v3946
        %v3995 = vunpack.c.l.b16 %v3947
        %v3996 = vpack.c.b16 %v3981, %v3980
        %v3997 = vpack.c.b16 %v3983, %v3982
        %v3998 = vpack.c.b16 %v3985, %v3984
        %v3999 = vpack.c.b16 %v3987, %v3986
        %v4000 = vpack.c.b16 %v3989, %v3988
        %v4001 = vpack.c.b16 %v3991, %v3990
        %v4002 = vpack.c.b16 %v3993, %v3992
        %v4003 = vpack.c.b16 %v3995, %v3994
        %4012 = vmatprep.subr.bf16.mxu0 0
        %4013 = vmatpush1.bf16.msra.mxu0 %v3996
        %4014 = vmatprep.subr.bf16.mxu0 0
        %4015 = vmatpush1.bf16.msra.mxu0 %v3997
        %4016 = vmatprep.subr.bf16.mxu0 0
        %4017 = vmatpush1.bf16.msra.mxu0 %v3998
        %4018 = vmatprep.subr.bf16.mxu0 0
        %4019 = vmatpush1.bf16.msra.mxu0 %v3999
        %4020 = vmatprep.subr.bf16.mxu0 0
        %4021 = vmatpush1.bf16.msra.mxu0 %v4000
        %4022 = vmatprep.subr.bf16.mxu0 0
        %4023 = vmatpush1.bf16.msra.mxu0 %v4001
        %4024 = vmatprep.subr.bf16.mxu0 0
        %4025 = vmatpush1.bf16.msra.mxu0 %v4002
        %4026 = vmatprep.subr.bf16.mxu0 0
        %4027 = vmatpush1.bf16.msra.mxu0 %v4003
        %4028 = vmatprep.subr.bf16.mxu0 0
        %4029 = vmatpush1.bf16.msra.mxu0 0
        %4030 = vmatprep.subr.bf16.mxu0 0
        %4031 = vmatpush1.bf16.msra.mxu0 0
        %4032 = vmatprep.subr.bf16.mxu0 0
        %4033 = vmatpush1.bf16.msra.mxu0 0
        %4034 = vmatprep.subr.bf16.mxu0 0
        %4035 = vmatpush1.bf16.msra.mxu0 0
        %4036 = vmatprep.subr.bf16.mxu0 0
        %4037 = vmatpush1.bf16.msra.mxu0 0
        %4038 = vmatprep.subr.bf16.mxu0 0
        %4039 = vmatpush1.bf16.msra.mxu0 0
        %4040 = vmatprep.subr.bf16.mxu0 0
        %4041 = vmatpush1.bf16.msra.mxu0 0
        %4042 = vmatprep.subr.bf16.mxu0 0
        %4043 = vmatpush1.bf16.msra.mxu0 0
        %4044 = vmatprep.mubr.bf16.mxu0 0
        %4045 = vmatmul.mubr.bf16.gmra.mrb[0].mxu0 %v3956
        %v4046 = vpop.f32.mrb[0].mxu0
        %v4047 = vadd.f32 0.0, %v4046
        %v4048 = vpop.f32.mrb[0].mxu0
        %v4049 = vpop.f32.mrb[0].mxu0
        %v4050 = vadd.f32 0.0, %v4049
        %v4051 = vpop.f32.mrb[0].mxu0
        %4052 = vmatprep.mubr.bf16.mxu0 0
        %4053 = vmatmul.mubr.bf16.gmra.mrb[0].mxu0 %v3957
        %v4054 = vpop.f32.mrb[0].mxu0
        %v4055 = vadd.f32 0.0, %v4054
        %v4056 = vpop.f32.mrb[0].mxu0
        %v4057 = vpop.f32.mrb[0].mxu0
        %v4058 = vadd.f32 0.0, %v4057
        %v4059 = vpop.f32.mrb[0].mxu0
        %4060 = vmatprep.mubr.bf16.mxu0 0
        %4061 = vmatmul.mubr.bf16.gmra.mrb[0].mxu0 %v3958
        %v4062 = vpop.f32.mrb[0].mxu0
        %v4063 = vadd.f32 0.0, %v4062
        %v4064 = vpop.f32.mrb[0].mxu0
        %v4065 = vpop.f32.mrb[0].mxu0
        %v4066 = vadd.f32 0.0, %v4065
        %v4067 = vpop.f32.mrb[0].mxu0
        %4068 = vmatprep.mubr.bf16.mxu0 0
        %4069 = vmatmul.mubr.bf16.gmra.mrb[0].mxu0 %v3959
        %v4070 = vpop.f32.mrb[0].mxu0
        %v4071 = vadd.f32 0.0, %v4070
        %v4072 = vpop.f32.mrb[0].mxu0
        %v4073 = vpop.f32.mrb[0].mxu0
        %v4074 = vadd.f32 0.0, %v4073
        %v4075 = vpop.f32.mrb[0].mxu0
        %4076 = vdwg.mxu0
        %v4077 = vadd.f32 %v3868, %v4047
        %v4078 = vadd.f32 %v3869, %v4050
        %v4079 = vadd.f32 %v3870, %v4055
        %v4080 = vadd.f32 %v3871, %v4058
        %v4081 = vadd.f32 %v3872, %v4063
        %v4082 = vadd.f32 %v3873, %v4066
        %v4083 = vadd.f32 %v3874, %v4071
        %v4084 = vadd.f32 %v3875, %v4074
        %v4085 = vld [vmem:[%s4] sm:$0x1]
        %v4087 = vlaneseq
        %v4088 = vshrl.u32 %v4087, 7
        %v4089 = vsub.s32 0, %v4088
        %v4090 = vrot.slane %v4085, %v4089
        %v4092 = vadd.f32 %v4077, %v4090
        %v4093 = vadd.f32 %v4078, %v4090
        %v4094 = vadd.f32 %v4079, %v4090
        %v4095 = vadd.f32 %v4080, %v4090
        %v4096 = vadd.f32 %v4081, %v4090
        %v4097 = vadd.f32 %v4082, %v4090
        %v4098 = vadd.f32 %v4083, %v4090
        %v4099 = vadd.f32 %v4084, %v4090
        %v4100 = vld [vmem:[%s1162] ss:$2 sm:$0xff]
        %v4101 = vld [vmem:[%s1164] ss:$2 sm:$0xff]
        %v4102 = vld [vmem:[%s1166] ss:$2 sm:$0xff]
        %v4103 = vld [vmem:[%s1168] ss:$2 sm:$0xff]
        %v4104 = vld [vmem:[%s1170] ss:$2 sm:$0xff]
        %v4105 = vld [vmem:[%s1172] ss:$2 sm:$0xff]
        %v4106 = vld [vmem:[%s1174] ss:$2 sm:$0xff]
        %v4107 = vld [vmem:[%s1176] ss:$2 sm:$0xff]
        %v4108 = vpack.c.bf16 %v4101, %v4100
        %v4109 = vpack.c.bf16 %v4103, %v4102
        %v4110 = vpack.c.bf16 %v4105, %v4104
        %v4111 = vpack.c.bf16 %v4107, %v4106
        %v4112 = vld [vmem:[#allocation10] sm:$0xf]
        %v4113 = vld [vmem:[#allocation10 + $0x4] sm:$0xf]
        %v4114 = vld [vmem:[#allocation10 + $0x8] sm:$0xf]
        %v4115 = vld [vmem:[#allocation10 + $0xc] sm:$0xf]
        %v4116 = vld [vmem:[#allocation10 + $0x10] sm:$0xf]
        %v4117 = vld [vmem:[#allocation10 + $0x14] sm:$0xf]
        %v4118 = vld [vmem:[#allocation10 + $0x18] sm:$0xf]
        %v4119 = vld [vmem:[#allocation10 + $0x1c] sm:$0xf]
        %v4120 = vld [vmem:[#allocation10 + $0x20] sm:$0xf]
        %v4121 = vld [vmem:[#allocation10 + $0x24] sm:$0xf]
        %v4122 = vld [vmem:[#allocation10 + $0x28] sm:$0xf]
        %v4123 = vld [vmem:[#allocation10 + $0x2c] sm:$0xf]
        %v4124 = vld [vmem:[#allocation10 + $0x30] sm:$0xf]
        %v4125 = vld [vmem:[#allocation10 + $0x34] sm:$0xf]
        %v4126 = vld [vmem:[#allocation10 + $0x38] sm:$0xf]
        %v4127 = vld [vmem:[#allocation10 + $0x3c] sm:$0xf]
        %v4128 = vld [vmem:[%s6] sm:$0x1]
        %v4130 = vlaneseq
        %v4131 = vshrl.u32 %v4130, 7
        %v4132 = vsub.s32 0, %v4131
        %v4133 = vrot.slane %v4128, %v4132
        %v4151 = vunpack.c.l.b16 %v4112
        %v4152 = vunpack.c.l.b16 %v4113
        %v4153 = vunpack.c.l.b16 %v4114
        %v4154 = vunpack.c.l.b16 %v4115
        %v4155 = vunpack.c.l.b16 %v4116
        %v4156 = vunpack.c.l.b16 %v4117
        %v4157 = vunpack.c.l.b16 %v4118
        %v4158 = vunpack.c.l.b16 %v4119
        %v4159 = vunpack.c.l.b16 %v4120
        %v4160 = vunpack.c.l.b16 %v4121
        %v4161 = vunpack.c.l.b16 %v4122
        %v4162 = vunpack.c.l.b16 %v4123
        %v4163 = vunpack.c.l.b16 %v4124
        %v4164 = vunpack.c.l.b16 %v4125
        %v4165 = vunpack.c.l.b16 %v4126
        %v4166 = vunpack.c.l.b16 %v4127
        %v4167 = vpack.c.b16 %v4152, %v4151
        %v4168 = vpack.c.b16 %v4154, %v4153
        %v4169 = vpack.c.b16 %v4156, %v4155
        %v4170 = vpack.c.b16 %v4158, %v4157
        %v4171 = vpack.c.b16 %v4160, %v4159
        %v4172 = vpack.c.b16 %v4162, %v4161
        %v4173 = vpack.c.b16 %v4164, %v4163
        %v4174 = vpack.c.b16 %v4166, %v4165
        %4183 = vmatprep.subr.bf16.mxu0 0
        %4184 = vmatpush1.bf16.msra.mxu0 %v4167
        %4185 = vmatprep.subr.bf16.mxu0 0
        %4186 = vmatpush1.bf16.msra.mxu0 %v4168
        %4187 = vmatprep.subr.bf16.mxu0 0
        %4188 = vmatpush1.bf16.msra.mxu0 %v4169
        %4189 = vmatprep.subr.bf16.mxu0 0
        %4190 = vmatpush1.bf16.msra.mxu0 %v4170
        %4191 = vmatprep.subr.bf16.mxu0 0
        %4192 = vmatpush1.bf16.msra.mxu0 %v4171
        %4193 = vmatprep.subr.bf16.mxu0 0
        %4194 = vmatpush1.bf16.msra.mxu0 %v4172
        %4195 = vmatprep.subr.bf16.mxu0 0
        %4196 = vmatpush1.bf16.msra.mxu0 %v4173
        %4197 = vmatprep.subr.bf16.mxu0 0
        %4198 = vmatpush1.bf16.msra.mxu0 %v4174
        %4199 = vmatprep.subr.bf16.mxu0 0
        %4200 = vmatpush1.bf16.msra.mxu0 0
        %4201 = vmatprep.subr.bf16.mxu0 0
        %4202 = vmatpush1.bf16.msra.mxu0 0
        %4203 = vmatprep.subr.bf16.mxu0 0
        %4204 = vmatpush1.bf16.msra.mxu0 0
        %4205 = vmatprep.subr.bf16.mxu0 0
        %4206 = vmatpush1.bf16.msra.mxu0 0
        %4207 = vmatprep.subr.bf16.mxu0 0
        %4208 = vmatpush1.bf16.msra.mxu0 0
        %4209 = vmatprep.subr.bf16.mxu0 0
        %4210 = vmatpush1.bf16.msra.mxu0 0
        %4211 = vmatprep.subr.bf16.mxu0 0
        %4212 = vmatpush1.bf16.msra.mxu0 0
        %4213 = vmatprep.subr.bf16.mxu0 0
        %4214 = vmatpush1.bf16.msra.mxu0 0
        %4215 = vmatprep.mubr.bf16.mxu0 0
        %4216 = vmatmul.mubr.bf16.gmra.mrb[0].mxu0 %v4108
        %v4217 = vpop.f32.mrb[0].mxu0
        %v4218 = vadd.f32 %v4133, %v4217
        %v4219 = vpop.f32.mrb[0].mxu0
        %v4220 = vpop.f32.mrb[0].mxu0
        %v4221 = vadd.f32 %v4133, %v4220
        %v4222 = vpop.f32.mrb[0].mxu0
        %4223 = vmatprep.mubr.bf16.mxu0 0
        %4224 = vmatmul.mubr.bf16.gmra.mrb[0].mxu0 %v4109
        %v4225 = vpop.f32.mrb[0].mxu0
        %v4226 = vadd.f32 %v4133, %v4225
        %v4227 = vpop.f32.mrb[0].mxu0
        %v4228 = vpop.f32.mrb[0].mxu0
        %v4229 = vadd.f32 %v4133, %v4228
        %v4230 = vpop.f32.mrb[0].mxu0
        %4231 = vmatprep.mubr.bf16.mxu0 0
        %4232 = vmatmul.mubr.bf16.gmra.mrb[0].mxu0 %v4110
        %v4233 = vpop.f32.mrb[0].mxu0
        %v4234 = vadd.f32 %v4133, %v4233
        %v4235 = vpop.f32.mrb[0].mxu0
        %v4236 = vpop.f32.mrb[0].mxu0
        %v4237 = vadd.f32 %v4133, %v4236
        %v4238 = vpop.f32.mrb[0].mxu0
        %4239 = vmatprep.mubr.bf16.mxu0 0
        %4240 = vmatmul.mubr.bf16.gmra.mrb[0].mxu0 %v4111
        %v4241 = vpop.f32.mrb[0].mxu0
        %v4242 = vadd.f32 %v4133, %v4241
        %v4243 = vpop.f32.mrb[0].mxu0
        %v4244 = vpop.f32.mrb[0].mxu0
        %v4245 = vadd.f32 %v4133, %v4244
        %v4246 = vpop.f32.mrb[0].mxu0
        %4247 = vdwg.mxu0
        %v4248 = vadd.f32 %v4092, %v4218
        %v4249 = vadd.f32 %v4093, %v4221
        %v4250 = vadd.f32 %v4094, %v4226
        %v4251 = vadd.f32 %v4095, %v4229
        %v4252 = vadd.f32 %v4096, %v4234
        %v4253 = vadd.f32 %v4097, %v4237
        %v4254 = vadd.f32 %v4098, %v4242
        %v4255 = vadd.f32 %v4099, %v4245
        %v4256 = vmax.f32 %v4248, 0.0
        %v4257 = vmax.f32 %v4249, 0.0
        %v4258 = vmax.f32 %v4250, 0.0
        %v4259 = vmax.f32 %v4251, 0.0
        %v4260 = vmax.f32 %v4252, 0.0
        %v4261 = vmax.f32 %v4253, 0.0
        %v4262 = vmax.f32 %v4254, 0.0
        %v4263 = vmax.f32 %v4255, 0.0
        %v4264 = vpack.c.bf16 %v4257, %v4256
        %v4265 = vpack.c.bf16 %v4259, %v4258
        %v4266 = vpack.c.bf16 %v4261, %v4260
        %v4267 = vpack.c.bf16 %v4263, %v4262
        %v4272 = vunpack.c.l.b16 %v4264
        %v4273 = vunpack.c.h.b16 %v4264
        %v4274 = vunpack.c.l.b16 %v4265
        %v4275 = vunpack.c.h.b16 %v4265
        %v4276 = vunpack.c.l.b16 %v4266
        %v4277 = vunpack.c.h.b16 %v4266
        %v4278 = vunpack.c.l.b16 %v4267
        %v4279 = vunpack.c.h.b16 %v4267
        %v4280 = vpack.c.b16 %v4272, %v4272
        %v4281 = vpack.c.b16 %v4273, %v4273
        %v4282 = vpack.c.b16 %v4274, %v4274
        %v4283 = vpack.c.b16 %v4275, %v4275
        %v4284 = vpack.c.b16 %v4276, %v4276
        %v4285 = vpack.c.b16 %v4277, %v4277
        %v4286 = vpack.c.b16 %v4278, %v4278
        %v4287 = vpack.c.b16 %v4279, %v4279
        %4296 = vst [vmem:[%s340] sm:$0xf] %v4280
        %4297 = vst [vmem:[%s340 + $0x4] sm:$0xf] %v4281
        %4298 = vst [vmem:[%s340 + $0x8] sm:$0xf] %v4282
        %4299 = vst [vmem:[%s340 + $0xc] sm:$0xf] %v4283
        %4300 = vst [vmem:[%s340 + $0x10] sm:$0xf] %v4284
        %4301 = vst [vmem:[%s340 + $0x14] sm:$0xf] %v4285
        %4302 = vst [vmem:[%s340 + $0x18] sm:$0xf] %v4286
        %4303 = vst [vmem:[%s340 + $0x1c] sm:$0xf] %v4287
        %s4304 = sand.u32 %s186, 1
        %s4305 = scalar_lea.sflag [#allocation6], %s4304
        %s4306 = sand.u32 %s186, 1
        %s4307 = smul.addr %s4306, 32
        %s4308 = scalar_lea.vmem [#allocation12], %s4307
        // Predicated region
        $region65: #{tpu_custom_call.1} parent=47 // pred_check
          %p4309 = pneg %p196
        $region66: #{tpu_custom_call.1} parent=47 // pred_check_branch
          %4311 = sbr.rel (%p4309) target = $region68
        $region67: #{tpu_custom_call.1} parent=47 // pred_region
          %s4313 = ssub.s32 512, 512
          %4314 = vsyncadd %s4305, %s4313
          %s4315 = smul.addr %s26, 8
          %s4316 = smul.addr %s4315, 64
          %s4317 = scalar_lea.hbm %s7, %s4316
          %s4318 = sshll.u32 %s4308, 4
          %s4319 = int_to_ptr.vmem [resolvable:$true] %s4318
          %4324 = dma.vmem_to_hbm [thread:$0]  %s4319, 512, %s4317, %s4305, 64, 64, 4
        $region68: #{tpu_custom_call.1} parent=47 // pred_fallthru
          _
      $region48: #{tpu_custom_call.1} parent=5 // pred_fallthru
        _
      %p4325 = scmp.le.s32.totalorder 2, %s21
      // Predicated region
      $region69: #{tpu_custom_call.1} parent=5 // pred_check
        %p4326 = pneg %p4325
      $region70: #{tpu_custom_call.1} parent=5 // pred_check_branch
        %4328 = sbr.rel (%p4326) target = $region72
      $region71: #{tpu_custom_call.1} parent=5 // pred_region
        %s4329 = ssub.s32 %s21, 2
        // Predicated region
        $region73: #{tpu_custom_call.1} parent=71 // pred_check
          %p4330 = pneg %p202
        $region74: #{tpu_custom_call.1} parent=71 // pred_check_branch
          %4332 = sbr.rel (%p4330) target = $region76
        $region75: #{tpu_custom_call.1} parent=71 // pred_region
          %s4333 = sand.u32 %s187, 1
          %s4334 = scalar_lea.sflag [#allocation6], %s4333
          %s4335 = sand.u32 %s187, 1
          %s4336 = smul.addr %s4335, 32
          %s4337 = scalar_lea.vmem [#allocation12], %s4336
          %4338 = dma.done %s4334, 512
        $region76: #{tpu_custom_call.1} parent=71 // pred_fallthru
          _
      $region72: #{tpu_custom_call.1} parent=5 // pred_fallthru
        _
    $region6: #{tpu_custom_call.1} parent=1 // loop_footer
      %s25 = sadd.s32 1, %s21
    $region7: #{tpu_custom_call.1} parent=1 // loop_footer_branch
      %20 = sbr.rel target = $region3
    $region8: #{tpu_custom_call.1} parent=1 // loop_exit
      _
    %4339 = vsyncpa [#allocation5], 1
    %s4340 = scalar_lea.sflag [#allocation5], 1
    %4341 = vsyncpa %s4340, 1
    %4342 = vsyncpa [#allocation8], 1
    %4343 = vsyncpa [#allocation11], 1
    %4344 = vsyncpa [#allocation6], 1
    %s4345 = scalar_lea.sflag [#allocation6], 1
    %4346 = vsyncpa %s4345, 1

</llo_original>
